<compile_context>
chip_gen: v5e
topology: v5e:2x2
jax: 0.10.0
libtpu: 0.0.40
codegen_flags: <defaults>
</compile_context>

<pallas_src>
import jax
import jax.numpy as jnp
import numpy as np
from jax import lax
from jax.experimental import pallas as pl
from jax.experimental.pallas import tpu as pltpu

KH, KW = 5, 5
PAD = 2
BN_EPS = 1e-3
C_SUB = 128  # in-kernel channel sub-chunk (one 128-lane group)


def _dwconv_bn_kernel(x_ref, w_ref, gamma_ref, beta_ref, out_ref, xpad_ref):
    # x_ref:     (N, H, W, Cb)        unpadded NHWC input block (channels on lane axis)
    # w_ref:     (KH*KW, Cb)          depthwise filter taps, channels-last
    # gamma_ref: (1, Cb), beta_ref: (1, Cb)
    # out_ref:   (N, H, W, Cb)
    # xpad_ref:  (N, H+4, W+4, Cb)    f32 VMEM scratch (zero-padded input)
    N, H, W, C = x_ref.shape
    WP = W + 2 * PAD

    # --- Build the zero-padded input in VMEM: halo-only zeroing + one interior copy ---
    # The interior is fully overwritten by the next statement, so only the 4 halo strips
    # (2 top + 2 bottom rows, 2 left + 2 right columns) need zeroing. Done every grid step
    # because the scratch is per-core and persists across steps of a "parallel" grid.
    xpad_ref[:, :PAD, :, :] = jnp.zeros((N, PAD, WP, C), jnp.float32)
    xpad_ref[:, PAD + H:, :, :] = jnp.zeros((N, PAD, WP, C), jnp.float32)
    xpad_ref[:, PAD:PAD + H, :PAD, :] = jnp.zeros((N, H, PAD, C), jnp.float32)
    xpad_ref[:, PAD:PAD + H, PAD + W:, :] = jnp.zeros((N, H, PAD, C), jnp.float32)
    xpad_ref[:, PAD:PAD + H, PAD:PAD + W, :] = x_ref[...].astype(jnp.float32)

    cnt = jnp.float32(N * H * W)

    # --- Process the channel block in 128-lane sub-chunks --------------------------------
    # The grid block is large (to minimize per-grid-step overhead); sub-chunking keeps the
    # live working set (acc + one kh row-band view + weights) comfortably inside the
    # 64-vreg register file so the tap loop does not spill.
    n_sub = C // C_SUB if (C % C_SUB == 0 and C >= C_SUB) else 1
    c_sub = C // n_sub

    for s in range(n_sub):
        c0 = s * c_sub
        w_blk = w_ref[:, c0:c0 + c_sub].astype(jnp.float32)          # (KH*KW, c_sub)

        # Depthwise 5x5 conv as 25 shifted elementwise MACs (VPU). The kh shift is a free
        # major-dim slice of the scratch; the 5 kw (sublane-axis) shifts are taken from
        # one small (N,H,W+4,c_sub) row-band view per kh.
        acc = jnp.zeros((N, H, W, c_sub), jnp.float32)
        for kh in range(KH):
            x_kh = xpad_ref[:, kh:kh + H, :, c0:c0 + c_sub]          # (N, H, W+4, c_sub)
            for kw in range(KW):
                acc = acc + x_kh[:, :, kw:kw + W, :] * w_blk[kh * KW + kw, :]

        # BatchNorm2d training-mode forward: biased batch stats over (N, H, W) per channel.
        mean = jnp.sum(acc, axis=(0, 1, 2)) / cnt                    # (c_sub,)
        centered = acc - mean
        var = jnp.sum(centered * centered, axis=(0, 1, 2)) / cnt     # (c_sub,)
        inv_std = lax.rsqrt(var + BN_EPS)

        gamma = gamma_ref[0, c0:c0 + c_sub].astype(jnp.float32)
        beta = beta_ref[0, c0:c0 + c_sub].astype(jnp.float32)
        out_ref[:, :, :, c0:c0 + c_sub] = (
            centered * (inv_std * gamma) + beta).astype(out_ref.dtype)


def depthwise_conv_bn(x_nchw, w_dw, gamma, beta, *, c_blk=512):
    """x_nchw: (N, C, H, W); w_dw: (C, 1, KH, KW); gamma/beta: (C,). Returns NCHW output."""
    N, C, H, W = x_nchw.shape

    # Layout glue: channels onto the 128-lane axis; filter flattened to (KH*KW, C).
    x_nhwc = jnp.transpose(x_nchw, (0, 2, 3, 1))
    w_taps = jnp.transpose(w_dw[:, 0, :, :], (1, 2, 0)).reshape(KH * KW, C)
    gamma2 = gamma.reshape(1, C)
    beta2 = beta.reshape(1, C)

    # Channel-block grid. BN stats are per-channel, so channel blocks are fully
    # independent. Large blocks minimize per-step overhead; for the module's real shape
    # (C=1824) c_blk=512 pads C to 2048 -> 4 blocks (2 per TensorCore on v7x megacore).
    # When C fits one block we take it whole (no channel padding; ideal on v5e/v6e).
    if C <= c_blk:
        c_blk_eff, n_cblk, Cp = C, 1, C
    else:
        c_blk_eff = c_blk
        n_cblk = pl.cdiv(C, c_blk)
        Cp = n_cblk * c_blk

    if Cp != C:  # padded channels: acc=0, gamma=beta=0 -> output 0, sliced off below.
        x_nhwc = jnp.pad(x_nhwc, ((0, 0), (0, 0), (0, 0), (0, Cp - C)))
        w_taps = jnp.pad(w_taps, ((0, 0), (0, Cp - C)))
        gamma2 = jnp.pad(gamma2, ((0, 0), (0, Cp - C)))
        beta2 = jnp.pad(beta2, ((0, 0), (0, Cp - C)))

    # Scoped-VMEM budget from actual layout-padded block sizes (double-buffered in/out +
    # scratch + small tensors), with 2x margin, floored at 8 MiB and capped well below
    # v7x's 64 MiB physical VMEM.
    def _rup(v, m):
        return ((v + m - 1) // m) * m
    lanes = _rup(c_blk_eff, 128)
    io_blk = N * H * _rup(W, 8) * lanes * 4
    scratch_b = N * (H + 2 * PAD) * _rup(W + 2 * PAD, 8) * lanes * 4
    small_b = (_rup(KH * KW, 8) + 2 * 8) * lanes * 4
    est = 2 * (2 * io_blk + small_b) + scratch_b
    vmem_limit = int(min(max(2 * est, 8 * 2**20), 48 * 2**20))

    out_nhwc = pl.pallas_call(
        _dwconv_bn_kernel,
        out_shape=jax.ShapeDtypeStruct((N, H, W, Cp), x_nchw.dtype),
        grid_spec=pltpu.PrefetchScalarGridSpec(
            num_scalar_prefetch=0,
            grid=(n_cblk,),
            in_specs=[
                pl.BlockSpec((N, H, W, c_blk_eff), lambda c: (0, 0, 0, c)),
                pl.BlockSpec((KH * KW, c_blk_eff), lambda c: (0, c)),
                pl.BlockSpec((1, c_blk_eff), lambda c: (0, c)),
                pl.BlockSpec((1, c_blk_eff), lambda c: (0, c)),
            ],
            out_specs=pl.BlockSpec((N, H, W, c_blk_eff), lambda c: (0, 0, 0, c)),
            scratch_shapes=[
                pltpu.VMEM((N, H + 2 * PAD, W + 2 * PAD, c_blk_eff), jnp.float32),
            ],
        ),
        compiler_params=pltpu.CompilerParams(
            dimension_semantics=("parallel",),
            vmem_limit_bytes=vmem_limit,
        ),
    )(x_nhwc, w_taps, gamma2, beta2)

    if Cp != C:
        out_nhwc = out_nhwc[..., :C]
    return jnp.transpose(out_nhwc, (0, 3, 1, 2))


def _reference(x_nchw, w_dw, gamma, beta):
    """Pure-JAX reference: depthwise conv + training-mode batchnorm."""
    N, C, H, W = x_nchw.shape
    x_nhwc = jnp.transpose(x_nchw, (0, 2, 3, 1)).astype(jnp.float32)
    w_hwio = jnp.transpose(w_dw, (2, 3, 1, 0)).astype(jnp.float32)  # (KH, KW, 1, C)
    y = lax.conv_general_dilated(
        x_nhwc, w_hwio, window_strides=(1, 1), padding=((PAD, PAD), (PAD, PAD)),
        dimension_numbers=("NHWC", "HWIO", "NHWC"), feature_group_count=C)
    mean = jnp.mean(y, axis=(0, 1, 2))
    var = jnp.mean((y - mean) ** 2, axis=(0, 1, 2))
    yn = (y - mean) * lax.rsqrt(var + BN_EPS) * gamma + beta
    return jnp.transpose(yn, (0, 3, 1, 2)).astype(x_nchw.dtype)


def _run_case(N, C, H, W, key):
    k_x, k_w, k_g, k_b = jax.random.split(key, 4)
    x = jax.random.normal(k_x, (N, C, H, W), dtype=jnp.float32)
    w_dw = jax.random.normal(k_w, (C, 1, KH, KW), dtype=jnp.float32) * 0.1
    gamma = 1.0 + 0.1 * jax.random.normal(k_g, (C,), dtype=jnp.float32)
    beta = 0.1 * jax.random.normal(k_b, (C,), dtype=jnp.float32)

    out = jax.block_until_ready(depthwise_conv_bn(x, w_dw, gamma, beta))
    ref = jax.block_until_ready(_reference(x, w_dw, gamma, beta))
    np.testing.assert_allclose(np.asarray(out), np.asarray(ref), rtol=1e-4, atol=1e-4)


if __name__ == "__main__":
    key = jax.random.PRNGKey(0)
    k1, k2 = jax.random.split(key)

    # Small case: single grid block (c_blk_eff = C = 256), two in-kernel 128-lane sub-chunks.
    _run_case(2, 256, 7, 7, k1)
    # Module's real shape (1 x 1824 x 7 x 7): 4 grid blocks of 512 with channel padding.
    _run_case(1, 1824, 7, 7, k2)

    print("KERNEL_OK")
</pallas_src>

<mosaic_0001>
module attributes {stable_mosaic.version = 11 : i64} {
  func.func @_dwconv_bn_kernel(%arg0: i32, %arg1: memref<2x7x7x256xf32, #tpu.memory_space<vmem>>, %arg2: memref<25x256xf32, #tpu.memory_space<vmem>>, %arg3: memref<1x256xf32, #tpu.memory_space<vmem>>, %arg4: memref<1x256xf32, #tpu.memory_space<vmem>>, %arg5: memref<2x7x7x256xf32, #tpu.memory_space<vmem>>, %arg6: memref<2x11x11x256xf32, #tpu.memory_space<vmem>>) attributes {dimension_semantics = [#tpu.dimension_semantics<parallel>], iteration_bounds = array<i64: 1>, scalar_prefetch = 0 : i64, scratch_operands = 1 : i64, tpu.core_type = #tpu.core_type<tc>, window_params = [{transform_indices = @transform_0, window_bounds = array<i64: 2, 7, 7, 256>}, {transform_indices = @transform_1, window_bounds = array<i64: 25, 256>}, {transform_indices = @transform_2, window_bounds = array<i64: 1, 256>}, {transform_indices = @transform_3, window_bounds = array<i64: 1, 256>}, {transform_indices = @transform_4, window_bounds = array<i64: 2, 7, 7, 256>}]} {
    %cst = arith.constant 0.000000e+00 : f32
    %0 = vector.broadcast %cst : f32 to vector<2x2x11x256xf32>
    %c0 = arith.constant 0 : index
    %c0_0 = arith.constant 0 : index
    %c0_1 = arith.constant 0 : index
    %c0_2 = arith.constant 0 : index
    %1 = vector.load %arg6[%c0, %c0_0, %c0_1, %c0_2] : memref<2x11x11x256xf32, #tpu.memory_space<vmem>>, vector<2x2x11x256xf32>
    tpu.vector_store %arg6[%c0, %c0_0, %c0_1, %c0_2], %0 {strides = array<i32>} : memref<2x11x11x256xf32, #tpu.memory_space<vmem>>, vector<2x2x11x256xf32>,
    %cst_3 = arith.constant 0.000000e+00 : f32
    %2 = vector.broadcast %cst_3 : f32 to vector<2x2x11x256xf32>
    %c0_4 = arith.constant 0 : index
    %c9 = arith.constant 9 : index
    %c0_5 = arith.constant 0 : index
    %c0_6 = arith.constant 0 : index
    %3 = vector.load %arg6[%c0_4, %c9, %c0_5, %c0_6] : memref<2x11x11x256xf32, #tpu.memory_space<vmem>>, vector<2x2x11x256xf32>
    tpu.vector_store %arg6[%c0_4, %c9, %c0_5, %c0_6], %2 {strides = array<i32>} : memref<2x11x11x256xf32, #tpu.memory_space<vmem>>, vector<2x2x11x256xf32>,
    %cst_7 = arith.constant 0.000000e+00 : f32
    %4 = vector.broadcast %cst_7 : f32 to vector<2x7x2x256xf32>
    %c0_8 = arith.constant 0 : index
    %c2 = arith.constant 2 : index
    %c0_9 = arith.constant 0 : index
    %c0_10 = arith.constant 0 : index
    %5 = vector.load %arg6[%c0_8, %c2, %c0_9, %c0_10] : memref<2x11x11x256xf32, #tpu.memory_space<vmem>>, vector<2x7x2x256xf32>
    tpu.vector_store %arg6[%c0_8, %c2, %c0_9, %c0_10], %4 {strides = array<i32>} : memref<2x11x11x256xf32, #tpu.memory_space<vmem>>, vector<2x7x2x256xf32>,
    %cst_11 = arith.constant 0.000000e+00 : f32
    %6 = vector.broadcast %cst_11 : f32 to vector<2x7x2x256xf32>
    %c0_12 = arith.constant 0 : index
    %c2_13 = arith.constant 2 : index
    %c9_14 = arith.constant 9 : index
    %c0_15 = arith.constant 0 : index
    %7 = vector.load %arg6[%c0_12, %c2_13, %c9_14, %c0_15] : memref<2x11x11x256xf32, #tpu.memory_space<vmem>>, vector<2x7x2x256xf32>
    tpu.vector_store %arg6[%c0_12, %c2_13, %c9_14, %c0_15], %6 {strides = array<i32>} : memref<2x11x11x256xf32, #tpu.memory_space<vmem>>, vector<2x7x2x256xf32>,
    %c0_16 = arith.constant 0 : index
    %c0_17 = arith.constant 0 : index
    %c0_18 = arith.constant 0 : index
    %c0_19 = arith.constant 0 : index
    %8 = vector.load %arg1[%c0_16, %c0_17, %c0_18, %c0_19] : memref<2x7x7x256xf32, #tpu.memory_space<vmem>>, vector<2x7x7x256xf32>
    %c0_20 = arith.constant 0 : index
    %c2_21 = arith.constant 2 : index
    %c2_22 = arith.constant 2 : index
    %c0_23 = arith.constant 0 : index
    %9 = vector.load %arg6[%c0_20, %c2_21, %c2_22, %c0_23] : memref<2x11x11x256xf32, #tpu.memory_space<vmem>>, vector<2x7x7x256xf32>
    tpu.vector_store %arg6[%c0_20, %c2_21, %c2_22, %c0_23], %8 {strides = array<i32>} : memref<2x11x11x256xf32, #tpu.memory_space<vmem>>, vector<2x7x7x256xf32>,
    %c0_24 = arith.constant 0 : index
    %c0_25 = arith.constant 0 : index
    %10 = vector.load %arg2[%c0_24, %c0_25] : memref<25x256xf32, #tpu.memory_space<vmem>>, vector<25x128xf32>
    %cst_26 = arith.constant 0.000000e+00 : f32
    %11 = vector.broadcast %cst_26 : f32 to vector<2x7x7x128xf32>
    %c0_27 = arith.constant 0 : index
    %c0_28 = arith.constant 0 : index
    %c0_29 = arith.constant 0 : index
    %c0_30 = arith.constant 0 : index
    %12 = vector.load %arg6[%c0_27, %c0_28, %c0_29, %c0_30] : memref<2x11x11x256xf32, #tpu.memory_space<vmem>>, vector<2x7x11x128xf32>
    %13 = vector.extract_strided_slice %12 {offsets = [0, 0, 0, 0], sizes = [2, 7, 7, 128], strides = [1, 1, 1, 1]} : vector<2x7x11x128xf32> to vector<2x7x7x128xf32>
    %14 = vector.extract_strided_slice %10 {offsets = [0, 0], sizes = [1, 128], strides = [1, 1]} : vector<25x128xf32> to vector<1x128xf32>
    %15 = vector.shape_cast %14 : vector<1x128xf32> to vector<128xf32>
    %16 = vector.shape_cast %15 : vector<128xf32> to vector<1x1x1x128xf32>
    %17 = vector.broadcast %16 : vector<1x1x1x128xf32> to vector<2x7x7x128xf32>
    %18 = arith.mulf %13, %17 : vector<2x7x7x128xf32>
    %19 = arith.addf %11, %18 : vector<2x7x7x128xf32>
    %20 = vector.extract_strided_slice %12 {offsets = [0, 0, 1, 0], sizes = [2, 7, 7, 128], strides = [1, 1, 1, 1]} : vector<2x7x11x128xf32> to vector<2x7x7x128xf32>
    %21 = vector.extract_strided_slice %10 {offsets = [1, 0], sizes = [1, 128], strides = [1, 1]} : vector<25x128xf32> to vector<1x128xf32>
    %22 = vector.shape_cast %21 : vector<1x128xf32> to vector<128xf32>
    %23 = vector.shape_cast %22 : vector<128xf32> to vector<1x1x1x128xf32>
    %24 = vector.broadcast %23 : vector<1x1x1x128xf32> to vector<2x7x7x128xf32>
    %25 = arith.mulf %20, %24 : vector<2x7x7x128xf32>
    %26 = arith.addf %19, %25 : vector<2x7x7x128xf32>
    %27 = vector.extract_strided_slice %12 {offsets = [0, 0, 2, 0], sizes = [2, 7, 7, 128], strides = [1, 1, 1, 1]} : vector<2x7x11x128xf32> to vector<2x7x7x128xf32>
    %28 = vector.extract_strided_slice %10 {offsets = [2, 0], sizes = [1, 128], strides = [1, 1]} : vector<25x128xf32> to vector<1x128xf32>
    %29 = vector.shape_cast %28 : vector<1x128xf32> to vector<128xf32>
    %30 = vector.shape_cast %29 : vector<128xf32> to vector<1x1x1x128xf32>
    %31 = vector.broadcast %30 : vector<1x1x1x128xf32> to vector<2x7x7x128xf32>
    %32 = arith.mulf %27, %31 : vector<2x7x7x128xf32>
    %33 = arith.addf %26, %32 : vector<2x7x7x128xf32>
    %34 = vector.extract_strided_slice %12 {offsets = [0, 0, 3, 0], sizes = [2, 7, 7, 128], strides = [1, 1, 1, 1]} : vector<2x7x11x128xf32> to vector<2x7x7x128xf32>
    %35 = vector.extract_strided_slice %10 {offsets = [3, 0], sizes = [1, 128], strides = [1, 1]} : vector<25x128xf32> to vector<1x128xf32>
    %36 = vector.shape_cast %35 : vector<1x128xf32> to vector<128xf32>
    %37 = vector.shape_cast %36 : vector<128xf32> to vector<1x1x1x128xf32>
    %38 = vector.broadcast %37 : vector<1x1x1x128xf32> to vector<2x7x7x128xf32>
    %39 = arith.mulf %34, %38 : vector<2x7x7x128xf32>
    %40 = arith.addf %33, %39 : vector<2x7x7x128xf32>
    %41 = vector.extract_strided_slice %12 {offsets = [0, 0, 4, 0], sizes = [2, 7, 7, 128], strides = [1, 1, 1, 1]} : vector<2x7x11x128xf32> to vector<2x7x7x128xf32>
    %42 = vector.extract_strided_slice %10 {offsets = [4, 0], sizes = [1, 128], strides = [1, 1]} : vector<25x128xf32> to vector<1x128xf32>
    %43 = vector.shape_cast %42 : vector<1x128xf32> to vector<128xf32>
    %44 = vector.shape_cast %43 : vector<128xf32> to vector<1x1x1x128xf32>
    %45 = vector.broadcast %44 : vector<1x1x1x128xf32> to vector<2x7x7x128xf32>
    %46 = arith.mulf %41, %45 : vector<2x7x7x128xf32>
    %47 = arith.addf %40, %46 : vector<2x7x7x128xf32>
    %c0_31 = arith.constant 0 : index
    %c1 = arith.constant 1 : index
    %c0_32 = arith.constant 0 : index
    %c0_33 = arith.constant 0 : index
    %48 = vector.load %arg6[%c0_31, %c1, %c0_32, %c0_33] : memref<2x11x11x256xf32, #tpu.memory_space<vmem>>, vector<2x7x11x128xf32>
    %49 = vector.extract_strided_slice %48 {offsets = [0, 0, 0, 0], sizes = [2, 7, 7, 128], strides = [1, 1, 1, 1]} : vector<2x7x11x128xf32> to vector<2x7x7x128xf32>
    %50 = vector.extract_strided_slice %10 {offsets = [5, 0], sizes = [1, 128], strides = [1, 1]} : vector<25x128xf32> to vector<1x128xf32>
    %51 = vector.shape_cast %50 : vector<1x128xf32> to vector<128xf32>
    %52 = vector.shape_cast %51 : vector<128xf32> to vector<1x1x1x128xf32>
    %53 = vector.broadcast %52 : vector<1x1x1x128xf32> to vector<2x7x7x128xf32>
    %54 = arith.mulf %49, %53 : vector<2x7x7x128xf32>
    %55 = arith.addf %47, %54 : vector<2x7x7x128xf32>
    %56 = vector.extract_strided_slice %48 {offsets = [0, 0, 1, 0], sizes = [2, 7, 7, 128], strides = [1, 1, 1, 1]} : vector<2x7x11x128xf32> to vector<2x7x7x128xf32>
    %57 = vector.extract_strided_slice %10 {offsets = [6, 0], sizes = [1, 128], strides = [1, 1]} : vector<25x128xf32> to vector<1x128xf32>
    %58 = vector.shape_cast %57 : vector<1x128xf32> to vector<128xf32>
    %59 = vector.shape_cast %58 : vector<128xf32> to vector<1x1x1x128xf32>
    %60 = vector.broadcast %59 : vector<1x1x1x128xf32> to vector<2x7x7x128xf32>
    %61 = arith.mulf %56, %60 : vector<2x7x7x128xf32>
    %62 = arith.addf %55, %61 : vector<2x7x7x128xf32>
    %63 = vector.extract_strided_slice %48 {offsets = [0, 0, 2, 0], sizes = [2, 7, 7, 128], strides = [1, 1, 1, 1]} : vector<2x7x11x128xf32> to vector<2x7x7x128xf32>
    %64 = vector.extract_strided_slice %10 {offsets = [7, 0], sizes = [1, 128], strides = [1, 1]} : vector<25x128xf32> to vector<1x128xf32>
    %65 = vector.shape_cast %64 : vector<1x128xf32> to vector<128xf32>
    %66 = vector.shape_cast %65 : vector<128xf32> to vector<1x1x1x128xf32>
    %67 = vector.broadcast %66 : vector<1x1x1x128xf32> to vector<2x7x7x128xf32>
    %68 = arith.mulf %63, %67 : vector<2x7x7x128xf32>
    %69 = arith.addf %62, %68 : vector<2x7x7x128xf32>
    %70 = vector.extract_strided_slice %48 {offsets = [0, 0, 3, 0], sizes = [2, 7, 7, 128], strides = [1, 1, 1, 1]} : vector<2x7x11x128xf32> to vector<2x7x7x128xf32>
    %71 = vector.extract_strided_slice %10 {offsets = [8, 0], sizes = [1, 128], strides = [1, 1]} : vector<25x128xf32> to vector<1x128xf32>
    %72 = vector.shape_cast %71 : vector<1x128xf32> to vector<128xf32>
    %73 = vector.shape_cast %72 : vector<128xf32> to vector<1x1x1x128xf32>
    %74 = vector.broadcast %73 : vector<1x1x1x128xf32> to vector<2x7x7x128xf32>
    %75 = arith.mulf %70, %74 : vector<2x7x7x128xf32>
    %76 = arith.addf %69, %75 : vector<2x7x7x128xf32>
    %77 = vector.extract_strided_slice %48 {offsets = [0, 0, 4, 0], sizes = [2, 7, 7, 128], strides = [1, 1, 1, 1]} : vector<2x7x11x128xf32> to vector<2x7x7x128xf32>
    %78 = vector.extract_strided_slice %10 {offsets = [9, 0], sizes = [1, 128], strides = [1, 1]} : vector<25x128xf32> to vector<1x128xf32>
    %79 = vector.shape_cast %78 : vector<1x128xf32> to vector<128xf32>
    %80 = vector.shape_cast %79 : vector<128xf32> to vector<1x1x1x128xf32>
    %81 = vector.broadcast %80 : vector<1x1x1x128xf32> to vector<2x7x7x128xf32>
    %82 = arith.mulf %77, %81 : vector<2x7x7x128xf32>
    %83 = arith.addf %76, %82 : vector<2x7x7x128xf32>
    %c0_34 = arith.constant 0 : index
    %c2_35 = arith.constant 2 : index
    %c0_36 = arith.constant 0 : index
    %c0_37 = arith.constant 0 : index
    %84 = vector.load %arg6[%c0_34, %c2_35, %c0_36, %c0_37] : memref<2x11x11x256xf32, #tpu.memory_space<vmem>>, vector<2x7x11x128xf32>
    %85 = vector.extract_strided_slice %84 {offsets = [0, 0, 0, 0], sizes = [2, 7, 7, 128], strides = [1, 1, 1, 1]} : vector<2x7x11x128xf32> to vector<2x7x7x128xf32>
    %86 = vector.extract_strided_slice %10 {offsets = [10, 0], sizes = [1, 128], strides = [1, 1]} : vector<25x128xf32> to vector<1x128xf32>
    %87 = vector.shape_cast %86 : vector<1x128xf32> to vector<128xf32>
    %88 = vector.shape_cast %87 : vector<128xf32> to vector<1x1x1x128xf32>
    %89 = vector.broadcast %88 : vector<1x1x1x128xf32> to vector<2x7x7x128xf32>
    %90 = arith.mulf %85, %89 : vector<2x7x7x128xf32>
    %91 = arith.addf %83, %90 : vector<2x7x7x128xf32>
    %92 = vector.extract_strided_slice %84 {offsets = [0, 0, 1, 0], sizes = [2, 7, 7, 128], strides = [1, 1, 1, 1]} : vector<2x7x11x128xf32> to vector<2x7x7x128xf32>
    %93 = vector.extract_strided_slice %10 {offsets = [11, 0], sizes = [1, 128], strides = [1, 1]} : vector<25x128xf32> to vector<1x128xf32>
    %94 = vector.shape_cast %93 : vector<1x128xf32> to vector<128xf32>
    %95 = vector.shape_cast %94 : vector<128xf32> to vector<1x1x1x128xf32>
    %96 = vector.broadcast %95 : vector<1x1x1x128xf32> to vector<2x7x7x128xf32>
    %97 = arith.mulf %92, %96 : vector<2x7x7x128xf32>
    %98 = arith.addf %91, %97 : vector<2x7x7x128xf32>
    %99 = vector.extract_strided_slice %84 {offsets = [0, 0, 2, 0], sizes = [2, 7, 7, 128], strides = [1, 1, 1, 1]} : vector<2x7x11x128xf32> to vector<2x7x7x128xf32>
    %100 = vector.extract_strided_slice %10 {offsets = [12, 0], sizes = [1, 128], strides = [1, 1]} : vector<25x128xf32> to vector<1x128xf32>
    %101 = vector.shape_cast %100 : vector<1x128xf32> to vector<128xf32>
    %102 = vector.shape_cast %101 : vector<128xf32> to vector<1x1x1x128xf32>
    %103 = vector.broadcast %102 : vector<1x1x1x128xf32> to vector<2x7x7x128xf32>
    %104 = arith.mulf %99, %103 : vector<2x7x7x128xf32>
    %105 = arith.addf %98, %104 : vector<2x7x7x128xf32>
    %106 = vector.extract_strided_slice %84 {offsets = [0, 0, 3, 0], sizes = [2, 7, 7, 128], strides = [1, 1, 1, 1]} : vector<2x7x11x128xf32> to vector<2x7x7x128xf32>
    %107 = vector.extract_strided_slice %10 {offsets = [13, 0], sizes = [1, 128], strides = [1, 1]} : vector<25x128xf32> to vector<1x128xf32>
    %108 = vector.shape_cast %107 : vector<1x128xf32> to vector<128xf32>
    %109 = vector.shape_cast %108 : vector<128xf32> to vector<1x1x1x128xf32>
    %110 = vector.broadcast %109 : vector<1x1x1x128xf32> to vector<2x7x7x128xf32>
    %111 = arith.mulf %106, %110 : vector<2x7x7x128xf32>
    %112 = arith.addf %105, %111 : vector<2x7x7x128xf32>
    %113 = vector.extract_strided_slice %84 {offsets = [0, 0, 4, 0], sizes = [2, 7, 7, 128], strides = [1, 1, 1, 1]} : vector<2x7x11x128xf32> to vector<2x7x7x128xf32>
    %114 = vector.extract_strided_slice %10 {offsets = [14, 0], sizes = [1, 128], strides = [1, 1]} : vector<25x128xf32> to vector<1x128xf32>
    %115 = vector.shape_cast %114 : vector<1x128xf32> to vector<128xf32>
    %116 = vector.shape_cast %115 : vector<128xf32> to vector<1x1x1x128xf32>
    %117 = vector.broadcast %116 : vector<1x1x1x128xf32> to vector<2x7x7x128xf32>
    %118 = arith.mulf %113, %117 : vector<2x7x7x128xf32>
    %119 = arith.addf %112, %118 : vector<2x7x7x128xf32>
    %c0_38 = arith.constant 0 : index
    %c3 = arith.constant 3 : index
    %c0_39 = arith.constant 0 : index
    %c0_40 = arith.constant 0 : index
    %120 = vector.load %arg6[%c0_38, %c3, %c0_39, %c0_40] : memref<2x11x11x256xf32, #tpu.memory_space<vmem>>, vector<2x7x11x128xf32>
    %121 = vector.extract_strided_slice %120 {offsets = [0, 0, 0, 0], sizes = [2, 7, 7, 128], strides = [1, 1, 1, 1]} : vector<2x7x11x128xf32> to vector<2x7x7x128xf32>
    %122 = vector.extract_strided_slice %10 {offsets = [15, 0], sizes = [1, 128], strides = [1, 1]} : vector<25x128xf32> to vector<1x128xf32>
    %123 = vector.shape_cast %122 : vector<1x128xf32> to vector<128xf32>
    %124 = vector.shape_cast %123 : vector<128xf32> to vector<1x1x1x128xf32>
    %125 = vector.broadcast %124 : vector<1x1x1x128xf32> to vector<2x7x7x128xf32>
    %126 = arith.mulf %121, %125 : vector<2x7x7x128xf32>
    %127 = arith.addf %119, %126 : vector<2x7x7x128xf32>
    %128 = vector.extract_strided_slice %120 {offsets = [0, 0, 1, 0], sizes = [2, 7, 7, 128], strides = [1, 1, 1, 1]} : vector<2x7x11x128xf32> to vector<2x7x7x128xf32>
    %129 = vector.extract_strided_slice %10 {offsets = [16, 0], sizes = [1, 128], strides = [1, 1]} : vector<25x128xf32> to vector<1x128xf32>
    %130 = vector.shape_cast %129 : vector<1x128xf32> to vector<128xf32>
    %131 = vector.shape_cast %130 : vector<128xf32> to vector<1x1x1x128xf32>
    %132 = vector.broadcast %131 : vector<1x1x1x128xf32> to vector<2x7x7x128xf32>
    %133 = arith.mulf %128, %132 : vector<2x7x7x128xf32>
    %134 = arith.addf %127, %133 : vector<2x7x7x128xf32>
    %135 = vector.extract_strided_slice %120 {offsets = [0, 0, 2, 0], sizes = [2, 7, 7, 128], strides = [1, 1, 1, 1]} : vector<2x7x11x128xf32> to vector<2x7x7x128xf32>
    %136 = vector.extract_strided_slice %10 {offsets = [17, 0], sizes = [1, 128], strides = [1, 1]} : vector<25x128xf32> to vector<1x128xf32>
    %137 = vector.shape_cast %136 : vector<1x128xf32> to vector<128xf32>
    %138 = vector.shape_cast %137 : vector<128xf32> to vector<1x1x1x128xf32>
    %139 = vector.broadcast %138 : vector<1x1x1x128xf32> to vector<2x7x7x128xf32>
    %140 = arith.mulf %135, %139 : vector<2x7x7x128xf32>
    %141 = arith.addf %134, %140 : vector<2x7x7x128xf32>
    %142 = vector.extract_strided_slice %120 {offsets = [0, 0, 3, 0], sizes = [2, 7, 7, 128], strides = [1, 1, 1, 1]} : vector<2x7x11x128xf32> to vector<2x7x7x128xf32>
    %143 = vector.extract_strided_slice %10 {offsets = [18, 0], sizes = [1, 128], strides = [1, 1]} : vector<25x128xf32> to vector<1x128xf32>
    %144 = vector.shape_cast %143 : vector<1x128xf32> to vector<128xf32>
    %145 = vector.shape_cast %144 : vector<128xf32> to vector<1x1x1x128xf32>
    %146 = vector.broadcast %145 : vector<1x1x1x128xf32> to vector<2x7x7x128xf32>
    %147 = arith.mulf %142, %146 : vector<2x7x7x128xf32>
    %148 = arith.addf %141, %147 : vector<2x7x7x128xf32>
    %149 = vector.extract_strided_slice %120 {offsets = [0, 0, 4, 0], sizes = [2, 7, 7, 128], strides = [1, 1, 1, 1]} : vector<2x7x11x128xf32> to vector<2x7x7x128xf32>
    %150 = vector.extract_strided_slice %10 {offsets = [19, 0], sizes = [1, 128], strides = [1, 1]} : vector<25x128xf32> to vector<1x128xf32>
    %151 = vector.shape_cast %150 : vector<1x128xf32> to vector<128xf32>
    %152 = vector.shape_cast %151 : vector<128xf32> to vector<1x1x1x128xf32>
    %153 = vector.broadcast %152 : vector<1x1x1x128xf32> to vector<2x7x7x128xf32>
    %154 = arith.mulf %149, %153 : vector<2x7x7x128xf32>
    %155 = arith.addf %148, %154 : vector<2x7x7x128xf32>
    %c0_41 = arith.constant 0 : index
    %c4 = arith.constant 4 : index
    %c0_42 = arith.constant 0 : index
    %c0_43 = arith.constant 0 : index
    %156 = vector.load %arg6[%c0_41, %c4, %c0_42, %c0_43] : memref<2x11x11x256xf32, #tpu.memory_space<vmem>>, vector<2x7x11x128xf32>
    %157 = vector.extract_strided_slice %156 {offsets = [0, 0, 0, 0], sizes = [2, 7, 7, 128], strides = [1, 1, 1, 1]} : vector<2x7x11x128xf32> to vector<2x7x7x128xf32>
    %158 = vector.extract_strided_slice %10 {offsets = [20, 0], sizes = [1, 128], strides = [1, 1]} : vector<25x128xf32> to vector<1x128xf32>
    %159 = vector.shape_cast %158 : vector<1x128xf32> to vector<128xf32>
    %160 = vector.shape_cast %159 : vector<128xf32> to vector<1x1x1x128xf32>
    %161 = vector.broadcast %160 : vector<1x1x1x128xf32> to vector<2x7x7x128xf32>
    %162 = arith.mulf %157, %161 : vector<2x7x7x128xf32>
    %163 = arith.addf %155, %162 : vector<2x7x7x128xf32>
    %164 = vector.extract_strided_slice %156 {offsets = [0, 0, 1, 0], sizes = [2, 7, 7, 128], strides = [1, 1, 1, 1]} : vector<2x7x11x128xf32> to vector<2x7x7x128xf32>
    %165 = vector.extract_strided_slice %10 {offsets = [21, 0], sizes = [1, 128], strides = [1, 1]} : vector<25x128xf32> to vector<1x128xf32>
    %166 = vector.shape_cast %165 : vector<1x128xf32> to vector<128xf32>
    %167 = vector.shape_cast %166 : vector<128xf32> to vector<1x1x1x128xf32>
    %168 = vector.broadcast %167 : vector<1x1x1x128xf32> to vector<2x7x7x128xf32>
    %169 = arith.mulf %164, %168 : vector<2x7x7x128xf32>
    %170 = arith.addf %163, %169 : vector<2x7x7x128xf32>
    %171 = vector.extract_strided_slice %156 {offsets = [0, 0, 2, 0], sizes = [2, 7, 7, 128], strides = [1, 1, 1, 1]} : vector<2x7x11x128xf32> to vector<2x7x7x128xf32>
    %172 = vector.extract_strided_slice %10 {offsets = [22, 0], sizes = [1, 128], strides = [1, 1]} : vector<25x128xf32> to vector<1x128xf32>
    %173 = vector.shape_cast %172 : vector<1x128xf32> to vector<128xf32>
    %174 = vector.shape_cast %173 : vector<128xf32> to vector<1x1x1x128xf32>
    %175 = vector.broadcast %174 : vector<1x1x1x128xf32> to vector<2x7x7x128xf32>
    %176 = arith.mulf %171, %175 : vector<2x7x7x128xf32>
    %177 = arith.addf %170, %176 : vector<2x7x7x128xf32>
    %178 = vector.extract_strided_slice %156 {offsets = [0, 0, 3, 0], sizes = [2, 7, 7, 128], strides = [1, 1, 1, 1]} : vector<2x7x11x128xf32> to vector<2x7x7x128xf32>
    %179 = vector.extract_strided_slice %10 {offsets = [23, 0], sizes = [1, 128], strides = [1, 1]} : vector<25x128xf32> to vector<1x128xf32>
    %180 = vector.shape_cast %179 : vector<1x128xf32> to vector<128xf32>
    %181 = vector.shape_cast %180 : vector<128xf32> to vector<1x1x1x128xf32>
    %182 = vector.broadcast %181 : vector<1x1x1x128xf32> to vector<2x7x7x128xf32>
    %183 = arith.mulf %178, %182 : vector<2x7x7x128xf32>
    %184 = arith.addf %177, %183 : vector<2x7x7x128xf32>
    %185 = vector.extract_strided_slice %156 {offsets = [0, 0, 4, 0], sizes = [2, 7, 7, 128], strides = [1, 1, 1, 1]} : vector<2x7x11x128xf32> to vector<2x7x7x128xf32>
    %186 = vector.extract_strided_slice %10 {offsets = [24, 0], sizes = [1, 128], strides = [1, 1]} : vector<25x128xf32> to vector<1x128xf32>
    %187 = vector.shape_cast %186 : vector<1x128xf32> to vector<128xf32>
    %188 = vector.shape_cast %187 : vector<128xf32> to vector<1x1x1x128xf32>
    %189 = vector.broadcast %188 : vector<1x1x1x128xf32> to vector<2x7x7x128xf32>
    %190 = arith.mulf %185, %189 : vector<2x7x7x128xf32>
    %191 = arith.addf %184, %190 : vector<2x7x7x128xf32>
    %cst_44 = arith.constant dense<0.000000e+00> : vector<128xf32>
    %192 = vector.multi_reduction <add>, %191, %cst_44 [0, 1, 2] : vector<2x7x7x128xf32> to vector<128xf32>
    %cst_45 = arith.constant 9.800000e+01 : f32
    %193 = vector.broadcast %cst_45 : f32 to vector<128xf32>
    %194 = arith.divf %192, %193 : vector<128xf32>
    %195 = vector.shape_cast %194 : vector<128xf32> to vector<1x1x1x128xf32>
    %196 = vector.broadcast %195 : vector<1x1x1x128xf32> to vector<2x7x7x128xf32>
    %197 = arith.subf %191, %196 : vector<2x7x7x128xf32>
    %198 = arith.mulf %197, %197 : vector<2x7x7x128xf32>
    %cst_46 = arith.constant dense<0.000000e+00> : vector<128xf32>
    %199 = vector.multi_reduction <add>, %198, %cst_46 [0, 1, 2] : vector<2x7x7x128xf32> to vector<128xf32>
    %cst_47 = arith.constant 9.800000e+01 : f32
    %200 = vector.broadcast %cst_47 : f32 to vector<128xf32>
    %201 = arith.divf %199, %200 : vector<128xf32>
    %cst_48 = arith.constant 1.000000e-03 : f32
    %202 = vector.broadcast %cst_48 : f32 to vector<128xf32>
    %203 = arith.addf %201, %202 : vector<128xf32>
    %204 = math.rsqrt %203 : vector<128xf32>
    %c0_49 = arith.constant 0 : index
    %c0_50 = arith.constant 0 : index
    %205 = vector.load %arg3[%c0_49, %c0_50] : memref<1x256xf32, #tpu.memory_space<vmem>>, vector<1x128xf32>
    %206 = vector.shape_cast %205 : vector<1x128xf32> to vector<128xf32>
    %c0_51 = arith.constant 0 : index
    %c0_52 = arith.constant 0 : index
    %207 = vector.load %arg4[%c0_51, %c0_52] : memref<1x256xf32, #tpu.memory_space<vmem>>, vector<1x128xf32>
    %208 = vector.shape_cast %207 : vector<1x128xf32> to vector<128xf32>
    %209 = arith.mulf %204, %206 : vector<128xf32>
    %210 = vector.shape_cast %209 : vector<128xf32> to vector<1x1x1x128xf32>
    %211 = vector.broadcast %210 : vector<1x1x1x128xf32> to vector<2x7x7x128xf32>
    %212 = arith.mulf %197, %211 : vector<2x7x7x128xf32>
    %213 = vector.shape_cast %208 : vector<128xf32> to vector<1x1x1x128xf32>
    %214 = vector.broadcast %213 : vector<1x1x1x128xf32> to vector<2x7x7x128xf32>
    %215 = arith.addf %212, %214 : vector<2x7x7x128xf32>
    %c0_53 = arith.constant 0 : index
    %c0_54 = arith.constant 0 : index
    %c0_55 = arith.constant 0 : index
    %c0_56 = arith.constant 0 : index
    %216 = vector.load %arg5[%c0_53, %c0_54, %c0_55, %c0_56] : memref<2x7x7x256xf32, #tpu.memory_space<vmem>>, vector<2x7x7x128xf32>
    tpu.vector_store %arg5[%c0_53, %c0_54, %c0_55, %c0_56], %215 {strides = array<i32>} : memref<2x7x7x256xf32, #tpu.memory_space<vmem>>, vector<2x7x7x128xf32>,
    %c0_57 = arith.constant 0 : index
    %c128 = arith.constant 128 : index
    %217 = vector.load %arg2[%c0_57, %c128] : memref<25x256xf32, #tpu.memory_space<vmem>>, vector<25x128xf32>
    %cst_58 = arith.constant 0.000000e+00 : f32
    %218 = vector.broadcast %cst_58 : f32 to vector<2x7x7x128xf32>
    %c0_59 = arith.constant 0 : index
    %c0_60 = arith.constant 0 : index
    %c0_61 = arith.constant 0 : index
    %c128_62 = arith.constant 128 : index
    %219 = vector.load %arg6[%c0_59, %c0_60, %c0_61, %c128_62] : memref<2x11x11x256xf32, #tpu.memory_space<vmem>>, vector<2x7x11x128xf32>
    %220 = vector.extract_strided_slice %219 {offsets = [0, 0, 0, 0], sizes = [2, 7, 7, 128], strides = [1, 1, 1, 1]} : vector<2x7x11x128xf32> to vector<2x7x7x128xf32>
    %221 = vector.extract_strided_slice %217 {offsets = [0, 0], sizes = [1, 128], strides = [1, 1]} : vector<25x128xf32> to vector<1x128xf32>
    %222 = vector.shape_cast %221 : vector<1x128xf32> to vector<128xf32>
    %223 = vector.shape_cast %222 : vector<128xf32> to vector<1x1x1x128xf32>
    %224 = vector.broadcast %223 : vector<1x1x1x128xf32> to vector<2x7x7x128xf32>
    %225 = arith.mulf %220, %224 : vector<2x7x7x128xf32>
    %226 = arith.addf %218, %225 : vector<2x7x7x128xf32>
    %227 = vector.extract_strided_slice %219 {offsets = [0, 0, 1, 0], sizes = [2, 7, 7, 128], strides = [1, 1, 1, 1]} : vector<2x7x11x128xf32> to vector<2x7x7x128xf32>
    %228 = vector.extract_strided_slice %217 {offsets = [1, 0], sizes = [1, 128], strides = [1, 1]} : vector<25x128xf32> to vector<1x128xf32>
    %229 = vector.shape_cast %228 : vector<1x128xf32> to vector<128xf32>
    %230 = vector.shape_cast %229 : vector<128xf32> to vector<1x1x1x128xf32>
    %231 = vector.broadcast %230 : vector<1x1x1x128xf32> to vector<2x7x7x128xf32>
    %232 = arith.mulf %227, %231 : vector<2x7x7x128xf32>
    %233 = arith.addf %226, %232 : vector<2x7x7x128xf32>
    %234 = vector.extract_strided_slice %219 {offsets = [0, 0, 2, 0], sizes = [2, 7, 7, 128], strides = [1, 1, 1, 1]} : vector<2x7x11x128xf32> to vector<2x7x7x128xf32>
    %235 = vector.extract_strided_slice %217 {offsets = [2, 0], sizes = [1, 128], strides = [1, 1]} : vector<25x128xf32> to vector<1x128xf32>
    %236 = vector.shape_cast %235 : vector<1x128xf32> to vector<128xf32>
    %237 = vector.shape_cast %236 : vector<128xf32> to vector<1x1x1x128xf32>
    %238 = vector.broadcast %237 : vector<1x1x1x128xf32> to vector<2x7x7x128xf32>
    %239 = arith.mulf %234, %238 : vector<2x7x7x128xf32>
    %240 = arith.addf %233, %239 : vector<2x7x7x128xf32>
    %241 = vector.extract_strided_slice %219 {offsets = [0, 0, 3, 0], sizes = [2, 7, 7, 128], strides = [1, 1, 1, 1]} : vector<2x7x11x128xf32> to vector<2x7x7x128xf32>
    %242 = vector.extract_strided_slice %217 {offsets = [3, 0], sizes = [1, 128], strides = [1, 1]} : vector<25x128xf32> to vector<1x128xf32>
    %243 = vector.shape_cast %242 : vector<1x128xf32> to vector<128xf32>
    %244 = vector.shape_cast %243 : vector<128xf32> to vector<1x1x1x128xf32>
    %245 = vector.broadcast %244 : vector<1x1x1x128xf32> to vector<2x7x7x128xf32>
    %246 = arith.mulf %241, %245 : vector<2x7x7x128xf32>
    %247 = arith.addf %240, %246 : vector<2x7x7x128xf32>
    %248 = vector.extract_strided_slice %219 {offsets = [0, 0, 4, 0], sizes = [2, 7, 7, 128], strides = [1, 1, 1, 1]} : vector<2x7x11x128xf32> to vector<2x7x7x128xf32>
    %249 = vector.extract_strided_slice %217 {offsets = [4, 0], sizes = [1, 128], strides = [1, 1]} : vector<25x128xf32> to vector<1x128xf32>
    %250 = vector.shape_cast %249 : vector<1x128xf32> to vector<128xf32>
    %251 = vector.shape_cast %250 : vector<128xf32> to vector<1x1x1x128xf32>
    %252 = vector.broadcast %251 : vector<1x1x1x128xf32> to vector<2x7x7x128xf32>
    %253 = arith.mulf %248, %252 : vector<2x7x7x128xf32>
    %254 = arith.addf %247, %253 : vector<2x7x7x128xf32>
    %c0_63 = arith.constant 0 : index
    %c1_64 = arith.constant 1 : index
    %c0_65 = arith.constant 0 : index
    %c128_66 = arith.constant 128 : index
    %255 = vector.load %arg6[%c0_63, %c1_64, %c0_65, %c128_66] : memref<2x11x11x256xf32, #tpu.memory_space<vmem>>, vector<2x7x11x128xf32>
    %256 = vector.extract_strided_slice %255 {offsets = [0, 0, 0, 0], sizes = [2, 7, 7, 128], strides = [1, 1, 1, 1]} : vector<2x7x11x128xf32> to vector<2x7x7x128xf32>
    %257 = vector.extract_strided_slice %217 {offsets = [5, 0], sizes = [1, 128], strides = [1, 1]} : vector<25x128xf32> to vector<1x128xf32>
    %258 = vector.shape_cast %257 : vector<1x128xf32> to vector<128xf32>
    %259 = vector.shape_cast %258 : vector<128xf32> to vector<1x1x1x128xf32>
    %260 = vector.broadcast %259 : vector<1x1x1x128xf32> to vector<2x7x7x128xf32>
    %261 = arith.mulf %256, %260 : vector<2x7x7x128xf32>
    %262 = arith.addf %254, %261 : vector<2x7x7x128xf32>
    %263 = vector.extract_strided_slice %255 {offsets = [0, 0, 1, 0], sizes = [2, 7, 7, 128], strides = [1, 1, 1, 1]} : vector<2x7x11x128xf32> to vector<2x7x7x128xf32>
    %264 = vector.extract_strided_slice %217 {offsets = [6, 0], sizes = [1, 128], strides = [1, 1]} : vector<25x128xf32> to vector<1x128xf32>
    %265 = vector.shape_cast %264 : vector<1x128xf32> to vector<128xf32>
    %266 = vector.shape_cast %265 : vector<128xf32> to vector<1x1x1x128xf32>
    %267 = vector.broadcast %266 : vector<1x1x1x128xf32> to vector<2x7x7x128xf32>
    %268 = arith.mulf %263, %267 : vector<2x7x7x128xf32>
    %269 = arith.addf %262, %268 : vector<2x7x7x128xf32>
    %270 = vector.extract_strided_slice %255 {offsets = [0, 0, 2, 0], sizes = [2, 7, 7, 128], strides = [1, 1, 1, 1]} : vector<2x7x11x128xf32> to vector<2x7x7x128xf32>
    %271 = vector.extract_strided_slice %217 {offsets = [7, 0], sizes = [1, 128], strides = [1, 1]} : vector<25x128xf32> to vector<1x128xf32>
    %272 = vector.shape_cast %271 : vector<1x128xf32> to vector<128xf32>
    %273 = vector.shape_cast %272 : vector<128xf32> to vector<1x1x1x128xf32>
    %274 = vector.broadcast %273 : vector<1x1x1x128xf32> to vector<2x7x7x128xf32>
    %275 = arith.mulf %270, %274 : vector<2x7x7x128xf32>
    %276 = arith.addf %269, %275 : vector<2x7x7x128xf32>
    %277 = vector.extract_strided_slice %255 {offsets = [0, 0, 3, 0], sizes = [2, 7, 7, 128], strides = [1, 1, 1, 1]} : vector<2x7x11x128xf32> to vector<2x7x7x128xf32>
    %278 = vector.extract_strided_slice %217 {offsets = [8, 0], sizes = [1, 128], strides = [1, 1]} : vector<25x128xf32> to vector<1x128xf32>
    %279 = vector.shape_cast %278 : vector<1x128xf32> to vector<128xf32>
    %280 = vector.shape_cast %279 : vector<128xf32> to vector<1x1x1x128xf32>
    %281 = vector.broadcast %280 : vector<1x1x1x128xf32> to vector<2x7x7x128xf32>
    %282 = arith.mulf %277, %281 : vector<2x7x7x128xf32>
    %283 = arith.addf %276, %282 : vector<2x7x7x128xf32>
    %284 = vector.extract_strided_slice %255 {offsets = [0, 0, 4, 0], sizes = [2, 7, 7, 128], strides = [1, 1, 1, 1]} : vector<2x7x11x128xf32> to vector<2x7x7x128xf32>
    %285 = vector.extract_strided_slice %217 {offsets = [9, 0], sizes = [1, 128], strides = [1, 1]} : vector<25x128xf32> to vector<1x128xf32>
    %286 = vector.shape_cast %285 : vector<1x128xf32> to vector<128xf32>
    %287 = vector.shape_cast %286 : vector<128xf32> to vector<1x1x1x128xf32>
    %288 = vector.broadcast %287 : vector<1x1x1x128xf32> to vector<2x7x7x128xf32>
    %289 = arith.mulf %284, %288 : vector<2x7x7x128xf32>
    %290 = arith.addf %283, %289 : vector<2x7x7x128xf32>
    %c0_67 = arith.constant 0 : index
    %c2_68 = arith.constant 2 : index
    %c0_69 = arith.constant 0 : index
    %c128_70 = arith.constant 128 : index
    %291 = vector.load %arg6[%c0_67, %c2_68, %c0_69, %c128_70] : memref<2x11x11x256xf32, #tpu.memory_space<vmem>>, vector<2x7x11x128xf32>
    %292 = vector.extract_strided_slice %291 {offsets = [0, 0, 0, 0], sizes = [2, 7, 7, 128], strides = [1, 1, 1, 1]} : vector<2x7x11x128xf32> to vector<2x7x7x128xf32>
    %293 = vector.extract_strided_slice %217 {offsets = [10, 0], sizes = [1, 128], strides = [1, 1]} : vector<25x128xf32> to vector<1x128xf32>
    %294 = vector.shape_cast %293 : vector<1x128xf32> to vector<128xf32>
    %295 = vector.shape_cast %294 : vector<128xf32> to vector<1x1x1x128xf32>
    %296 = vector.broadcast %295 : vector<1x1x1x128xf32> to vector<2x7x7x128xf32>
    %297 = arith.mulf %292, %296 : vector<2x7x7x128xf32>
    %298 = arith.addf %290, %297 : vector<2x7x7x128xf32>
    %299 = vector.extract_strided_slice %291 {offsets = [0, 0, 1, 0], sizes = [2, 7, 7, 128], strides = [1, 1, 1, 1]} : vector<2x7x11x128xf32> to vector<2x7x7x128xf32>
    %300 = vector.extract_strided_slice %217 {offsets = [11, 0], sizes = [1, 128], strides = [1, 1]} : vector<25x128xf32> to vector<1x128xf32>
    %301 = vector.shape_cast %300 : vector<1x128xf32> to vector<128xf32>
    %302 = vector.shape_cast %301 : vector<128xf32> to vector<1x1x1x128xf32>
    %303 = vector.broadcast %302 : vector<1x1x1x128xf32> to vector<2x7x7x128xf32>
    %304 = arith.mulf %299, %303 : vector<2x7x7x128xf32>
    %305 = arith.addf %298, %304 : vector<2x7x7x128xf32>
    %306 = vector.extract_strided_slice %291 {offsets = [0, 0, 2, 0], sizes = [2, 7, 7, 128], strides = [1, 1, 1, 1]} : vector<2x7x11x128xf32> to vector<2x7x7x128xf32>
    %307 = vector.extract_strided_slice %217 {offsets = [12, 0], sizes = [1, 128], strides = [1, 1]} : vector<25x128xf32> to vector<1x128xf32>
    %308 = vector.shape_cast %307 : vector<1x128xf32> to vector<128xf32>
    %309 = vector.shape_cast %308 : vector<128xf32> to vector<1x1x1x128xf32>
    %310 = vector.broadcast %309 : vector<1x1x1x128xf32> to vector<2x7x7x128xf32>
    %311 = arith.mulf %306, %310 : vector<2x7x7x128xf32>
    %312 = arith.addf %305, %311 : vector<2x7x7x128xf32>
    %313 = vector.extract_strided_slice %291 {offsets = [0, 0, 3, 0], sizes = [2, 7, 7, 128], strides = [1, 1, 1, 1]} : vector<2x7x11x128xf32> to vector<2x7x7x128xf32>
    %314 = vector.extract_strided_slice %217 {offsets = [13, 0], sizes = [1, 128], strides = [1, 1]} : vector<25x128xf32> to vector<1x128xf32>
    %315 = vector.shape_cast %314 : vector<1x128xf32> to vector<128xf32>
    %316 = vector.shape_cast %315 : vector<128xf32> to vector<1x1x1x128xf32>
    %317 = vector.broadcast %316 : vector<1x1x1x128xf32> to vector<2x7x7x128xf32>
    %318 = arith.mulf %313, %317 : vector<2x7x7x128xf32>
    %319 = arith.addf %312, %318 : vector<2x7x7x128xf32>
    %320 = vector.extract_strided_slice %291 {offsets = [0, 0, 4, 0], sizes = [2, 7, 7, 128], strides = [1, 1, 1, 1]} : vector<2x7x11x128xf32> to vector<2x7x7x128xf32>
    %321 = vector.extract_strided_slice %217 {offsets = [14, 0], sizes = [1, 128], strides = [1, 1]} : vector<25x128xf32> to vector<1x128xf32>
    %322 = vector.shape_cast %321 : vector<1x128xf32> to vector<128xf32>
    %323 = vector.shape_cast %322 : vector<128xf32> to vector<1x1x1x128xf32>
    %324 = vector.broadcast %323 : vector<1x1x1x128xf32> to vector<2x7x7x128xf32>
    %325 = arith.mulf %320, %324 : vector<2x7x7x128xf32>
    %326 = arith.addf %319, %325 : vector<2x7x7x128xf32>
    %c0_71 = arith.constant 0 : index
    %c3_72 = arith.constant 3 : index
    %c0_73 = arith.constant 0 : index
    %c128_74 = arith.constant 128 : index
    %327 = vector.load %arg6[%c0_71, %c3_72, %c0_73, %c128_74] : memref<2x11x11x256xf32, #tpu.memory_space<vmem>>, vector<2x7x11x128xf32>
    %328 = vector.extract_strided_slice %327 {offsets = [0, 0, 0, 0], sizes = [2, 7, 7, 128], strides = [1, 1, 1, 1]} : vector<2x7x11x128xf32> to vector<2x7x7x128xf32>
    %329 = vector.extract_strided_slice %217 {offsets = [15, 0], sizes = [1, 128], strides = [1, 1]} : vector<25x128xf32> to vector<1x128xf32>
    %330 = vector.shape_cast %329 : vector<1x128xf32> to vector<128xf32>
    %331 = vector.shape_cast %330 : vector<128xf32> to vector<1x1x1x128xf32>
    %332 = vector.broadcast %331 : vector<1x1x1x128xf32> to vector<2x7x7x128xf32>
    %333 = arith.mulf %328, %332 : vector<2x7x7x128xf32>
    %334 = arith.addf %326, %333 : vector<2x7x7x128xf32>
    %335 = vector.extract_strided_slice %327 {offsets = [0, 0, 1, 0], sizes = [2, 7, 7, 128], strides = [1, 1, 1, 1]} : vector<2x7x11x128xf32> to vector<2x7x7x128xf32>
    %336 = vector.extract_strided_slice %217 {offsets = [16, 0], sizes = [1, 128], strides = [1, 1]} : vector<25x128xf32> to vector<1x128xf32>
    %337 = vector.shape_cast %336 : vector<1x128xf32> to vector<128xf32>
    %338 = vector.shape_cast %337 : vector<128xf32> to vector<1x1x1x128xf32>
    %339 = vector.broadcast %338 : vector<1x1x1x128xf32> to vector<2x7x7x128xf32>
    %340 = arith.mulf %335, %339 : vector<2x7x7x128xf32>
    %341 = arith.addf %334, %340 : vector<2x7x7x128xf32>
    %342 = vector.extract_strided_slice %327 {offsets = [0, 0, 2, 0], sizes = [2, 7, 7, 128], strides = [1, 1, 1, 1]} : vector<2x7x11x128xf32> to vector<2x7x7x128xf32>
    %343 = vector.extract_strided_slice %217 {offsets = [17, 0], sizes = [1, 128], strides = [1, 1]} : vector<25x128xf32> to vector<1x128xf32>
    %344 = vector.shape_cast %343 : vector<1x128xf32> to vector<128xf32>
    %345 = vector.shape_cast %344 : vector<128xf32> to vector<1x1x1x128xf32>
    %346 = vector.broadcast %345 : vector<1x1x1x128xf32> to vector<2x7x7x128xf32>
    %347 = arith.mulf %342, %346 : vector<2x7x7x128xf32>
    %348 = arith.addf %341, %347 : vector<2x7x7x128xf32>
    %349 = vector.extract_strided_slice %327 {offsets = [0, 0, 3, 0], sizes = [2, 7, 7, 128], strides = [1, 1, 1, 1]} : vector<2x7x11x128xf32> to vector<2x7x7x128xf32>
    %350 = vector.extract_strided_slice %217 {offsets = [18, 0], sizes = [1, 128], strides = [1, 1]} : vector<25x128xf32> to vector<1x128xf32>
    %351 = vector.shape_cast %350 : vector<1x128xf32> to vector<128xf32>
    %352 = vector.shape_cast %351 : vector<128xf32> to vector<1x1x1x128xf32>
    %353 = vector.broadcast %352 : vector<1x1x1x128xf32> to vector<2x7x7x128xf32>
    %354 = arith.mulf %349, %353 : vector<2x7x7x128xf32>
    %355 = arith.addf %348, %354 : vector<2x7x7x128xf32>
    %356 = vector.extract_strided_slice %327 {offsets = [0, 0, 4, 0], sizes = [2, 7, 7, 128], strides = [1, 1, 1, 1]} : vector<2x7x11x128xf32> to vector<2x7x7x128xf32>
    %357 = vector.extract_strided_slice %217 {offsets = [19, 0], sizes = [1, 128], strides = [1, 1]} : vector<25x128xf32> to vector<1x128xf32>
    %358 = vector.shape_cast %357 : vector<1x128xf32> to vector<128xf32>
    %359 = vector.shape_cast %358 : vector<128xf32> to vector<1x1x1x128xf32>
    %360 = vector.broadcast %359 : vector<1x1x1x128xf32> to vector<2x7x7x128xf32>
    %361 = arith.mulf %356, %360 : vector<2x7x7x128xf32>
    %362 = arith.addf %355, %361 : vector<2x7x7x128xf32>
    %c0_75 = arith.constant 0 : index
    %c4_76 = arith.constant 4 : index
    %c0_77 = arith.constant 0 : index
    %c128_78 = arith.constant 128 : index
    %363 = vector.load %arg6[%c0_75, %c4_76, %c0_77, %c128_78] : memref<2x11x11x256xf32, #tpu.memory_space<vmem>>, vector<2x7x11x128xf32>
    %364 = vector.extract_strided_slice %363 {offsets = [0, 0, 0, 0], sizes = [2, 7, 7, 128], strides = [1, 1, 1, 1]} : vector<2x7x11x128xf32> to vector<2x7x7x128xf32>
    %365 = vector.extract_strided_slice %217 {offsets = [20, 0], sizes = [1, 128], strides = [1, 1]} : vector<25x128xf32> to vector<1x128xf32>
    %366 = vector.shape_cast %365 : vector<1x128xf32> to vector<128xf32>
    %367 = vector.shape_cast %366 : vector<128xf32> to vector<1x1x1x128xf32>
    %368 = vector.broadcast %367 : vector<1x1x1x128xf32> to vector<2x7x7x128xf32>
    %369 = arith.mulf %364, %368 : vector<2x7x7x128xf32>
    %370 = arith.addf %362, %369 : vector<2x7x7x128xf32>
    %371 = vector.extract_strided_slice %363 {offsets = [0, 0, 1, 0], sizes = [2, 7, 7, 128], strides = [1, 1, 1, 1]} : vector<2x7x11x128xf32> to vector<2x7x7x128xf32>
    %372 = vector.extract_strided_slice %217 {offsets = [21, 0], sizes = [1, 128], strides = [1, 1]} : vector<25x128xf32> to vector<1x128xf32>
    %373 = vector.shape_cast %372 : vector<1x128xf32> to vector<128xf32>
    %374 = vector.shape_cast %373 : vector<128xf32> to vector<1x1x1x128xf32>
    %375 = vector.broadcast %374 : vector<1x1x1x128xf32> to vector<2x7x7x128xf32>
    %376 = arith.mulf %371, %375 : vector<2x7x7x128xf32>
    %377 = arith.addf %370, %376 : vector<2x7x7x128xf32>
    %378 = vector.extract_strided_slice %363 {offsets = [0, 0, 2, 0], sizes = [2, 7, 7, 128], strides = [1, 1, 1, 1]} : vector<2x7x11x128xf32> to vector<2x7x7x128xf32>
    %379 = vector.extract_strided_slice %217 {offsets = [22, 0], sizes = [1, 128], strides = [1, 1]} : vector<25x128xf32> to vector<1x128xf32>
    %380 = vector.shape_cast %379 : vector<1x128xf32> to vector<128xf32>
    %381 = vector.shape_cast %380 : vector<128xf32> to vector<1x1x1x128xf32>
    %382 = vector.broadcast %381 : vector<1x1x1x128xf32> to vector<2x7x7x128xf32>
    %383 = arith.mulf %378, %382 : vector<2x7x7x128xf32>
    %384 = arith.addf %377, %383 : vector<2x7x7x128xf32>
    %385 = vector.extract_strided_slice %363 {offsets = [0, 0, 3, 0], sizes = [2, 7, 7, 128], strides = [1, 1, 1, 1]} : vector<2x7x11x128xf32> to vector<2x7x7x128xf32>
    %386 = vector.extract_strided_slice %217 {offsets = [23, 0], sizes = [1, 128], strides = [1, 1]} : vector<25x128xf32> to vector<1x128xf32>
    %387 = vector.shape_cast %386 : vector<1x128xf32> to vector<128xf32>
    %388 = vector.shape_cast %387 : vector<128xf32> to vector<1x1x1x128xf32>
    %389 = vector.broadcast %388 : vector<1x1x1x128xf32> to vector<2x7x7x128xf32>
    %390 = arith.mulf %385, %389 : vector<2x7x7x128xf32>
    %391 = arith.addf %384, %390 : vector<2x7x7x128xf32>
    %392 = vector.extract_strided_slice %363 {offsets = [0, 0, 4, 0], sizes = [2, 7, 7, 128], strides = [1, 1, 1, 1]} : vector<2x7x11x128xf32> to vector<2x7x7x128xf32>
    %393 = vector.extract_strided_slice %217 {offsets = [24, 0], sizes = [1, 128], strides = [1, 1]} : vector<25x128xf32> to vector<1x128xf32>
    %394 = vector.shape_cast %393 : vector<1x128xf32> to vector<128xf32>
    %395 = vector.shape_cast %394 : vector<128xf32> to vector<1x1x1x128xf32>
    %396 = vector.broadcast %395 : vector<1x1x1x128xf32> to vector<2x7x7x128xf32>
    %397 = arith.mulf %392, %396 : vector<2x7x7x128xf32>
    %398 = arith.addf %391, %397 : vector<2x7x7x128xf32>
    %cst_79 = arith.constant dense<0.000000e+00> : vector<128xf32>
    %399 = vector.multi_reduction <add>, %398, %cst_79 [0, 1, 2] : vector<2x7x7x128xf32> to vector<128xf32>
    %cst_80 = arith.constant 9.800000e+01 : f32
    %400 = vector.broadcast %cst_80 : f32 to vector<128xf32>
    %401 = arith.divf %399, %400 : vector<128xf32>
    %402 = vector.shape_cast %401 : vector<128xf32> to vector<1x1x1x128xf32>
    %403 = vector.broadcast %402 : vector<1x1x1x128xf32> to vector<2x7x7x128xf32>
    %404 = arith.subf %398, %403 : vector<2x7x7x128xf32>
    %405 = arith.mulf %404, %404 : vector<2x7x7x128xf32>
    %cst_81 = arith.constant dense<0.000000e+00> : vector<128xf32>
    %406 = vector.multi_reduction <add>, %405, %cst_81 [0, 1, 2] : vector<2x7x7x128xf32> to vector<128xf32>
    %cst_82 = arith.constant 9.800000e+01 : f32
    %407 = vector.broadcast %cst_82 : f32 to vector<128xf32>
    %408 = arith.divf %406, %407 : vector<128xf32>
    %cst_83 = arith.constant 1.000000e-03 : f32
    %409 = vector.broadcast %cst_83 : f32 to vector<128xf32>
    %410 = arith.addf %408, %409 : vector<128xf32>
    %411 = math.rsqrt %410 : vector<128xf32>
    %c0_84 = arith.constant 0 : index
    %c128_85 = arith.constant 128 : index
    %412 = vector.load %arg3[%c0_84, %c128_85] : memref<1x256xf32, #tpu.memory_space<vmem>>, vector<1x128xf32>
    %413 = vector.shape_cast %412 : vector<1x128xf32> to vector<128xf32>
    %c0_86 = arith.constant 0 : index
    %c128_87 = arith.constant 128 : index
    %414 = vector.load %arg4[%c0_86, %c128_87] : memref<1x256xf32, #tpu.memory_space<vmem>>, vector<1x128xf32>
    %415 = vector.shape_cast %414 : vector<1x128xf32> to vector<128xf32>
    %416 = arith.mulf %411, %413 : vector<128xf32>
    %417 = vector.shape_cast %416 : vector<128xf32> to vector<1x1x1x128xf32>
    %418 = vector.broadcast %417 : vector<1x1x1x128xf32> to vector<2x7x7x128xf32>
    %419 = arith.mulf %404, %418 : vector<2x7x7x128xf32>
    %420 = vector.shape_cast %415 : vector<128xf32> to vector<1x1x1x128xf32>
    %421 = vector.broadcast %420 : vector<1x1x1x128xf32> to vector<2x7x7x128xf32>
    %422 = arith.addf %419, %421 : vector<2x7x7x128xf32>
    %c0_88 = arith.constant 0 : index
    %c0_89 = arith.constant 0 : index
    %c0_90 = arith.constant 0 : index
    %c128_91 = arith.constant 128 : index
    %423 = vector.load %arg5[%c0_88, %c0_89, %c0_90, %c128_91] : memref<2x7x7x256xf32, #tpu.memory_space<vmem>>, vector<2x7x7x128xf32>
    tpu.vector_store %arg5[%c0_88, %c0_89, %c0_90, %c128_91], %422 {strides = array<i32>} : memref<2x7x7x256xf32, #tpu.memory_space<vmem>>, vector<2x7x7x128xf32>,
    return
  }
  func.func @transform_0(%arg0: i32) -> (i32, i32, i32, i32) {
    %c0_i32 = arith.constant 0 : i32
    %c0_i32_0 = arith.constant 0 : i32
    %c0_i32_1 = arith.constant 0 : i32
    %c0_i32_2 = arith.constant 0 : i32
    return %c0_i32, %c0_i32_0, %c0_i32_1, %arg0 : i32, i32, i32, i32
  }
  func.func @transform_1(%arg0: i32) -> (i32, i32) {
    %c0_i32 = arith.constant 0 : i32
    %c0_i32_0 = arith.constant 0 : i32
    return %c0_i32, %arg0 : i32, i32
  }
  func.func @transform_2(%arg0: i32) -> (i32, i32) {
    %c0_i32 = arith.constant 0 : i32
    %c0_i32_0 = arith.constant 0 : i32
    return %c0_i32, %arg0 : i32, i32
  }
  func.func @transform_3(%arg0: i32) -> (i32, i32) {
    %c0_i32 = arith.constant 0 : i32
    %c0_i32_0 = arith.constant 0 : i32
    return %c0_i32, %arg0 : i32, i32
  }
  func.func @transform_4(%arg0: i32) -> (i32, i32, i32, i32) {
    %c0_i32 = arith.constant 0 : i32
    %c0_i32_0 = arith.constant 0 : i32
    %c0_i32_1 = arith.constant 0 : i32
    %c0_i32_2 = arith.constant 0 : i32
    return %c0_i32, %c0_i32_0, %c0_i32_1, %arg0 : i32, i32, i32, i32
  }
}

</mosaic_0001>

<llo_original>
// kernel: tpu_custom_call.1
$region0: #{tpu_custom_call.1}
  #allocation0 [shape = 'u32[]', space=smem, size = 0x4, offset = 0x4, fixed_abs, tag = 'smem constant byte address 0x4 - core index']
  #allocation1 [shape = 'u32[72,128]{1,0:T(1,128)}', space=vmem, size = 0x9000, scoped, tag = 'internal scratch']
  #allocation2 [shape = 'f32[2,11,11,256]{3,2,1,0:T(8,128)}', space=vmem, size = 0x58000, scoped, tag = 'scratch operand']
  %s0 = inlined_call_operand.vmem [shape: f32[2,7,7,256], index: 0, kind: input, shape index: {}]
  %s1 = inlined_call_operand.vmem [shape: f32[25,256], index: 1, kind: input, shape index: {}]
  %s2 = inlined_call_operand.vmem [shape: f32[1,256], index: 2, kind: input, shape index: {}]
  %s3 = inlined_call_operand.vmem [shape: f32[1,256], index: 3, kind: input, shape index: {}]
  %s4 = inlined_call_operand.vmem [shape: f32[2,7,7,256], index: 4, kind: output, shape index: {}]
  %s5 = sld [smem:[#allocation0]]
  $region26: #{tpu_custom_call.1} parent=0
    _
  %s7 = ssub.s32 1, %s5
  %s8 = scalar_select 0, %s7, %s5
  // Predicated region
  $region2: #{tpu_custom_call.1} parent=0 // pred_check
    _
  $region3: #{tpu_custom_call.1} parent=0 // pred_check_branch
    %10 = sbr.rel (0) target = $region5
  $region4: #{tpu_custom_call.1} parent=0 // pred_region
    _
  $region5: #{tpu_custom_call.1} parent=0 // pred_fallthru
    _
  // Predicated region
  $region6: #{tpu_custom_call.1} parent=0 // pred_check
    _
  $region7: #{tpu_custom_call.1} parent=0 // pred_check_branch
    %12 = sbr.rel (0) target = $region9
  $region8: #{tpu_custom_call.1} parent=0 // pred_region
    _
  $region9: #{tpu_custom_call.1} parent=0 // pred_fallthru
    _
  // Predicated region
  $region10: #{tpu_custom_call.1} parent=0 // pred_check
    _
  $region11: #{tpu_custom_call.1} parent=0 // pred_check_branch
    %14 = sbr.rel (0) target = $region13
  $region12: #{tpu_custom_call.1} parent=0 // pred_region
    _
  $region13: #{tpu_custom_call.1} parent=0 // pred_fallthru
    _
  // Predicated region
  $region14: #{tpu_custom_call.1} parent=0 // pred_check
    _
  $region15: #{tpu_custom_call.1} parent=0 // pred_check_branch
    %16 = sbr.rel (0) target = $region17
  $region16: #{tpu_custom_call.1} parent=0 // pred_region
    _
  $region17: #{tpu_custom_call.1} parent=0 // pred_fallthru
    _
  %17 = vst [vmem:[#allocation2] sm:$0xff] 0.0
  %18 = vst [vmem:[#allocation2 + $0x8] sm:$0xff] 0.0
  %19 = vst [vmem:[#allocation2 + $0x10] sm:$0x7] 0.0
  %20 = vst [vmem:[#allocation2 + $0x18] sm:$0x7] 0.0
  %21 = vst [vmem:[#allocation2 + $0x20] sm:$0xff] 0.0
  %22 = vst [vmem:[#allocation2 + $0x28] sm:$0xff] 0.0
  %23 = vst [vmem:[#allocation2 + $0x30] sm:$0x7] 0.0
  %24 = vst [vmem:[#allocation2 + $0x38] sm:$0x7] 0.0
  %25 = vst [vmem:[#allocation2 + $0x160] sm:$0xff] 0.0
  %26 = vst [vmem:[#allocation2 + $0x168] sm:$0xff] 0.0
  %27 = vst [vmem:[#allocation2 + $0x170] sm:$0x7] 0.0
  %28 = vst [vmem:[#allocation2 + $0x178] sm:$0x7] 0.0
  %29 = vst [vmem:[#allocation2 + $0x180] sm:$0xff] 0.0
  %30 = vst [vmem:[#allocation2 + $0x188] sm:$0xff] 0.0
  %31 = vst [vmem:[#allocation2 + $0x190] sm:$0x7] 0.0
  %32 = vst [vmem:[#allocation2 + $0x198] sm:$0x7] 0.0
  %s33 = scalar_lea.vmem [#allocation2], 288
  %34 = vst [vmem:[%s33] sm:$0xff] 0.0
  %35 = vst [vmem:[%s33 + $0x8] sm:$0xff] 0.0
  %36 = vst [vmem:[%s33 + $0x10] sm:$0x7] 0.0
  %37 = vst [vmem:[%s33 + $0x18] sm:$0x7] 0.0
  %38 = vst [vmem:[%s33 + $0x20] sm:$0xff] 0.0
  %39 = vst [vmem:[%s33 + $0x28] sm:$0xff] 0.0
  %40 = vst [vmem:[%s33 + $0x30] sm:$0x7] 0.0
  %41 = vst [vmem:[%s33 + $0x38] sm:$0x7] 0.0
  %42 = vst [vmem:[%s33 + $0x160] sm:$0xff] 0.0
  %43 = vst [vmem:[%s33 + $0x168] sm:$0xff] 0.0
  %44 = vst [vmem:[%s33 + $0x170] sm:$0x7] 0.0
  %45 = vst [vmem:[%s33 + $0x178] sm:$0x7] 0.0
  %46 = vst [vmem:[%s33 + $0x180] sm:$0xff] 0.0
  %47 = vst [vmem:[%s33 + $0x188] sm:$0xff] 0.0
  %48 = vst [vmem:[%s33 + $0x190] sm:$0x7] 0.0
  %49 = vst [vmem:[%s33 + $0x198] sm:$0x7] 0.0
  %s50 = scalar_lea.vmem [#allocation2], 64
  %51 = vst [vmem:[%s50] sm:$0x3] 0.0
  %52 = vst [vmem:[%s50 + $0x8] sm:$0x3] 0.0
  %53 = vst [vmem:[%s50 + $0x20] sm:$0x3] 0.0
  %54 = vst [vmem:[%s50 + $0x28] sm:$0x3] 0.0
  %55 = vst [vmem:[%s50 + $0x40] sm:$0x3] 0.0
  %56 = vst [vmem:[%s50 + $0x48] sm:$0x3] 0.0
  %57 = vst [vmem:[%s50 + $0x60] sm:$0x3] 0.0
  %58 = vst [vmem:[%s50 + $0x68] sm:$0x3] 0.0
  %59 = vst [vmem:[%s50 + $0x80] sm:$0x3] 0.0
  %60 = vst [vmem:[%s50 + $0x88] sm:$0x3] 0.0
  %61 = vst [vmem:[%s50 + $0xa0] sm:$0x3] 0.0
  %62 = vst [vmem:[%s50 + $0xa8] sm:$0x3] 0.0
  %63 = vst [vmem:[%s50 + $0xc0] sm:$0x3] 0.0
  %64 = vst [vmem:[%s50 + $0xc8] sm:$0x3] 0.0
  %65 = vst [vmem:[%s50 + $0x160] sm:$0x3] 0.0
  %66 = vst [vmem:[%s50 + $0x168] sm:$0x3] 0.0
  %67 = vst [vmem:[%s50 + $0x180] sm:$0x3] 0.0
  %68 = vst [vmem:[%s50 + $0x188] sm:$0x3] 0.0
  %69 = vst [vmem:[%s50 + $0x1a0] sm:$0x3] 0.0
  %70 = vst [vmem:[%s50 + $0x1a8] sm:$0x3] 0.0
  %71 = vst [vmem:[%s50 + $0x1c0] sm:$0x3] 0.0
  %72 = vst [vmem:[%s50 + $0x1c8] sm:$0x3] 0.0
  %73 = vst [vmem:[%s50 + $0x1e0] sm:$0x3] 0.0
  %74 = vst [vmem:[%s50 + $0x1e8] sm:$0x3] 0.0
  %75 = vst [vmem:[%s50 + $0x200] sm:$0x3] 0.0
  %76 = vst [vmem:[%s50 + $0x208] sm:$0x3] 0.0
  %77 = vst [vmem:[%s50 + $0x220] sm:$0x3] 0.0
  %78 = vst [vmem:[%s50 + $0x228] sm:$0x3] 0.0
  %79 = vst [vmem:[%s50 + $0x10] sm:$0x6] 0.0
  %80 = vst [vmem:[%s50 + $0x18] sm:$0x6] 0.0
  %81 = vst [vmem:[%s50 + $0x30] sm:$0x6] 0.0
  %82 = vst [vmem:[%s50 + $0x38] sm:$0x6] 0.0
  %83 = vst [vmem:[%s50 + $0x50] sm:$0x6] 0.0
  %84 = vst [vmem:[%s50 + $0x58] sm:$0x6] 0.0
  %85 = vst [vmem:[%s50 + $0x70] sm:$0x6] 0.0
  %86 = vst [vmem:[%s50 + $0x78] sm:$0x6] 0.0
  %87 = vst [vmem:[%s50 + $0x90] sm:$0x6] 0.0
  %88 = vst [vmem:[%s50 + $0x98] sm:$0x6] 0.0
  %89 = vst [vmem:[%s50 + $0xb0] sm:$0x6] 0.0
  %90 = vst [vmem:[%s50 + $0xb8] sm:$0x6] 0.0
  %91 = vst [vmem:[%s50 + $0xd0] sm:$0x6] 0.0
  %92 = vst [vmem:[%s50 + $0xd8] sm:$0x6] 0.0
  %93 = vst [vmem:[%s50 + $0x170] sm:$0x6] 0.0
  %94 = vst [vmem:[%s50 + $0x178] sm:$0x6] 0.0
  %95 = vst [vmem:[%s50 + $0x190] sm:$0x6] 0.0
  %96 = vst [vmem:[%s50 + $0x198] sm:$0x6] 0.0
  %97 = vst [vmem:[%s50 + $0x1b0] sm:$0x6] 0.0
  %98 = vst [vmem:[%s50 + $0x1b8] sm:$0x6] 0.0
  %99 = vst [vmem:[%s50 + $0x1d0] sm:$0x6] 0.0
  %100 = vst [vmem:[%s50 + $0x1d8] sm:$0x6] 0.0
  %101 = vst [vmem:[%s50 + $0x1f0] sm:$0x6] 0.0
  %102 = vst [vmem:[%s50 + $0x1f8] sm:$0x6] 0.0
  %103 = vst [vmem:[%s50 + $0x210] sm:$0x6] 0.0
  %104 = vst [vmem:[%s50 + $0x218] sm:$0x6] 0.0
  %105 = vst [vmem:[%s50 + $0x230] sm:$0x6] 0.0
  %106 = vst [vmem:[%s50 + $0x238] sm:$0x6] 0.0
  %v107 = vld [vmem:[%s0] sm:$0x7f]
  %v108 = vld [vmem:[%s0 + $0x8] sm:$0x7f]
  %v109 = vld [vmem:[%s0 + $0x10] sm:$0x7f]
  %v110 = vld [vmem:[%s0 + $0x18] sm:$0x7f]
  %v111 = vld [vmem:[%s0 + $0x20] sm:$0x7f]
  %v112 = vld [vmem:[%s0 + $0x28] sm:$0x7f]
  %v113 = vld [vmem:[%s0 + $0x30] sm:$0x7f]
  %v114 = vld [vmem:[%s0 + $0x38] sm:$0x7f]
  %v115 = vld [vmem:[%s0 + $0x40] sm:$0x7f]
  %v116 = vld [vmem:[%s0 + $0x48] sm:$0x7f]
  %v117 = vld [vmem:[%s0 + $0x50] sm:$0x7f]
  %v118 = vld [vmem:[%s0 + $0x58] sm:$0x7f]
  %v119 = vld [vmem:[%s0 + $0x60] sm:$0x7f]
  %v120 = vld [vmem:[%s0 + $0x68] sm:$0x7f]
  %v121 = vld [vmem:[%s0 + $0x70] sm:$0x7f]
  %v122 = vld [vmem:[%s0 + $0x78] sm:$0x7f]
  %v123 = vld [vmem:[%s0 + $0x80] sm:$0x7f]
  %v124 = vld [vmem:[%s0 + $0x88] sm:$0x7f]
  %v125 = vld [vmem:[%s0 + $0x90] sm:$0x7f]
  %v126 = vld [vmem:[%s0 + $0x98] sm:$0x7f]
  %v127 = vld [vmem:[%s0 + $0xa0] sm:$0x7f]
  %v128 = vld [vmem:[%s0 + $0xa8] sm:$0x7f]
  %v129 = vld [vmem:[%s0 + $0xb0] sm:$0x7f]
  %v130 = vld [vmem:[%s0 + $0xb8] sm:$0x7f]
  %v131 = vld [vmem:[%s0 + $0xc0] sm:$0x7f]
  %v132 = vld [vmem:[%s0 + $0xc8] sm:$0x7f]
  %v133 = vld [vmem:[%s0 + $0xd0] sm:$0x7f]
  %v134 = vld [vmem:[%s0 + $0xd8] sm:$0x7f]
  %v163 = vrot.slane %v107, 6
  %v164 = vrot.slane %v108, 6
  %v165 = vrot.slane %v109, 6
  %v166 = vrot.slane %v110, 6
  %v167 = vrot.slane %v111, 6
  %v168 = vrot.slane %v112, 6
  %v169 = vrot.slane %v113, 6
  %v170 = vrot.slane %v114, 6
  %v171 = vrot.slane %v115, 6
  %v172 = vrot.slane %v116, 6
  %v173 = vrot.slane %v117, 6
  %v174 = vrot.slane %v118, 6
  %v175 = vrot.slane %v119, 6
  %v176 = vrot.slane %v120, 6
  %v177 = vrot.slane %v121, 6
  %v178 = vrot.slane %v122, 6
  %v179 = vrot.slane %v123, 6
  %v180 = vrot.slane %v124, 6
  %v181 = vrot.slane %v125, 6
  %v182 = vrot.slane %v126, 6
  %v183 = vrot.slane %v127, 6
  %v184 = vrot.slane %v128, 6
  %v185 = vrot.slane %v129, 6
  %v186 = vrot.slane %v130, 6
  %v187 = vrot.slane %v131, 6
  %v188 = vrot.slane %v132, 6
  %v189 = vrot.slane %v133, 6
  %v190 = vrot.slane %v134, 6
  %219 = vst [vmem:[%s50] sm:$0xfc] %v163
  %220 = vst [vmem:[%s50 + $0x8] sm:$0xfc] %v164
  %221 = vst [vmem:[%s50 + $0x10] sm:$0x1] %v163
  %222 = vst [vmem:[%s50 + $0x18] sm:$0x1] %v164
  %223 = vst [vmem:[%s50 + $0x20] sm:$0xfc] %v165
  %224 = vst [vmem:[%s50 + $0x28] sm:$0xfc] %v166
  %225 = vst [vmem:[%s50 + $0x30] sm:$0x1] %v165
  %226 = vst [vmem:[%s50 + $0x38] sm:$0x1] %v166
  %227 = vst [vmem:[%s50 + $0x40] sm:$0xfc] %v167
  %228 = vst [vmem:[%s50 + $0x48] sm:$0xfc] %v168
  %229 = vst [vmem:[%s50 + $0x50] sm:$0x1] %v167
  %230 = vst [vmem:[%s50 + $0x58] sm:$0x1] %v168
  %231 = vst [vmem:[%s50 + $0x60] sm:$0xfc] %v169
  %232 = vst [vmem:[%s50 + $0x68] sm:$0xfc] %v170
  %233 = vst [vmem:[%s50 + $0x70] sm:$0x1] %v169
  %234 = vst [vmem:[%s50 + $0x78] sm:$0x1] %v170
  %235 = vst [vmem:[%s50 + $0x80] sm:$0xfc] %v171
  %236 = vst [vmem:[%s50 + $0x88] sm:$0xfc] %v172
  %237 = vst [vmem:[%s50 + $0x90] sm:$0x1] %v171
  %238 = vst [vmem:[%s50 + $0x98] sm:$0x1] %v172
  %239 = vst [vmem:[%s50 + $0xa0] sm:$0xfc] %v173
  %240 = vst [vmem:[%s50 + $0xa8] sm:$0xfc] %v174
  %241 = vst [vmem:[%s50 + $0xb0] sm:$0x1] %v173
  %242 = vst [vmem:[%s50 + $0xb8] sm:$0x1] %v174
  %243 = vst [vmem:[%s50 + $0xc0] sm:$0xfc] %v175
  %244 = vst [vmem:[%s50 + $0xc8] sm:$0xfc] %v176
  %245 = vst [vmem:[%s50 + $0xd0] sm:$0x1] %v175
  %246 = vst [vmem:[%s50 + $0xd8] sm:$0x1] %v176
  %247 = vst [vmem:[%s50 + $0x160] sm:$0xfc] %v177
  %248 = vst [vmem:[%s50 + $0x168] sm:$0xfc] %v178
  %249 = vst [vmem:[%s50 + $0x170] sm:$0x1] %v177
  %250 = vst [vmem:[%s50 + $0x178] sm:$0x1] %v178
  %251 = vst [vmem:[%s50 + $0x180] sm:$0xfc] %v179
  %252 = vst [vmem:[%s50 + $0x188] sm:$0xfc] %v180
  %253 = vst [vmem:[%s50 + $0x190] sm:$0x1] %v179
  %254 = vst [vmem:[%s50 + $0x198] sm:$0x1] %v180
  %255 = vst [vmem:[%s50 + $0x1a0] sm:$0xfc] %v181
  %256 = vst [vmem:[%s50 + $0x1a8] sm:$0xfc] %v182
  %257 = vst [vmem:[%s50 + $0x1b0] sm:$0x1] %v181
  %258 = vst [vmem:[%s50 + $0x1b8] sm:$0x1] %v182
  %259 = vst [vmem:[%s50 + $0x1c0] sm:$0xfc] %v183
  %260 = vst [vmem:[%s50 + $0x1c8] sm:$0xfc] %v184
  %261 = vst [vmem:[%s50 + $0x1d0] sm:$0x1] %v183
  %262 = vst [vmem:[%s50 + $0x1d8] sm:$0x1] %v184
  %263 = vst [vmem:[%s50 + $0x1e0] sm:$0xfc] %v185
  %264 = vst [vmem:[%s50 + $0x1e8] sm:$0xfc] %v186
  %265 = vst [vmem:[%s50 + $0x1f0] sm:$0x1] %v185
  %266 = vst [vmem:[%s50 + $0x1f8] sm:$0x1] %v186
  %267 = vst [vmem:[%s50 + $0x200] sm:$0xfc] %v187
  %268 = vst [vmem:[%s50 + $0x208] sm:$0xfc] %v188
  %269 = vst [vmem:[%s50 + $0x210] sm:$0x1] %v187
  %270 = vst [vmem:[%s50 + $0x218] sm:$0x1] %v188
  %271 = vst [vmem:[%s50 + $0x220] sm:$0xfc] %v189
  %272 = vst [vmem:[%s50 + $0x228] sm:$0xfc] %v190
  %273 = vst [vmem:[%s50 + $0x230] sm:$0x1] %v189
  %274 = vst [vmem:[%s50 + $0x238] sm:$0x1] %v190
  %v275 = vld [vmem:[%s1] sm:$0xff]
  %v276 = vld [vmem:[%s1 + $0x10] sm:$0xff]
  %v277 = vld [vmem:[%s1 + $0x20] sm:$0xff]
  %v278 = vld [vmem:[%s1 + $0x30] sm:$0x1]
  %v279 = vld [vmem:[#allocation2] sm:$0xff]
  %v280 = vld [vmem:[#allocation2 + $0x10] sm:$0x7]
  %v281 = vld [vmem:[#allocation2 + $0x20] sm:$0xff]
  %v282 = vld [vmem:[#allocation2 + $0x30] sm:$0x7]
  %v283 = vld [vmem:[#allocation2 + $0x40] sm:$0xff]
  %v284 = vld [vmem:[#allocation2 + $0x50] sm:$0x7]
  %v285 = vld [vmem:[#allocation2 + $0x60] sm:$0xff]
  %v286 = vld [vmem:[#allocation2 + $0x70] sm:$0x7]
  %v287 = vld [vmem:[#allocation2 + $0x80] sm:$0xff]
  %v288 = vld [vmem:[#allocation2 + $0x90] sm:$0x7]
  %v289 = vld [vmem:[#allocation2 + $0xa0] sm:$0xff]
  %v290 = vld [vmem:[#allocation2 + $0xb0] sm:$0x7]
  %v291 = vld [vmem:[#allocation2 + $0xc0] sm:$0xff]
  %v292 = vld [vmem:[#allocation2 + $0xd0] sm:$0x7]
  %v293 = vld [vmem:[#allocation2 + $0x160] sm:$0xff]
  %v294 = vld [vmem:[#allocation2 + $0x170] sm:$0x7]
  %v295 = vld [vmem:[#allocation2 + $0x180] sm:$0xff]
  %v296 = vld [vmem:[#allocation2 + $0x190] sm:$0x7]
  %v297 = vld [vmem:[#allocation2 + $0x1a0] sm:$0xff]
  %v298 = vld [vmem:[#allocation2 + $0x1b0] sm:$0x7]
  %v299 = vld [vmem:[#allocation2 + $0x1c0] sm:$0xff]
  %v300 = vld [vmem:[#allocation2 + $0x1d0] sm:$0x7]
  %v301 = vld [vmem:[#allocation2 + $0x1e0] sm:$0xff]
  %v302 = vld [vmem:[#allocation2 + $0x1f0] sm:$0x7]
  %v303 = vld [vmem:[#allocation2 + $0x200] sm:$0xff]
  %v304 = vld [vmem:[#allocation2 + $0x210] sm:$0x7]
  %v305 = vld [vmem:[#allocation2 + $0x220] sm:$0xff]
  %v306 = vld [vmem:[#allocation2 + $0x230] sm:$0x7]
  %v307 = vperm.slane %v275, 0
  %v308 = vmul.f32 %v279, %v307
  %v309 = vmul.f32 %v281, %v307
  %v310 = vmul.f32 %v283, %v307
  %v311 = vmul.f32 %v285, %v307
  %v312 = vmul.f32 %v287, %v307
  %v313 = vmul.f32 %v289, %v307
  %v314 = vmul.f32 %v291, %v307
  %v315 = vmul.f32 %v293, %v307
  %v316 = vmul.f32 %v295, %v307
  %v317 = vmul.f32 %v297, %v307
  %v318 = vmul.f32 %v299, %v307
  %v319 = vmul.f32 %v301, %v307
  %v320 = vmul.f32 %v303, %v307
  %v321 = vmul.f32 %v305, %v307
  %v322 = vadd.f32 %v308, 0.0
  %v323 = vadd.f32 %v309, 0.0
  %v324 = vadd.f32 %v310, 0.0
  %v325 = vadd.f32 %v311, 0.0
  %v326 = vadd.f32 %v312, 0.0
  %v327 = vadd.f32 %v313, 0.0
  %v328 = vadd.f32 %v314, 0.0
  %v329 = vadd.f32 %v315, 0.0
  %v330 = vadd.f32 %v316, 0.0
  %v331 = vadd.f32 %v317, 0.0
  %v332 = vadd.f32 %v318, 0.0
  %v333 = vadd.f32 %v319, 0.0
  %v334 = vadd.f32 %v320, 0.0
  %v335 = vadd.f32 %v321, 0.0
  %v336 = vperm.slane %v275, 1
  %v337 = vmul.f32 %v279, %v336
  %v338 = vmul.f32 %v281, %v336
  %v339 = vmul.f32 %v283, %v336
  %v340 = vmul.f32 %v285, %v336
  %v341 = vmul.f32 %v287, %v336
  %v342 = vmul.f32 %v289, %v336
  %v343 = vmul.f32 %v291, %v336
  %v344 = vmul.f32 %v293, %v336
  %v345 = vmul.f32 %v295, %v336
  %v346 = vmul.f32 %v297, %v336
  %v347 = vmul.f32 %v299, %v336
  %v348 = vmul.f32 %v301, %v336
  %v349 = vmul.f32 %v303, %v336
  %v350 = vmul.f32 %v305, %v336
  %v365 = vrot.slane %v337, 1
  %v366 = vrot.slane %v338, 1
  %v367 = vrot.slane %v339, 1
  %v368 = vrot.slane %v340, 1
  %v369 = vrot.slane %v341, 1
  %v370 = vrot.slane %v342, 1
  %v371 = vrot.slane %v343, 1
  %v372 = vrot.slane %v344, 1
  %v373 = vrot.slane %v345, 1
  %v374 = vrot.slane %v346, 1
  %v375 = vrot.slane %v347, 1
  %v376 = vrot.slane %v348, 1
  %v377 = vrot.slane %v349, 1
  %v378 = vrot.slane %v350, 1
  %v393 = vadd.f32 %v322, %v365
  %v394 = vadd.f32 %v323, %v366
  %v395 = vadd.f32 %v324, %v367
  %v396 = vadd.f32 %v325, %v368
  %v397 = vadd.f32 %v326, %v369
  %v398 = vadd.f32 %v327, %v370
  %v399 = vadd.f32 %v328, %v371
  %v400 = vadd.f32 %v329, %v372
  %v401 = vadd.f32 %v330, %v373
  %v402 = vadd.f32 %v331, %v374
  %v403 = vadd.f32 %v332, %v375
  %v404 = vadd.f32 %v333, %v376
  %v405 = vadd.f32 %v334, %v377
  %v406 = vadd.f32 %v335, %v378
  %v407 = vperm.slane %v275, 2
  %v408 = vmul.f32 %v279, %v407
  %v409 = vmul.f32 %v280, %v407
  %v410 = vmul.f32 %v281, %v407
  %v411 = vmul.f32 %v282, %v407
  %v412 = vmul.f32 %v283, %v407
  %v413 = vmul.f32 %v284, %v407
  %v414 = vmul.f32 %v285, %v407
  %v415 = vmul.f32 %v286, %v407
  %v416 = vmul.f32 %v287, %v407
  %v417 = vmul.f32 %v288, %v407
  %v418 = vmul.f32 %v289, %v407
  %v419 = vmul.f32 %v290, %v407
  %v420 = vmul.f32 %v291, %v407
  %v421 = vmul.f32 %v292, %v407
  %v422 = vmul.f32 %v293, %v407
  %v423 = vmul.f32 %v294, %v407
  %v424 = vmul.f32 %v295, %v407
  %v425 = vmul.f32 %v296, %v407
  %v426 = vmul.f32 %v297, %v407
  %v427 = vmul.f32 %v298, %v407
  %v428 = vmul.f32 %v299, %v407
  %v429 = vmul.f32 %v300, %v407
  %v430 = vmul.f32 %v301, %v407
  %v431 = vmul.f32 %v302, %v407
  %v432 = vmul.f32 %v303, %v407
  %v433 = vmul.f32 %v304, %v407
  %v434 = vmul.f32 %v305, %v407
  %v435 = vmul.f32 %v306, %v407
  %vm464 = vcmask 1045504
  %v465 = vrot.slane %v408, 2
  %v466 = vrot.slane %v409, 2
  %v467 = vsel %vm464, %v465, %v466
  %v468 = vrot.slane %v410, 2
  %v469 = vrot.slane %v411, 2
  %v470 = vsel %vm464, %v468, %v469
  %v471 = vrot.slane %v412, 2
  %v472 = vrot.slane %v413, 2
  %v473 = vsel %vm464, %v471, %v472
  %v474 = vrot.slane %v414, 2
  %v475 = vrot.slane %v415, 2
  %v476 = vsel %vm464, %v474, %v475
  %v477 = vrot.slane %v416, 2
  %v478 = vrot.slane %v417, 2
  %v479 = vsel %vm464, %v477, %v478
  %v480 = vrot.slane %v418, 2
  %v481 = vrot.slane %v419, 2
  %v482 = vsel %vm464, %v480, %v481
  %v483 = vrot.slane %v420, 2
  %v484 = vrot.slane %v421, 2
  %v485 = vsel %vm464, %v483, %v484
  %v486 = vrot.slane %v422, 2
  %v487 = vrot.slane %v423, 2
  %v488 = vsel %vm464, %v486, %v487
  %v489 = vrot.slane %v424, 2
  %v490 = vrot.slane %v425, 2
  %v491 = vsel %vm464, %v489, %v490
  %v492 = vrot.slane %v426, 2
  %v493 = vrot.slane %v427, 2
  %v494 = vsel %vm464, %v492, %v493
  %v495 = vrot.slane %v428, 2
  %v496 = vrot.slane %v429, 2
  %v497 = vsel %vm464, %v495, %v496
  %v498 = vrot.slane %v430, 2
  %v499 = vrot.slane %v431, 2
  %v500 = vsel %vm464, %v498, %v499
  %v501 = vrot.slane %v432, 2
  %v502 = vrot.slane %v433, 2
  %v503 = vsel %vm464, %v501, %v502
  %v504 = vrot.slane %v434, 2
  %v505 = vrot.slane %v435, 2
  %v506 = vsel %vm464, %v504, %v505
  %v521 = vadd.f32 %v393, %v467
  %v522 = vadd.f32 %v394, %v470
  %v523 = vadd.f32 %v395, %v473
  %v524 = vadd.f32 %v396, %v476
  %v525 = vadd.f32 %v397, %v479
  %v526 = vadd.f32 %v398, %v482
  %v527 = vadd.f32 %v399, %v485
  %v528 = vadd.f32 %v400, %v488
  %v529 = vadd.f32 %v401, %v491
  %v530 = vadd.f32 %v402, %v494
  %v531 = vadd.f32 %v403, %v497
  %v532 = vadd.f32 %v404, %v500
  %v533 = vadd.f32 %v405, %v503
  %v534 = vadd.f32 %v406, %v506
  %v535 = vperm.slane %v275, 3
  %v536 = vmul.f32 %v279, %v535
  %v537 = vmul.f32 %v280, %v535
  %v538 = vmul.f32 %v281, %v535
  %v539 = vmul.f32 %v282, %v535
  %v540 = vmul.f32 %v283, %v535
  %v541 = vmul.f32 %v284, %v535
  %v542 = vmul.f32 %v285, %v535
  %v543 = vmul.f32 %v286, %v535
  %v544 = vmul.f32 %v287, %v535
  %v545 = vmul.f32 %v288, %v535
  %v546 = vmul.f32 %v289, %v535
  %v547 = vmul.f32 %v290, %v535
  %v548 = vmul.f32 %v291, %v535
  %v549 = vmul.f32 %v292, %v535
  %v550 = vmul.f32 %v293, %v535
  %v551 = vmul.f32 %v294, %v535
  %v552 = vmul.f32 %v295, %v535
  %v553 = vmul.f32 %v296, %v535
  %v554 = vmul.f32 %v297, %v535
  %v555 = vmul.f32 %v298, %v535
  %v556 = vmul.f32 %v299, %v535
  %v557 = vmul.f32 %v300, %v535
  %v558 = vmul.f32 %v301, %v535
  %v559 = vmul.f32 %v302, %v535
  %v560 = vmul.f32 %v303, %v535
  %v561 = vmul.f32 %v304, %v535
  %v562 = vmul.f32 %v305, %v535
  %v563 = vmul.f32 %v306, %v535
  %vm592 = vcmask 1044480
  %v593 = vrot.slane %v536, 3
  %v594 = vrot.slane %v537, 3
  %v595 = vsel %vm592, %v593, %v594
  %v596 = vrot.slane %v538, 3
  %v597 = vrot.slane %v539, 3
  %v598 = vsel %vm592, %v596, %v597
  %v599 = vrot.slane %v540, 3
  %v600 = vrot.slane %v541, 3
  %v601 = vsel %vm592, %v599, %v600
  %v602 = vrot.slane %v542, 3
  %v603 = vrot.slane %v543, 3
  %v604 = vsel %vm592, %v602, %v603
  %v605 = vrot.slane %v544, 3
  %v606 = vrot.slane %v545, 3
  %v607 = vsel %vm592, %v605, %v606
  %v608 = vrot.slane %v546, 3
  %v609 = vrot.slane %v547, 3
  %v610 = vsel %vm592, %v608, %v609
  %v611 = vrot.slane %v548, 3
  %v612 = vrot.slane %v549, 3
  %v613 = vsel %vm592, %v611, %v612
  %v614 = vrot.slane %v550, 3
  %v615 = vrot.slane %v551, 3
  %v616 = vsel %vm592, %v614, %v615
  %v617 = vrot.slane %v552, 3
  %v618 = vrot.slane %v553, 3
  %v619 = vsel %vm592, %v617, %v618
  %v620 = vrot.slane %v554, 3
  %v621 = vrot.slane %v555, 3
  %v622 = vsel %vm592, %v620, %v621
  %v623 = vrot.slane %v556, 3
  %v624 = vrot.slane %v557, 3
  %v625 = vsel %vm592, %v623, %v624
  %v626 = vrot.slane %v558, 3
  %v627 = vrot.slane %v559, 3
  %v628 = vsel %vm592, %v626, %v627
  %v629 = vrot.slane %v560, 3
  %v630 = vrot.slane %v561, 3
  %v631 = vsel %vm592, %v629, %v630
  %v632 = vrot.slane %v562, 3
  %v633 = vrot.slane %v563, 3
  %v634 = vsel %vm592, %v632, %v633
  %v649 = vadd.f32 %v521, %v595
  %v650 = vadd.f32 %v522, %v598
  %v651 = vadd.f32 %v523, %v601
  %v652 = vadd.f32 %v524, %v604
  %v653 = vadd.f32 %v525, %v607
  %v654 = vadd.f32 %v526, %v610
  %v655 = vadd.f32 %v527, %v613
  %v656 = vadd.f32 %v528, %v616
  %v657 = vadd.f32 %v529, %v619
  %v658 = vadd.f32 %v530, %v622
  %v659 = vadd.f32 %v531, %v625
  %v660 = vadd.f32 %v532, %v628
  %v661 = vadd.f32 %v533, %v631
  %v662 = vadd.f32 %v534, %v634
  %v663 = vperm.slane %v275, 4
  %v664 = vmul.f32 %v279, %v663
  %v665 = vmul.f32 %v280, %v663
  %v666 = vmul.f32 %v281, %v663
  %v667 = vmul.f32 %v282, %v663
  %v668 = vmul.f32 %v283, %v663
  %v669 = vmul.f32 %v284, %v663
  %v670 = vmul.f32 %v285, %v663
  %v671 = vmul.f32 %v286, %v663
  %v672 = vmul.f32 %v287, %v663
  %v673 = vmul.f32 %v288, %v663
  %v674 = vmul.f32 %v289, %v663
  %v675 = vmul.f32 %v290, %v663
  %v676 = vmul.f32 %v291, %v663
  %v677 = vmul.f32 %v292, %v663
  %v678 = vmul.f32 %v293, %v663
  %v679 = vmul.f32 %v294, %v663
  %v680 = vmul.f32 %v295, %v663
  %v681 = vmul.f32 %v296, %v663
  %v682 = vmul.f32 %v297, %v663
  %v683 = vmul.f32 %v298, %v663
  %v684 = vmul.f32 %v299, %v663
  %v685 = vmul.f32 %v300, %v663
  %v686 = vmul.f32 %v301, %v663
  %v687 = vmul.f32 %v302, %v663
  %v688 = vmul.f32 %v303, %v663
  %v689 = vmul.f32 %v304, %v663
  %v690 = vmul.f32 %v305, %v663
  %v691 = vmul.f32 %v306, %v663
  %vm720 = vcmask 1043456
  %v721 = vrot.slane %v664, 4
  %v722 = vrot.slane %v665, 4
  %v723 = vsel %vm720, %v721, %v722
  %v724 = vrot.slane %v666, 4
  %v725 = vrot.slane %v667, 4
  %v726 = vsel %vm720, %v724, %v725
  %v727 = vrot.slane %v668, 4
  %v728 = vrot.slane %v669, 4
  %v729 = vsel %vm720, %v727, %v728
  %v730 = vrot.slane %v670, 4
  %v731 = vrot.slane %v671, 4
  %v732 = vsel %vm720, %v730, %v731
  %v733 = vrot.slane %v672, 4
  %v734 = vrot.slane %v673, 4
  %v735 = vsel %vm720, %v733, %v734
  %v736 = vrot.slane %v674, 4
  %v737 = vrot.slane %v675, 4
  %v738 = vsel %vm720, %v736, %v737
  %v739 = vrot.slane %v676, 4
  %v740 = vrot.slane %v677, 4
  %v741 = vsel %vm720, %v739, %v740
  %v742 = vrot.slane %v678, 4
  %v743 = vrot.slane %v679, 4
  %v744 = vsel %vm720, %v742, %v743
  %v745 = vrot.slane %v680, 4
  %v746 = vrot.slane %v681, 4
  %v747 = vsel %vm720, %v745, %v746
  %v748 = vrot.slane %v682, 4
  %v749 = vrot.slane %v683, 4
  %v750 = vsel %vm720, %v748, %v749
  %v751 = vrot.slane %v684, 4
  %v752 = vrot.slane %v685, 4
  %v753 = vsel %vm720, %v751, %v752
  %v754 = vrot.slane %v686, 4
  %v755 = vrot.slane %v687, 4
  %v756 = vsel %vm720, %v754, %v755
  %v757 = vrot.slane %v688, 4
  %v758 = vrot.slane %v689, 4
  %v759 = vsel %vm720, %v757, %v758
  %v760 = vrot.slane %v690, 4
  %v761 = vrot.slane %v691, 4
  %v762 = vsel %vm720, %v760, %v761
  %v777 = vadd.f32 %v649, %v723
  %v778 = vadd.f32 %v650, %v726
  %v779 = vadd.f32 %v651, %v729
  %v780 = vadd.f32 %v652, %v732
  %v781 = vadd.f32 %v653, %v735
  %v782 = vadd.f32 %v654, %v738
  %v783 = vadd.f32 %v655, %v741
  %v784 = vadd.f32 %v656, %v744
  %v785 = vadd.f32 %v657, %v747
  %v786 = vadd.f32 %v658, %v750
  %v787 = vadd.f32 %v659, %v753
  %v788 = vadd.f32 %v660, %v756
  %v789 = vadd.f32 %v661, %v759
  %v790 = vadd.f32 %v662, %v762
  %s791 = scalar_lea.vmem [#allocation2], 32
  %v792 = vld [vmem:[%s791] sm:$0xff]
  %v793 = vld [vmem:[%s791 + $0x10] sm:$0x7]
  %v794 = vld [vmem:[%s791 + $0x20] sm:$0xff]
  %v795 = vld [vmem:[%s791 + $0x30] sm:$0x7]
  %v796 = vld [vmem:[%s791 + $0x40] sm:$0xff]
  %v797 = vld [vmem:[%s791 + $0x50] sm:$0x7]
  %v798 = vld [vmem:[%s791 + $0x60] sm:$0xff]
  %v799 = vld [vmem:[%s791 + $0x70] sm:$0x7]
  %v800 = vld [vmem:[%s791 + $0x80] sm:$0xff]
  %v801 = vld [vmem:[%s791 + $0x90] sm:$0x7]
  %v802 = vld [vmem:[%s791 + $0xa0] sm:$0xff]
  %v803 = vld [vmem:[%s791 + $0xb0] sm:$0x7]
  %v804 = vld [vmem:[%s791 + $0xc0] sm:$0xff]
  %v805 = vld [vmem:[%s791 + $0xd0] sm:$0x7]
  %v806 = vld [vmem:[%s791 + $0x160] sm:$0xff]
  %v807 = vld [vmem:[%s791 + $0x170] sm:$0x7]
  %v808 = vld [vmem:[%s791 + $0x180] sm:$0xff]
  %v809 = vld [vmem:[%s791 + $0x190] sm:$0x7]
  %v810 = vld [vmem:[%s791 + $0x1a0] sm:$0xff]
  %v811 = vld [vmem:[%s791 + $0x1b0] sm:$0x7]
  %v812 = vld [vmem:[%s791 + $0x1c0] sm:$0xff]
  %v813 = vld [vmem:[%s791 + $0x1d0] sm:$0x7]
  %v814 = vld [vmem:[%s791 + $0x1e0] sm:$0xff]
  %v815 = vld [vmem:[%s791 + $0x1f0] sm:$0x7]
  %v816 = vld [vmem:[%s791 + $0x200] sm:$0xff]
  %v817 = vld [vmem:[%s791 + $0x210] sm:$0x7]
  %v818 = vld [vmem:[%s791 + $0x220] sm:$0xff]
  %v819 = vld [vmem:[%s791 + $0x230] sm:$0x7]
  %v820 = vperm.slane %v275, 5
  %v821 = vmul.f32 %v792, %v820
  %v822 = vmul.f32 %v794, %v820
  %v823 = vmul.f32 %v796, %v820
  %v824 = vmul.f32 %v798, %v820
  %v825 = vmul.f32 %v800, %v820
  %v826 = vmul.f32 %v802, %v820
  %v827 = vmul.f32 %v804, %v820
  %v828 = vmul.f32 %v806, %v820
  %v829 = vmul.f32 %v808, %v820
  %v830 = vmul.f32 %v810, %v820
  %v831 = vmul.f32 %v812, %v820
  %v832 = vmul.f32 %v814, %v820
  %v833 = vmul.f32 %v816, %v820
  %v834 = vmul.f32 %v818, %v820
  %v835 = vadd.f32 %v777, %v821
  %v836 = vadd.f32 %v778, %v822
  %v837 = vadd.f32 %v779, %v823
  %v838 = vadd.f32 %v780, %v824
  %v839 = vadd.f32 %v781, %v825
  %v840 = vadd.f32 %v782, %v826
  %v841 = vadd.f32 %v783, %v827
  %v842 = vadd.f32 %v784, %v828
  %v843 = vadd.f32 %v785, %v829
  %v844 = vadd.f32 %v786, %v830
  %v845 = vadd.f32 %v787, %v831
  %v846 = vadd.f32 %v788, %v832
  %v847 = vadd.f32 %v789, %v833
  %v848 = vadd.f32 %v790, %v834
  %v849 = vperm.slane %v275, 6
  %v850 = vmul.f32 %v792, %v849
  %v851 = vmul.f32 %v794, %v849
  %v852 = vmul.f32 %v796, %v849
  %v853 = vmul.f32 %v798, %v849
  %v854 = vmul.f32 %v800, %v849
  %v855 = vmul.f32 %v802, %v849
  %v856 = vmul.f32 %v804, %v849
  %v857 = vmul.f32 %v806, %v849
  %v858 = vmul.f32 %v808, %v849
  %v859 = vmul.f32 %v810, %v849
  %v860 = vmul.f32 %v812, %v849
  %v861 = vmul.f32 %v814, %v849
  %v862 = vmul.f32 %v816, %v849
  %v863 = vmul.f32 %v818, %v849
  %v878 = vrot.slane %v850, 1
  %v879 = vrot.slane %v851, 1
  %v880 = vrot.slane %v852, 1
  %v881 = vrot.slane %v853, 1
  %v882 = vrot.slane %v854, 1
  %v883 = vrot.slane %v855, 1
  %v884 = vrot.slane %v856, 1
  %v885 = vrot.slane %v857, 1
  %v886 = vrot.slane %v858, 1
  %v887 = vrot.slane %v859, 1
  %v888 = vrot.slane %v860, 1
  %v889 = vrot.slane %v861, 1
  %v890 = vrot.slane %v862, 1
  %v891 = vrot.slane %v863, 1
  %v906 = vadd.f32 %v835, %v878
  %v907 = vadd.f32 %v836, %v879
  %v908 = vadd.f32 %v837, %v880
  %v909 = vadd.f32 %v838, %v881
  %v910 = vadd.f32 %v839, %v882
  %v911 = vadd.f32 %v840, %v883
  %v912 = vadd.f32 %v841, %v884
  %v913 = vadd.f32 %v842, %v885
  %v914 = vadd.f32 %v843, %v886
  %v915 = vadd.f32 %v844, %v887
  %v916 = vadd.f32 %v845, %v888
  %v917 = vadd.f32 %v846, %v889
  %v918 = vadd.f32 %v847, %v890
  %v919 = vadd.f32 %v848, %v891
  %v920 = vperm.slane %v275, 7
  %v921 = vmul.f32 %v792, %v920
  %v922 = vmul.f32 %v793, %v920
  %v923 = vmul.f32 %v794, %v920
  %v924 = vmul.f32 %v795, %v920
  %v925 = vmul.f32 %v796, %v920
  %v926 = vmul.f32 %v797, %v920
  %v927 = vmul.f32 %v798, %v920
  %v928 = vmul.f32 %v799, %v920
  %v929 = vmul.f32 %v800, %v920
  %v930 = vmul.f32 %v801, %v920
  %v931 = vmul.f32 %v802, %v920
  %v932 = vmul.f32 %v803, %v920
  %v933 = vmul.f32 %v804, %v920
  %v934 = vmul.f32 %v805, %v920
  %v935 = vmul.f32 %v806, %v920
  %v936 = vmul.f32 %v807, %v920
  %v937 = vmul.f32 %v808, %v920
  %v938 = vmul.f32 %v809, %v920
  %v939 = vmul.f32 %v810, %v920
  %v940 = vmul.f32 %v811, %v920
  %v941 = vmul.f32 %v812, %v920
  %v942 = vmul.f32 %v813, %v920
  %v943 = vmul.f32 %v814, %v920
  %v944 = vmul.f32 %v815, %v920
  %v945 = vmul.f32 %v816, %v920
  %v946 = vmul.f32 %v817, %v920
  %v947 = vmul.f32 %v818, %v920
  %v948 = vmul.f32 %v819, %v920
  %v977 = vrot.slane %v921, 2
  %v978 = vrot.slane %v922, 2
  %v979 = vsel %vm464, %v977, %v978
  %v980 = vrot.slane %v923, 2
  %v981 = vrot.slane %v924, 2
  %v982 = vsel %vm464, %v980, %v981
  %v983 = vrot.slane %v925, 2
  %v984 = vrot.slane %v926, 2
  %v985 = vsel %vm464, %v983, %v984
  %v986 = vrot.slane %v927, 2
  %v987 = vrot.slane %v928, 2
  %v988 = vsel %vm464, %v986, %v987
  %v989 = vrot.slane %v929, 2
  %v990 = vrot.slane %v930, 2
  %v991 = vsel %vm464, %v989, %v990
  %v992 = vrot.slane %v931, 2
  %v993 = vrot.slane %v932, 2
  %v994 = vsel %vm464, %v992, %v993
  %v995 = vrot.slane %v933, 2
  %v996 = vrot.slane %v934, 2
  %v997 = vsel %vm464, %v995, %v996
  %v998 = vrot.slane %v935, 2
  %v999 = vrot.slane %v936, 2
  %v1000 = vsel %vm464, %v998, %v999
  %v1001 = vrot.slane %v937, 2
  %v1002 = vrot.slane %v938, 2
  %v1003 = vsel %vm464, %v1001, %v1002
  %v1004 = vrot.slane %v939, 2
  %v1005 = vrot.slane %v940, 2
  %v1006 = vsel %vm464, %v1004, %v1005
  %v1007 = vrot.slane %v941, 2
  %v1008 = vrot.slane %v942, 2
  %v1009 = vsel %vm464, %v1007, %v1008
  %v1010 = vrot.slane %v943, 2
  %v1011 = vrot.slane %v944, 2
  %v1012 = vsel %vm464, %v1010, %v1011
  %v1013 = vrot.slane %v945, 2
  %v1014 = vrot.slane %v946, 2
  %v1015 = vsel %vm464, %v1013, %v1014
  %v1016 = vrot.slane %v947, 2
  %v1017 = vrot.slane %v948, 2
  %v1018 = vsel %vm464, %v1016, %v1017
  %v1033 = vadd.f32 %v906, %v979
  %v1034 = vadd.f32 %v907, %v982
  %v1035 = vadd.f32 %v908, %v985
  %v1036 = vadd.f32 %v909, %v988
  %v1037 = vadd.f32 %v910, %v991
  %v1038 = vadd.f32 %v911, %v994
  %v1039 = vadd.f32 %v912, %v997
  %v1040 = vadd.f32 %v913, %v1000
  %v1041 = vadd.f32 %v914, %v1003
  %v1042 = vadd.f32 %v915, %v1006
  %v1043 = vadd.f32 %v916, %v1009
  %v1044 = vadd.f32 %v917, %v1012
  %v1045 = vadd.f32 %v918, %v1015
  %v1046 = vadd.f32 %v919, %v1018
  %v1047 = vperm.slane %v276, 0
  %v1048 = vmul.f32 %v792, %v1047
  %v1049 = vmul.f32 %v793, %v1047
  %v1050 = vmul.f32 %v794, %v1047
  %v1051 = vmul.f32 %v795, %v1047
  %v1052 = vmul.f32 %v796, %v1047
  %v1053 = vmul.f32 %v797, %v1047
  %v1054 = vmul.f32 %v798, %v1047
  %v1055 = vmul.f32 %v799, %v1047
  %v1056 = vmul.f32 %v800, %v1047
  %v1057 = vmul.f32 %v801, %v1047
  %v1058 = vmul.f32 %v802, %v1047
  %v1059 = vmul.f32 %v803, %v1047
  %v1060 = vmul.f32 %v804, %v1047
  %v1061 = vmul.f32 %v805, %v1047
  %v1062 = vmul.f32 %v806, %v1047
  %v1063 = vmul.f32 %v807, %v1047
  %v1064 = vmul.f32 %v808, %v1047
  %v1065 = vmul.f32 %v809, %v1047
  %v1066 = vmul.f32 %v810, %v1047
  %v1067 = vmul.f32 %v811, %v1047
  %v1068 = vmul.f32 %v812, %v1047
  %v1069 = vmul.f32 %v813, %v1047
  %v1070 = vmul.f32 %v814, %v1047
  %v1071 = vmul.f32 %v815, %v1047
  %v1072 = vmul.f32 %v816, %v1047
  %v1073 = vmul.f32 %v817, %v1047
  %v1074 = vmul.f32 %v818, %v1047
  %v1075 = vmul.f32 %v819, %v1047
  %v1104 = vrot.slane %v1048, 3
  %v1105 = vrot.slane %v1049, 3
  %v1106 = vsel %vm592, %v1104, %v1105
  %v1107 = vrot.slane %v1050, 3
  %v1108 = vrot.slane %v1051, 3
  %v1109 = vsel %vm592, %v1107, %v1108
  %v1110 = vrot.slane %v1052, 3
  %v1111 = vrot.slane %v1053, 3
  %v1112 = vsel %vm592, %v1110, %v1111
  %v1113 = vrot.slane %v1054, 3
  %v1114 = vrot.slane %v1055, 3
  %v1115 = vsel %vm592, %v1113, %v1114
  %v1116 = vrot.slane %v1056, 3
  %v1117 = vrot.slane %v1057, 3
  %v1118 = vsel %vm592, %v1116, %v1117
  %v1119 = vrot.slane %v1058, 3
  %v1120 = vrot.slane %v1059, 3
  %v1121 = vsel %vm592, %v1119, %v1120
  %v1122 = vrot.slane %v1060, 3
  %v1123 = vrot.slane %v1061, 3
  %v1124 = vsel %vm592, %v1122, %v1123
  %v1125 = vrot.slane %v1062, 3
  %v1126 = vrot.slane %v1063, 3
  %v1127 = vsel %vm592, %v1125, %v1126
  %v1128 = vrot.slane %v1064, 3
  %v1129 = vrot.slane %v1065, 3
  %v1130 = vsel %vm592, %v1128, %v1129
  %v1131 = vrot.slane %v1066, 3
  %v1132 = vrot.slane %v1067, 3
  %v1133 = vsel %vm592, %v1131, %v1132
  %v1134 = vrot.slane %v1068, 3
  %v1135 = vrot.slane %v1069, 3
  %v1136 = vsel %vm592, %v1134, %v1135
  %v1137 = vrot.slane %v1070, 3
  %v1138 = vrot.slane %v1071, 3
  %v1139 = vsel %vm592, %v1137, %v1138
  %v1140 = vrot.slane %v1072, 3
  %v1141 = vrot.slane %v1073, 3
  %v1142 = vsel %vm592, %v1140, %v1141
  %v1143 = vrot.slane %v1074, 3
  %v1144 = vrot.slane %v1075, 3
  %v1145 = vsel %vm592, %v1143, %v1144
  %v1160 = vadd.f32 %v1033, %v1106
  %v1161 = vadd.f32 %v1034, %v1109
  %v1162 = vadd.f32 %v1035, %v1112
  %v1163 = vadd.f32 %v1036, %v1115
  %v1164 = vadd.f32 %v1037, %v1118
  %v1165 = vadd.f32 %v1038, %v1121
  %v1166 = vadd.f32 %v1039, %v1124
  %v1167 = vadd.f32 %v1040, %v1127
  %v1168 = vadd.f32 %v1041, %v1130
  %v1169 = vadd.f32 %v1042, %v1133
  %v1170 = vadd.f32 %v1043, %v1136
  %v1171 = vadd.f32 %v1044, %v1139
  %v1172 = vadd.f32 %v1045, %v1142
  %v1173 = vadd.f32 %v1046, %v1145
  %v1174 = vperm.slane %v276, 1
  %v1175 = vmul.f32 %v792, %v1174
  %v1176 = vmul.f32 %v793, %v1174
  %v1177 = vmul.f32 %v794, %v1174
  %v1178 = vmul.f32 %v795, %v1174
  %v1179 = vmul.f32 %v796, %v1174
  %v1180 = vmul.f32 %v797, %v1174
  %v1181 = vmul.f32 %v798, %v1174
  %v1182 = vmul.f32 %v799, %v1174
  %v1183 = vmul.f32 %v800, %v1174
  %v1184 = vmul.f32 %v801, %v1174
  %v1185 = vmul.f32 %v802, %v1174
  %v1186 = vmul.f32 %v803, %v1174
  %v1187 = vmul.f32 %v804, %v1174
  %v1188 = vmul.f32 %v805, %v1174
  %v1189 = vmul.f32 %v806, %v1174
  %v1190 = vmul.f32 %v807, %v1174
  %v1191 = vmul.f32 %v808, %v1174
  %v1192 = vmul.f32 %v809, %v1174
  %v1193 = vmul.f32 %v810, %v1174
  %v1194 = vmul.f32 %v811, %v1174
  %v1195 = vmul.f32 %v812, %v1174
  %v1196 = vmul.f32 %v813, %v1174
  %v1197 = vmul.f32 %v814, %v1174
  %v1198 = vmul.f32 %v815, %v1174
  %v1199 = vmul.f32 %v816, %v1174
  %v1200 = vmul.f32 %v817, %v1174
  %v1201 = vmul.f32 %v818, %v1174
  %v1202 = vmul.f32 %v819, %v1174
  %v1231 = vrot.slane %v1175, 4
  %v1232 = vrot.slane %v1176, 4
  %v1233 = vsel %vm720, %v1231, %v1232
  %v1234 = vrot.slane %v1177, 4
  %v1235 = vrot.slane %v1178, 4
  %v1236 = vsel %vm720, %v1234, %v1235
  %v1237 = vrot.slane %v1179, 4
  %v1238 = vrot.slane %v1180, 4
  %v1239 = vsel %vm720, %v1237, %v1238
  %v1240 = vrot.slane %v1181, 4
  %v1241 = vrot.slane %v1182, 4
  %v1242 = vsel %vm720, %v1240, %v1241
  %v1243 = vrot.slane %v1183, 4
  %v1244 = vrot.slane %v1184, 4
  %v1245 = vsel %vm720, %v1243, %v1244
  %v1246 = vrot.slane %v1185, 4
  %v1247 = vrot.slane %v1186, 4
  %v1248 = vsel %vm720, %v1246, %v1247
  %v1249 = vrot.slane %v1187, 4
  %v1250 = vrot.slane %v1188, 4
  %v1251 = vsel %vm720, %v1249, %v1250
  %v1252 = vrot.slane %v1189, 4
  %v1253 = vrot.slane %v1190, 4
  %v1254 = vsel %vm720, %v1252, %v1253
  %v1255 = vrot.slane %v1191, 4
  %v1256 = vrot.slane %v1192, 4
  %v1257 = vsel %vm720, %v1255, %v1256
  %v1258 = vrot.slane %v1193, 4
  %v1259 = vrot.slane %v1194, 4
  %v1260 = vsel %vm720, %v1258, %v1259
  %v1261 = vrot.slane %v1195, 4
  %v1262 = vrot.slane %v1196, 4
  %v1263 = vsel %vm720, %v1261, %v1262
  %v1264 = vrot.slane %v1197, 4
  %v1265 = vrot.slane %v1198, 4
  %v1266 = vsel %vm720, %v1264, %v1265
  %v1267 = vrot.slane %v1199, 4
  %v1268 = vrot.slane %v1200, 4
  %v1269 = vsel %vm720, %v1267, %v1268
  %v1270 = vrot.slane %v1201, 4
  %v1271 = vrot.slane %v1202, 4
  %v1272 = vsel %vm720, %v1270, %v1271
  %v1287 = vadd.f32 %v1160, %v1233
  %v1288 = vadd.f32 %v1161, %v1236
  %v1289 = vadd.f32 %v1162, %v1239
  %v1290 = vadd.f32 %v1163, %v1242
  %v1291 = vadd.f32 %v1164, %v1245
  %v1292 = vadd.f32 %v1165, %v1248
  %v1293 = vadd.f32 %v1166, %v1251
  %v1294 = vadd.f32 %v1167, %v1254
  %v1295 = vadd.f32 %v1168, %v1257
  %v1296 = vadd.f32 %v1169, %v1260
  %v1297 = vadd.f32 %v1170, %v1263
  %v1298 = vadd.f32 %v1171, %v1266
  %v1299 = vadd.f32 %v1172, %v1269
  %v1300 = vadd.f32 %v1173, %v1272
  %v1301 = vld [vmem:[%s50] sm:$0xff]
  %v1302 = vld [vmem:[%s50 + $0x10] sm:$0x7]
  %v1303 = vld [vmem:[%s50 + $0x20] sm:$0xff]
  %v1304 = vld [vmem:[%s50 + $0x30] sm:$0x7]
  %v1305 = vld [vmem:[%s50 + $0x40] sm:$0xff]
  %v1306 = vld [vmem:[%s50 + $0x50] sm:$0x7]
  %v1307 = vld [vmem:[%s50 + $0x60] sm:$0xff]
  %v1308 = vld [vmem:[%s50 + $0x70] sm:$0x7]
  %v1309 = vld [vmem:[%s50 + $0x80] sm:$0xff]
  %v1310 = vld [vmem:[%s50 + $0x90] sm:$0x7]
  %v1311 = vld [vmem:[%s50 + $0xa0] sm:$0xff]
  %v1312 = vld [vmem:[%s50 + $0xb0] sm:$0x7]
  %v1313 = vld [vmem:[%s50 + $0xc0] sm:$0xff]
  %v1314 = vld [vmem:[%s50 + $0xd0] sm:$0x7]
  %v1315 = vld [vmem:[%s50 + $0x160] sm:$0xff]
  %v1316 = vld [vmem:[%s50 + $0x170] sm:$0x7]
  %v1317 = vld [vmem:[%s50 + $0x180] sm:$0xff]
  %v1318 = vld [vmem:[%s50 + $0x190] sm:$0x7]
  %v1319 = vld [vmem:[%s50 + $0x1a0] sm:$0xff]
  %v1320 = vld [vmem:[%s50 + $0x1b0] sm:$0x7]
  %v1321 = vld [vmem:[%s50 + $0x1c0] sm:$0xff]
  %v1322 = vld [vmem:[%s50 + $0x1d0] sm:$0x7]
  %v1323 = vld [vmem:[%s50 + $0x1e0] sm:$0xff]
  %v1324 = vld [vmem:[%s50 + $0x1f0] sm:$0x7]
  %v1325 = vld [vmem:[%s50 + $0x200] sm:$0xff]
  %v1326 = vld [vmem:[%s50 + $0x210] sm:$0x7]
  %v1327 = vld [vmem:[%s50 + $0x220] sm:$0xff]
  %v1328 = vld [vmem:[%s50 + $0x230] sm:$0x7]
  %v1329 = vperm.slane %v276, 2
  %v1330 = vmul.f32 %v1301, %v1329
  %v1331 = vmul.f32 %v1303, %v1329
  %v1332 = vmul.f32 %v1305, %v1329
  %v1333 = vmul.f32 %v1307, %v1329
  %v1334 = vmul.f32 %v1309, %v1329
  %v1335 = vmul.f32 %v1311, %v1329
  %v1336 = vmul.f32 %v1313, %v1329
  %v1337 = vmul.f32 %v1315, %v1329
  %v1338 = vmul.f32 %v1317, %v1329
  %v1339 = vmul.f32 %v1319, %v1329
  %v1340 = vmul.f32 %v1321, %v1329
  %v1341 = vmul.f32 %v1323, %v1329
  %v1342 = vmul.f32 %v1325, %v1329
  %v1343 = vmul.f32 %v1327, %v1329
  %v1344 = vadd.f32 %v1287, %v1330
  %v1345 = vadd.f32 %v1288, %v1331
  %v1346 = vadd.f32 %v1289, %v1332
  %v1347 = vadd.f32 %v1290, %v1333
  %v1348 = vadd.f32 %v1291, %v1334
  %v1349 = vadd.f32 %v1292, %v1335
  %v1350 = vadd.f32 %v1293, %v1336
  %v1351 = vadd.f32 %v1294, %v1337
  %v1352 = vadd.f32 %v1295, %v1338
  %v1353 = vadd.f32 %v1296, %v1339
  %v1354 = vadd.f32 %v1297, %v1340
  %v1355 = vadd.f32 %v1298, %v1341
  %v1356 = vadd.f32 %v1299, %v1342
  %v1357 = vadd.f32 %v1300, %v1343
  %v1358 = vperm.slane %v276, 3
  %v1359 = vmul.f32 %v1301, %v1358
  %v1360 = vmul.f32 %v1303, %v1358
  %v1361 = vmul.f32 %v1305, %v1358
  %v1362 = vmul.f32 %v1307, %v1358
  %v1363 = vmul.f32 %v1309, %v1358
  %v1364 = vmul.f32 %v1311, %v1358
  %v1365 = vmul.f32 %v1313, %v1358
  %v1366 = vmul.f32 %v1315, %v1358
  %v1367 = vmul.f32 %v1317, %v1358
  %v1368 = vmul.f32 %v1319, %v1358
  %v1369 = vmul.f32 %v1321, %v1358
  %v1370 = vmul.f32 %v1323, %v1358
  %v1371 = vmul.f32 %v1325, %v1358
  %v1372 = vmul.f32 %v1327, %v1358
  %v1387 = vrot.slane %v1359, 1
  %v1388 = vrot.slane %v1360, 1
  %v1389 = vrot.slane %v1361, 1
  %v1390 = vrot.slane %v1362, 1
  %v1391 = vrot.slane %v1363, 1
  %v1392 = vrot.slane %v1364, 1
  %v1393 = vrot.slane %v1365, 1
  %v1394 = vrot.slane %v1366, 1
  %v1395 = vrot.slane %v1367, 1
  %v1396 = vrot.slane %v1368, 1
  %v1397 = vrot.slane %v1369, 1
  %v1398 = vrot.slane %v1370, 1
  %v1399 = vrot.slane %v1371, 1
  %v1400 = vrot.slane %v1372, 1
  %v1415 = vadd.f32 %v1344, %v1387
  %v1416 = vadd.f32 %v1345, %v1388
  %v1417 = vadd.f32 %v1346, %v1389
  %v1418 = vadd.f32 %v1347, %v1390
  %v1419 = vadd.f32 %v1348, %v1391
  %v1420 = vadd.f32 %v1349, %v1392
  %v1421 = vadd.f32 %v1350, %v1393
  %v1422 = vadd.f32 %v1351, %v1394
  %v1423 = vadd.f32 %v1352, %v1395
  %v1424 = vadd.f32 %v1353, %v1396
  %v1425 = vadd.f32 %v1354, %v1397
  %v1426 = vadd.f32 %v1355, %v1398
  %v1427 = vadd.f32 %v1356, %v1399
  %v1428 = vadd.f32 %v1357, %v1400
  %v1429 = vperm.slane %v276, 4
  %v1430 = vmul.f32 %v1301, %v1429
  %v1431 = vmul.f32 %v1302, %v1429
  %v1432 = vmul.f32 %v1303, %v1429
  %v1433 = vmul.f32 %v1304, %v1429
  %v1434 = vmul.f32 %v1305, %v1429
  %v1435 = vmul.f32 %v1306, %v1429
  %v1436 = vmul.f32 %v1307, %v1429
  %v1437 = vmul.f32 %v1308, %v1429
  %v1438 = vmul.f32 %v1309, %v1429
  %v1439 = vmul.f32 %v1310, %v1429
  %v1440 = vmul.f32 %v1311, %v1429
  %v1441 = vmul.f32 %v1312, %v1429
  %v1442 = vmul.f32 %v1313, %v1429
  %v1443 = vmul.f32 %v1314, %v1429
  %v1444 = vmul.f32 %v1315, %v1429
  %v1445 = vmul.f32 %v1316, %v1429
  %v1446 = vmul.f32 %v1317, %v1429
  %v1447 = vmul.f32 %v1318, %v1429
  %v1448 = vmul.f32 %v1319, %v1429
  %v1449 = vmul.f32 %v1320, %v1429
  %v1450 = vmul.f32 %v1321, %v1429
  %v1451 = vmul.f32 %v1322, %v1429
  %v1452 = vmul.f32 %v1323, %v1429
  %v1453 = vmul.f32 %v1324, %v1429
  %v1454 = vmul.f32 %v1325, %v1429
  %v1455 = vmul.f32 %v1326, %v1429
  %v1456 = vmul.f32 %v1327, %v1429
  %v1457 = vmul.f32 %v1328, %v1429
  %v1486 = vrot.slane %v1430, 2
  %v1487 = vrot.slane %v1431, 2
  %v1488 = vsel %vm464, %v1486, %v1487
  %v1489 = vrot.slane %v1432, 2
  %v1490 = vrot.slane %v1433, 2
  %v1491 = vsel %vm464, %v1489, %v1490
  %v1492 = vrot.slane %v1434, 2
  %v1493 = vrot.slane %v1435, 2
  %v1494 = vsel %vm464, %v1492, %v1493
  %v1495 = vrot.slane %v1436, 2
  %v1496 = vrot.slane %v1437, 2
  %v1497 = vsel %vm464, %v1495, %v1496
  %v1498 = vrot.slane %v1438, 2
  %v1499 = vrot.slane %v1439, 2
  %v1500 = vsel %vm464, %v1498, %v1499
  %v1501 = vrot.slane %v1440, 2
  %v1502 = vrot.slane %v1441, 2
  %v1503 = vsel %vm464, %v1501, %v1502
  %v1504 = vrot.slane %v1442, 2
  %v1505 = vrot.slane %v1443, 2
  %v1506 = vsel %vm464, %v1504, %v1505
  %v1507 = vrot.slane %v1444, 2
  %v1508 = vrot.slane %v1445, 2
  %v1509 = vsel %vm464, %v1507, %v1508
  %v1510 = vrot.slane %v1446, 2
  %v1511 = vrot.slane %v1447, 2
  %v1512 = vsel %vm464, %v1510, %v1511
  %v1513 = vrot.slane %v1448, 2
  %v1514 = vrot.slane %v1449, 2
  %v1515 = vsel %vm464, %v1513, %v1514
  %v1516 = vrot.slane %v1450, 2
  %v1517 = vrot.slane %v1451, 2
  %v1518 = vsel %vm464, %v1516, %v1517
  %v1519 = vrot.slane %v1452, 2
  %v1520 = vrot.slane %v1453, 2
  %v1521 = vsel %vm464, %v1519, %v1520
  %v1522 = vrot.slane %v1454, 2
  %v1523 = vrot.slane %v1455, 2
  %v1524 = vsel %vm464, %v1522, %v1523
  %v1525 = vrot.slane %v1456, 2
  %v1526 = vrot.slane %v1457, 2
  %v1527 = vsel %vm464, %v1525, %v1526
  %v1542 = vadd.f32 %v1415, %v1488
  %v1543 = vadd.f32 %v1416, %v1491
  %v1544 = vadd.f32 %v1417, %v1494
  %v1545 = vadd.f32 %v1418, %v1497
  %v1546 = vadd.f32 %v1419, %v1500
  %v1547 = vadd.f32 %v1420, %v1503
  %v1548 = vadd.f32 %v1421, %v1506
  %v1549 = vadd.f32 %v1422, %v1509
  %v1550 = vadd.f32 %v1423, %v1512
  %v1551 = vadd.f32 %v1424, %v1515
  %v1552 = vadd.f32 %v1425, %v1518
  %v1553 = vadd.f32 %v1426, %v1521
  %v1554 = vadd.f32 %v1427, %v1524
  %v1555 = vadd.f32 %v1428, %v1527
  %v1556 = vperm.slane %v276, 5
  %v1557 = vmul.f32 %v1301, %v1556
  %v1558 = vmul.f32 %v1302, %v1556
  %v1559 = vmul.f32 %v1303, %v1556
  %v1560 = vmul.f32 %v1304, %v1556
  %v1561 = vmul.f32 %v1305, %v1556
  %v1562 = vmul.f32 %v1306, %v1556
  %v1563 = vmul.f32 %v1307, %v1556
  %v1564 = vmul.f32 %v1308, %v1556
  %v1565 = vmul.f32 %v1309, %v1556
  %v1566 = vmul.f32 %v1310, %v1556
  %v1567 = vmul.f32 %v1311, %v1556
  %v1568 = vmul.f32 %v1312, %v1556
  %v1569 = vmul.f32 %v1313, %v1556
  %v1570 = vmul.f32 %v1314, %v1556
  %v1571 = vmul.f32 %v1315, %v1556
  %v1572 = vmul.f32 %v1316, %v1556
  %v1573 = vmul.f32 %v1317, %v1556
  %v1574 = vmul.f32 %v1318, %v1556
  %v1575 = vmul.f32 %v1319, %v1556
  %v1576 = vmul.f32 %v1320, %v1556
  %v1577 = vmul.f32 %v1321, %v1556
  %v1578 = vmul.f32 %v1322, %v1556
  %v1579 = vmul.f32 %v1323, %v1556
  %v1580 = vmul.f32 %v1324, %v1556
  %v1581 = vmul.f32 %v1325, %v1556
  %v1582 = vmul.f32 %v1326, %v1556
  %v1583 = vmul.f32 %v1327, %v1556
  %v1584 = vmul.f32 %v1328, %v1556
  %v1613 = vrot.slane %v1557, 3
  %v1614 = vrot.slane %v1558, 3
  %v1615 = vsel %vm592, %v1613, %v1614
  %v1616 = vrot.slane %v1559, 3
  %v1617 = vrot.slane %v1560, 3
  %v1618 = vsel %vm592, %v1616, %v1617
  %v1619 = vrot.slane %v1561, 3
  %v1620 = vrot.slane %v1562, 3
  %v1621 = vsel %vm592, %v1619, %v1620
  %v1622 = vrot.slane %v1563, 3
  %v1623 = vrot.slane %v1564, 3
  %v1624 = vsel %vm592, %v1622, %v1623
  %v1625 = vrot.slane %v1565, 3
  %v1626 = vrot.slane %v1566, 3
  %v1627 = vsel %vm592, %v1625, %v1626
  %v1628 = vrot.slane %v1567, 3
  %v1629 = vrot.slane %v1568, 3
  %v1630 = vsel %vm592, %v1628, %v1629
  %v1631 = vrot.slane %v1569, 3
  %v1632 = vrot.slane %v1570, 3
  %v1633 = vsel %vm592, %v1631, %v1632
  %v1634 = vrot.slane %v1571, 3
  %v1635 = vrot.slane %v1572, 3
  %v1636 = vsel %vm592, %v1634, %v1635
  %v1637 = vrot.slane %v1573, 3
  %v1638 = vrot.slane %v1574, 3
  %v1639 = vsel %vm592, %v1637, %v1638
  %v1640 = vrot.slane %v1575, 3
  %v1641 = vrot.slane %v1576, 3
  %v1642 = vsel %vm592, %v1640, %v1641
  %v1643 = vrot.slane %v1577, 3
  %v1644 = vrot.slane %v1578, 3
  %v1645 = vsel %vm592, %v1643, %v1644
  %v1646 = vrot.slane %v1579, 3
  %v1647 = vrot.slane %v1580, 3
  %v1648 = vsel %vm592, %v1646, %v1647
  %v1649 = vrot.slane %v1581, 3
  %v1650 = vrot.slane %v1582, 3
  %v1651 = vsel %vm592, %v1649, %v1650
  %v1652 = vrot.slane %v1583, 3
  %v1653 = vrot.slane %v1584, 3
  %v1654 = vsel %vm592, %v1652, %v1653
  %v1669 = vadd.f32 %v1542, %v1615
  %v1670 = vadd.f32 %v1543, %v1618
  %v1671 = vadd.f32 %v1544, %v1621
  %v1672 = vadd.f32 %v1545, %v1624
  %v1673 = vadd.f32 %v1546, %v1627
  %v1674 = vadd.f32 %v1547, %v1630
  %v1675 = vadd.f32 %v1548, %v1633
  %v1676 = vadd.f32 %v1549, %v1636
  %v1677 = vadd.f32 %v1550, %v1639
  %v1678 = vadd.f32 %v1551, %v1642
  %v1679 = vadd.f32 %v1552, %v1645
  %v1680 = vadd.f32 %v1553, %v1648
  %v1681 = vadd.f32 %v1554, %v1651
  %v1682 = vadd.f32 %v1555, %v1654
  %v1683 = vperm.slane %v276, 6
  %v1684 = vmul.f32 %v1301, %v1683
  %v1685 = vmul.f32 %v1302, %v1683
  %v1686 = vmul.f32 %v1303, %v1683
  %v1687 = vmul.f32 %v1304, %v1683
  %v1688 = vmul.f32 %v1305, %v1683
  %v1689 = vmul.f32 %v1306, %v1683
  %v1690 = vmul.f32 %v1307, %v1683
  %v1691 = vmul.f32 %v1308, %v1683
  %v1692 = vmul.f32 %v1309, %v1683
  %v1693 = vmul.f32 %v1310, %v1683
  %v1694 = vmul.f32 %v1311, %v1683
  %v1695 = vmul.f32 %v1312, %v1683
  %v1696 = vmul.f32 %v1313, %v1683
  %v1697 = vmul.f32 %v1314, %v1683
  %v1698 = vmul.f32 %v1315, %v1683
  %v1699 = vmul.f32 %v1316, %v1683
  %v1700 = vmul.f32 %v1317, %v1683
  %v1701 = vmul.f32 %v1318, %v1683
  %v1702 = vmul.f32 %v1319, %v1683
  %v1703 = vmul.f32 %v1320, %v1683
  %v1704 = vmul.f32 %v1321, %v1683
  %v1705 = vmul.f32 %v1322, %v1683
  %v1706 = vmul.f32 %v1323, %v1683
  %v1707 = vmul.f32 %v1324, %v1683
  %v1708 = vmul.f32 %v1325, %v1683
  %v1709 = vmul.f32 %v1326, %v1683
  %v1710 = vmul.f32 %v1327, %v1683
  %v1711 = vmul.f32 %v1328, %v1683
  %v1740 = vrot.slane %v1684, 4
  %v1741 = vrot.slane %v1685, 4
  %v1742 = vsel %vm720, %v1740, %v1741
  %v1743 = vrot.slane %v1686, 4
  %v1744 = vrot.slane %v1687, 4
  %v1745 = vsel %vm720, %v1743, %v1744
  %v1746 = vrot.slane %v1688, 4
  %v1747 = vrot.slane %v1689, 4
  %v1748 = vsel %vm720, %v1746, %v1747
  %v1749 = vrot.slane %v1690, 4
  %v1750 = vrot.slane %v1691, 4
  %v1751 = vsel %vm720, %v1749, %v1750
  %v1752 = vrot.slane %v1692, 4
  %v1753 = vrot.slane %v1693, 4
  %v1754 = vsel %vm720, %v1752, %v1753
  %v1755 = vrot.slane %v1694, 4
  %v1756 = vrot.slane %v1695, 4
  %v1757 = vsel %vm720, %v1755, %v1756
  %v1758 = vrot.slane %v1696, 4
  %v1759 = vrot.slane %v1697, 4
  %v1760 = vsel %vm720, %v1758, %v1759
  %v1761 = vrot.slane %v1698, 4
  %v1762 = vrot.slane %v1699, 4
  %v1763 = vsel %vm720, %v1761, %v1762
  %v1764 = vrot.slane %v1700, 4
  %v1765 = vrot.slane %v1701, 4
  %v1766 = vsel %vm720, %v1764, %v1765
  %v1767 = vrot.slane %v1702, 4
  %v1768 = vrot.slane %v1703, 4
  %v1769 = vsel %vm720, %v1767, %v1768
  %v1770 = vrot.slane %v1704, 4
  %v1771 = vrot.slane %v1705, 4
  %v1772 = vsel %vm720, %v1770, %v1771
  %v1773 = vrot.slane %v1706, 4
  %v1774 = vrot.slane %v1707, 4
  %v1775 = vsel %vm720, %v1773, %v1774
  %v1776 = vrot.slane %v1708, 4
  %v1777 = vrot.slane %v1709, 4
  %v1778 = vsel %vm720, %v1776, %v1777
  %v1779 = vrot.slane %v1710, 4
  %v1780 = vrot.slane %v1711, 4
  %v1781 = vsel %vm720, %v1779, %v1780
  %v1796 = vadd.f32 %v1669, %v1742
  %v1797 = vadd.f32 %v1670, %v1745
  %v1798 = vadd.f32 %v1671, %v1748
  %v1799 = vadd.f32 %v1672, %v1751
  %v1800 = vadd.f32 %v1673, %v1754
  %v1801 = vadd.f32 %v1674, %v1757
  %v1802 = vadd.f32 %v1675, %v1760
  %v1803 = vadd.f32 %v1676, %v1763
  %v1804 = vadd.f32 %v1677, %v1766
  %v1805 = vadd.f32 %v1678, %v1769
  %v1806 = vadd.f32 %v1679, %v1772
  %v1807 = vadd.f32 %v1680, %v1775
  %v1808 = vadd.f32 %v1681, %v1778
  %v1809 = vadd.f32 %v1682, %v1781
  %s1810 = scalar_lea.vmem [#allocation2], 96
  %v1811 = vld [vmem:[%s1810] sm:$0xff]
  %v1812 = vld [vmem:[%s1810 + $0x10] sm:$0x7]
  %v1813 = vld [vmem:[%s1810 + $0x20] sm:$0xff]
  %v1814 = vld [vmem:[%s1810 + $0x30] sm:$0x7]
  %v1815 = vld [vmem:[%s1810 + $0x40] sm:$0xff]
  %v1816 = vld [vmem:[%s1810 + $0x50] sm:$0x7]
  %v1817 = vld [vmem:[%s1810 + $0x60] sm:$0xff]
  %v1818 = vld [vmem:[%s1810 + $0x70] sm:$0x7]
  %v1819 = vld [vmem:[%s1810 + $0x80] sm:$0xff]
  %v1820 = vld [vmem:[%s1810 + $0x90] sm:$0x7]
  %v1821 = vld [vmem:[%s1810 + $0xa0] sm:$0xff]
  %v1822 = vld [vmem:[%s1810 + $0xb0] sm:$0x7]
  %v1823 = vld [vmem:[%s1810 + $0xc0] sm:$0xff]
  %v1824 = vld [vmem:[%s1810 + $0xd0] sm:$0x7]
  %v1825 = vld [vmem:[%s1810 + $0x160] sm:$0xff]
  %v1826 = vld [vmem:[%s1810 + $0x170] sm:$0x7]
  %v1827 = vld [vmem:[%s1810 + $0x180] sm:$0xff]
  %v1828 = vld [vmem:[%s1810 + $0x190] sm:$0x7]
  %v1829 = vld [vmem:[%s1810 + $0x1a0] sm:$0xff]
  %v1830 = vld [vmem:[%s1810 + $0x1b0] sm:$0x7]
  %v1831 = vld [vmem:[%s1810 + $0x1c0] sm:$0xff]
  %v1832 = vld [vmem:[%s1810 + $0x1d0] sm:$0x7]
  %v1833 = vld [vmem:[%s1810 + $0x1e0] sm:$0xff]
  %v1834 = vld [vmem:[%s1810 + $0x1f0] sm:$0x7]
  %v1835 = vld [vmem:[%s1810 + $0x200] sm:$0xff]
  %v1836 = vld [vmem:[%s1810 + $0x210] sm:$0x7]
  %v1837 = vld [vmem:[%s1810 + $0x220] sm:$0xff]
  %v1838 = vld [vmem:[%s1810 + $0x230] sm:$0x7]
  %v1839 = vperm.slane %v276, 7
  %v1840 = vmul.f32 %v1811, %v1839
  %v1841 = vmul.f32 %v1813, %v1839
  %v1842 = vmul.f32 %v1815, %v1839
  %v1843 = vmul.f32 %v1817, %v1839
  %v1844 = vmul.f32 %v1819, %v1839
  %v1845 = vmul.f32 %v1821, %v1839
  %v1846 = vmul.f32 %v1823, %v1839
  %v1847 = vmul.f32 %v1825, %v1839
  %v1848 = vmul.f32 %v1827, %v1839
  %v1849 = vmul.f32 %v1829, %v1839
  %v1850 = vmul.f32 %v1831, %v1839
  %v1851 = vmul.f32 %v1833, %v1839
  %v1852 = vmul.f32 %v1835, %v1839
  %v1853 = vmul.f32 %v1837, %v1839
  %v1854 = vadd.f32 %v1796, %v1840
  %v1855 = vadd.f32 %v1797, %v1841
  %v1856 = vadd.f32 %v1798, %v1842
  %v1857 = vadd.f32 %v1799, %v1843
  %v1858 = vadd.f32 %v1800, %v1844
  %v1859 = vadd.f32 %v1801, %v1845
  %v1860 = vadd.f32 %v1802, %v1846
  %v1861 = vadd.f32 %v1803, %v1847
  %v1862 = vadd.f32 %v1804, %v1848
  %v1863 = vadd.f32 %v1805, %v1849
  %v1864 = vadd.f32 %v1806, %v1850
  %v1865 = vadd.f32 %v1807, %v1851
  %v1866 = vadd.f32 %v1808, %v1852
  %v1867 = vadd.f32 %v1809, %v1853
  %v1868 = vperm.slane %v277, 0
  %v1869 = vmul.f32 %v1811, %v1868
  %v1870 = vmul.f32 %v1813, %v1868
  %v1871 = vmul.f32 %v1815, %v1868
  %v1872 = vmul.f32 %v1817, %v1868
  %v1873 = vmul.f32 %v1819, %v1868
  %v1874 = vmul.f32 %v1821, %v1868
  %v1875 = vmul.f32 %v1823, %v1868
  %v1876 = vmul.f32 %v1825, %v1868
  %v1877 = vmul.f32 %v1827, %v1868
  %v1878 = vmul.f32 %v1829, %v1868
  %v1879 = vmul.f32 %v1831, %v1868
  %v1880 = vmul.f32 %v1833, %v1868
  %v1881 = vmul.f32 %v1835, %v1868
  %v1882 = vmul.f32 %v1837, %v1868
  %v1897 = vrot.slane %v1869, 1
  %v1898 = vrot.slane %v1870, 1
  %v1899 = vrot.slane %v1871, 1
  %v1900 = vrot.slane %v1872, 1
  %v1901 = vrot.slane %v1873, 1
  %v1902 = vrot.slane %v1874, 1
  %v1903 = vrot.slane %v1875, 1
  %v1904 = vrot.slane %v1876, 1
  %v1905 = vrot.slane %v1877, 1
  %v1906 = vrot.slane %v1878, 1
  %v1907 = vrot.slane %v1879, 1
  %v1908 = vrot.slane %v1880, 1
  %v1909 = vrot.slane %v1881, 1
  %v1910 = vrot.slane %v1882, 1
  %v1925 = vadd.f32 %v1854, %v1897
  %v1926 = vadd.f32 %v1855, %v1898
  %v1927 = vadd.f32 %v1856, %v1899
  %v1928 = vadd.f32 %v1857, %v1900
  %v1929 = vadd.f32 %v1858, %v1901
  %v1930 = vadd.f32 %v1859, %v1902
  %v1931 = vadd.f32 %v1860, %v1903
  %v1932 = vadd.f32 %v1861, %v1904
  %v1933 = vadd.f32 %v1862, %v1905
  %v1934 = vadd.f32 %v1863, %v1906
  %v1935 = vadd.f32 %v1864, %v1907
  %v1936 = vadd.f32 %v1865, %v1908
  %v1937 = vadd.f32 %v1866, %v1909
  %v1938 = vadd.f32 %v1867, %v1910
  %v1939 = vperm.slane %v277, 1
  %v1940 = vmul.f32 %v1811, %v1939
  %v1941 = vmul.f32 %v1812, %v1939
  %v1942 = vmul.f32 %v1813, %v1939
  %v1943 = vmul.f32 %v1814, %v1939
  %v1944 = vmul.f32 %v1815, %v1939
  %v1945 = vmul.f32 %v1816, %v1939
  %v1946 = vmul.f32 %v1817, %v1939
  %v1947 = vmul.f32 %v1818, %v1939
  %v1948 = vmul.f32 %v1819, %v1939
  %v1949 = vmul.f32 %v1820, %v1939
  %v1950 = vmul.f32 %v1821, %v1939
  %v1951 = vmul.f32 %v1822, %v1939
  %v1952 = vmul.f32 %v1823, %v1939
  %v1953 = vmul.f32 %v1824, %v1939
  %v1954 = vmul.f32 %v1825, %v1939
  %v1955 = vmul.f32 %v1826, %v1939
  %v1956 = vmul.f32 %v1827, %v1939
  %v1957 = vmul.f32 %v1828, %v1939
  %v1958 = vmul.f32 %v1829, %v1939
  %v1959 = vmul.f32 %v1830, %v1939
  %v1960 = vmul.f32 %v1831, %v1939
  %v1961 = vmul.f32 %v1832, %v1939
  %v1962 = vmul.f32 %v1833, %v1939
  %v1963 = vmul.f32 %v1834, %v1939
  %v1964 = vmul.f32 %v1835, %v1939
  %v1965 = vmul.f32 %v1836, %v1939
  %v1966 = vmul.f32 %v1837, %v1939
  %v1967 = vmul.f32 %v1838, %v1939
  %v1996 = vrot.slane %v1940, 2
  %v1997 = vrot.slane %v1941, 2
  %v1998 = vsel %vm464, %v1996, %v1997
  %v1999 = vrot.slane %v1942, 2
  %v2000 = vrot.slane %v1943, 2
  %v2001 = vsel %vm464, %v1999, %v2000
  %v2002 = vrot.slane %v1944, 2
  %v2003 = vrot.slane %v1945, 2
  %v2004 = vsel %vm464, %v2002, %v2003
  %v2005 = vrot.slane %v1946, 2
  %v2006 = vrot.slane %v1947, 2
  %v2007 = vsel %vm464, %v2005, %v2006
  %v2008 = vrot.slane %v1948, 2
  %v2009 = vrot.slane %v1949, 2
  %v2010 = vsel %vm464, %v2008, %v2009
  %v2011 = vrot.slane %v1950, 2
  %v2012 = vrot.slane %v1951, 2
  %v2013 = vsel %vm464, %v2011, %v2012
  %v2014 = vrot.slane %v1952, 2
  %v2015 = vrot.slane %v1953, 2
  %v2016 = vsel %vm464, %v2014, %v2015
  %v2017 = vrot.slane %v1954, 2
  %v2018 = vrot.slane %v1955, 2
  %v2019 = vsel %vm464, %v2017, %v2018
  %v2020 = vrot.slane %v1956, 2
  %v2021 = vrot.slane %v1957, 2
  %v2022 = vsel %vm464, %v2020, %v2021
  %v2023 = vrot.slane %v1958, 2
  %v2024 = vrot.slane %v1959, 2
  %v2025 = vsel %vm464, %v2023, %v2024
  %v2026 = vrot.slane %v1960, 2
  %v2027 = vrot.slane %v1961, 2
  %v2028 = vsel %vm464, %v2026, %v2027
  %v2029 = vrot.slane %v1962, 2
  %v2030 = vrot.slane %v1963, 2
  %v2031 = vsel %vm464, %v2029, %v2030
  %v2032 = vrot.slane %v1964, 2
  %v2033 = vrot.slane %v1965, 2
  %v2034 = vsel %vm464, %v2032, %v2033
  %v2035 = vrot.slane %v1966, 2
  %v2036 = vrot.slane %v1967, 2
  %v2037 = vsel %vm464, %v2035, %v2036
  %v2052 = vadd.f32 %v1925, %v1998
  %v2053 = vadd.f32 %v1926, %v2001
  %v2054 = vadd.f32 %v1927, %v2004
  %v2055 = vadd.f32 %v1928, %v2007
  %v2056 = vadd.f32 %v1929, %v2010
  %v2057 = vadd.f32 %v1930, %v2013
  %v2058 = vadd.f32 %v1931, %v2016
  %v2059 = vadd.f32 %v1932, %v2019
  %v2060 = vadd.f32 %v1933, %v2022
  %v2061 = vadd.f32 %v1934, %v2025
  %v2062 = vadd.f32 %v1935, %v2028
  %v2063 = vadd.f32 %v1936, %v2031
  %v2064 = vadd.f32 %v1937, %v2034
  %v2065 = vadd.f32 %v1938, %v2037
  %v2066 = vperm.slane %v277, 2
  %v2067 = vmul.f32 %v1811, %v2066
  %v2068 = vmul.f32 %v1812, %v2066
  %v2069 = vmul.f32 %v1813, %v2066
  %v2070 = vmul.f32 %v1814, %v2066
  %v2071 = vmul.f32 %v1815, %v2066
  %v2072 = vmul.f32 %v1816, %v2066
  %v2073 = vmul.f32 %v1817, %v2066
  %v2074 = vmul.f32 %v1818, %v2066
  %v2075 = vmul.f32 %v1819, %v2066
  %v2076 = vmul.f32 %v1820, %v2066
  %v2077 = vmul.f32 %v1821, %v2066
  %v2078 = vmul.f32 %v1822, %v2066
  %v2079 = vmul.f32 %v1823, %v2066
  %v2080 = vmul.f32 %v1824, %v2066
  %v2081 = vmul.f32 %v1825, %v2066
  %v2082 = vmul.f32 %v1826, %v2066
  %v2083 = vmul.f32 %v1827, %v2066
  %v2084 = vmul.f32 %v1828, %v2066
  %v2085 = vmul.f32 %v1829, %v2066
  %v2086 = vmul.f32 %v1830, %v2066
  %v2087 = vmul.f32 %v1831, %v2066
  %v2088 = vmul.f32 %v1832, %v2066
  %v2089 = vmul.f32 %v1833, %v2066
  %v2090 = vmul.f32 %v1834, %v2066
  %v2091 = vmul.f32 %v1835, %v2066
  %v2092 = vmul.f32 %v1836, %v2066
  %v2093 = vmul.f32 %v1837, %v2066
  %v2094 = vmul.f32 %v1838, %v2066
  %v2123 = vrot.slane %v2067, 3
  %v2124 = vrot.slane %v2068, 3
  %v2125 = vsel %vm592, %v2123, %v2124
  %v2126 = vrot.slane %v2069, 3
  %v2127 = vrot.slane %v2070, 3
  %v2128 = vsel %vm592, %v2126, %v2127
  %v2129 = vrot.slane %v2071, 3
  %v2130 = vrot.slane %v2072, 3
  %v2131 = vsel %vm592, %v2129, %v2130
  %v2132 = vrot.slane %v2073, 3
  %v2133 = vrot.slane %v2074, 3
  %v2134 = vsel %vm592, %v2132, %v2133
  %v2135 = vrot.slane %v2075, 3
  %v2136 = vrot.slane %v2076, 3
  %v2137 = vsel %vm592, %v2135, %v2136
  %v2138 = vrot.slane %v2077, 3
  %v2139 = vrot.slane %v2078, 3
  %v2140 = vsel %vm592, %v2138, %v2139
  %v2141 = vrot.slane %v2079, 3
  %v2142 = vrot.slane %v2080, 3
  %v2143 = vsel %vm592, %v2141, %v2142
  %v2144 = vrot.slane %v2081, 3
  %v2145 = vrot.slane %v2082, 3
  %v2146 = vsel %vm592, %v2144, %v2145
  %v2147 = vrot.slane %v2083, 3
  %v2148 = vrot.slane %v2084, 3
  %v2149 = vsel %vm592, %v2147, %v2148
  %v2150 = vrot.slane %v2085, 3
  %v2151 = vrot.slane %v2086, 3
  %v2152 = vsel %vm592, %v2150, %v2151
  %v2153 = vrot.slane %v2087, 3
  %v2154 = vrot.slane %v2088, 3
  %v2155 = vsel %vm592, %v2153, %v2154
  %v2156 = vrot.slane %v2089, 3
  %v2157 = vrot.slane %v2090, 3
  %v2158 = vsel %vm592, %v2156, %v2157
  %v2159 = vrot.slane %v2091, 3
  %v2160 = vrot.slane %v2092, 3
  %v2161 = vsel %vm592, %v2159, %v2160
  %v2162 = vrot.slane %v2093, 3
  %v2163 = vrot.slane %v2094, 3
  %v2164 = vsel %vm592, %v2162, %v2163
  %v2179 = vadd.f32 %v2052, %v2125
  %v2180 = vadd.f32 %v2053, %v2128
  %v2181 = vadd.f32 %v2054, %v2131
  %v2182 = vadd.f32 %v2055, %v2134
  %v2183 = vadd.f32 %v2056, %v2137
  %v2184 = vadd.f32 %v2057, %v2140
  %v2185 = vadd.f32 %v2058, %v2143
  %v2186 = vadd.f32 %v2059, %v2146
  %v2187 = vadd.f32 %v2060, %v2149
  %v2188 = vadd.f32 %v2061, %v2152
  %v2189 = vadd.f32 %v2062, %v2155
  %v2190 = vadd.f32 %v2063, %v2158
  %v2191 = vadd.f32 %v2064, %v2161
  %v2192 = vadd.f32 %v2065, %v2164
  %v2193 = vperm.slane %v277, 3
  %v2194 = vmul.f32 %v1811, %v2193
  %v2195 = vmul.f32 %v1812, %v2193
  %v2196 = vmul.f32 %v1813, %v2193
  %v2197 = vmul.f32 %v1814, %v2193
  %v2198 = vmul.f32 %v1815, %v2193
  %v2199 = vmul.f32 %v1816, %v2193
  %v2200 = vmul.f32 %v1817, %v2193
  %v2201 = vmul.f32 %v1818, %v2193
  %v2202 = vmul.f32 %v1819, %v2193
  %v2203 = vmul.f32 %v1820, %v2193
  %v2204 = vmul.f32 %v1821, %v2193
  %v2205 = vmul.f32 %v1822, %v2193
  %v2206 = vmul.f32 %v1823, %v2193
  %v2207 = vmul.f32 %v1824, %v2193
  %v2208 = vmul.f32 %v1825, %v2193
  %v2209 = vmul.f32 %v1826, %v2193
  %v2210 = vmul.f32 %v1827, %v2193
  %v2211 = vmul.f32 %v1828, %v2193
  %v2212 = vmul.f32 %v1829, %v2193
  %v2213 = vmul.f32 %v1830, %v2193
  %v2214 = vmul.f32 %v1831, %v2193
  %v2215 = vmul.f32 %v1832, %v2193
  %v2216 = vmul.f32 %v1833, %v2193
  %v2217 = vmul.f32 %v1834, %v2193
  %v2218 = vmul.f32 %v1835, %v2193
  %v2219 = vmul.f32 %v1836, %v2193
  %v2220 = vmul.f32 %v1837, %v2193
  %v2221 = vmul.f32 %v1838, %v2193
  %v2250 = vrot.slane %v2194, 4
  %v2251 = vrot.slane %v2195, 4
  %v2252 = vsel %vm720, %v2250, %v2251
  %v2253 = vrot.slane %v2196, 4
  %v2254 = vrot.slane %v2197, 4
  %v2255 = vsel %vm720, %v2253, %v2254
  %v2256 = vrot.slane %v2198, 4
  %v2257 = vrot.slane %v2199, 4
  %v2258 = vsel %vm720, %v2256, %v2257
  %v2259 = vrot.slane %v2200, 4
  %v2260 = vrot.slane %v2201, 4
  %v2261 = vsel %vm720, %v2259, %v2260
  %v2262 = vrot.slane %v2202, 4
  %v2263 = vrot.slane %v2203, 4
  %v2264 = vsel %vm720, %v2262, %v2263
  %v2265 = vrot.slane %v2204, 4
  %v2266 = vrot.slane %v2205, 4
  %v2267 = vsel %vm720, %v2265, %v2266
  %v2268 = vrot.slane %v2206, 4
  %v2269 = vrot.slane %v2207, 4
  %v2270 = vsel %vm720, %v2268, %v2269
  %v2271 = vrot.slane %v2208, 4
  %v2272 = vrot.slane %v2209, 4
  %v2273 = vsel %vm720, %v2271, %v2272
  %v2274 = vrot.slane %v2210, 4
  %v2275 = vrot.slane %v2211, 4
  %v2276 = vsel %vm720, %v2274, %v2275
  %v2277 = vrot.slane %v2212, 4
  %v2278 = vrot.slane %v2213, 4
  %v2279 = vsel %vm720, %v2277, %v2278
  %v2280 = vrot.slane %v2214, 4
  %v2281 = vrot.slane %v2215, 4
  %v2282 = vsel %vm720, %v2280, %v2281
  %v2283 = vrot.slane %v2216, 4
  %v2284 = vrot.slane %v2217, 4
  %v2285 = vsel %vm720, %v2283, %v2284
  %v2286 = vrot.slane %v2218, 4
  %v2287 = vrot.slane %v2219, 4
  %v2288 = vsel %vm720, %v2286, %v2287
  %v2289 = vrot.slane %v2220, 4
  %v2290 = vrot.slane %v2221, 4
  %v2291 = vsel %vm720, %v2289, %v2290
  %v2306 = vadd.f32 %v2179, %v2252
  %v2307 = vadd.f32 %v2180, %v2255
  %v2308 = vadd.f32 %v2181, %v2258
  %v2309 = vadd.f32 %v2182, %v2261
  %v2310 = vadd.f32 %v2183, %v2264
  %v2311 = vadd.f32 %v2184, %v2267
  %v2312 = vadd.f32 %v2185, %v2270
  %v2313 = vadd.f32 %v2186, %v2273
  %v2314 = vadd.f32 %v2187, %v2276
  %v2315 = vadd.f32 %v2188, %v2279
  %v2316 = vadd.f32 %v2189, %v2282
  %v2317 = vadd.f32 %v2190, %v2285
  %v2318 = vadd.f32 %v2191, %v2288
  %v2319 = vadd.f32 %v2192, %v2291
  %s2320 = scalar_lea.vmem [#allocation2], 128
  %v2321 = vld [vmem:[%s2320] sm:$0xff]
  %v2322 = vld [vmem:[%s2320 + $0x10] sm:$0x7]
  %v2323 = vld [vmem:[%s2320 + $0x20] sm:$0xff]
  %v2324 = vld [vmem:[%s2320 + $0x30] sm:$0x7]
  %v2325 = vld [vmem:[%s2320 + $0x40] sm:$0xff]
  %v2326 = vld [vmem:[%s2320 + $0x50] sm:$0x7]
  %v2327 = vld [vmem:[%s2320 + $0x60] sm:$0xff]
  %v2328 = vld [vmem:[%s2320 + $0x70] sm:$0x7]
  %v2329 = vld [vmem:[%s2320 + $0x80] sm:$0xff]
  %v2330 = vld [vmem:[%s2320 + $0x90] sm:$0x7]
  %v2331 = vld [vmem:[%s2320 + $0xa0] sm:$0xff]
  %v2332 = vld [vmem:[%s2320 + $0xb0] sm:$0x7]
  %v2333 = vld [vmem:[%s2320 + $0xc0] sm:$0xff]
  %v2334 = vld [vmem:[%s2320 + $0xd0] sm:$0x7]
  %v2335 = vld [vmem:[%s2320 + $0x160] sm:$0xff]
  %v2336 = vld [vmem:[%s2320 + $0x170] sm:$0x7]
  %v2337 = vld [vmem:[%s2320 + $0x180] sm:$0xff]
  %v2338 = vld [vmem:[%s2320 + $0x190] sm:$0x7]
  %v2339 = vld [vmem:[%s2320 + $0x1a0] sm:$0xff]
  %v2340 = vld [vmem:[%s2320 + $0x1b0] sm:$0x7]
  %v2341 = vld [vmem:[%s2320 + $0x1c0] sm:$0xff]
  %v2342 = vld [vmem:[%s2320 + $0x1d0] sm:$0x7]
  %v2343 = vld [vmem:[%s2320 + $0x1e0] sm:$0xff]
  %v2344 = vld [vmem:[%s2320 + $0x1f0] sm:$0x7]
  %v2345 = vld [vmem:[%s2320 + $0x200] sm:$0xff]
  %v2346 = vld [vmem:[%s2320 + $0x210] sm:$0x7]
  %v2347 = vld [vmem:[%s2320 + $0x220] sm:$0xff]
  %v2348 = vld [vmem:[%s2320 + $0x230] sm:$0x7]
  %v2349 = vperm.slane %v277, 4
  %v2350 = vmul.f32 %v2321, %v2349
  %v2351 = vmul.f32 %v2323, %v2349
  %v2352 = vmul.f32 %v2325, %v2349
  %v2353 = vmul.f32 %v2327, %v2349
  %v2354 = vmul.f32 %v2329, %v2349
  %v2355 = vmul.f32 %v2331, %v2349
  %v2356 = vmul.f32 %v2333, %v2349
  %v2357 = vmul.f32 %v2335, %v2349
  %v2358 = vmul.f32 %v2337, %v2349
  %v2359 = vmul.f32 %v2339, %v2349
  %v2360 = vmul.f32 %v2341, %v2349
  %v2361 = vmul.f32 %v2343, %v2349
  %v2362 = vmul.f32 %v2345, %v2349
  %v2363 = vmul.f32 %v2347, %v2349
  %v2364 = vadd.f32 %v2306, %v2350
  %v2365 = vadd.f32 %v2307, %v2351
  %v2366 = vadd.f32 %v2308, %v2352
  %v2367 = vadd.f32 %v2309, %v2353
  %v2368 = vadd.f32 %v2310, %v2354
  %v2369 = vadd.f32 %v2311, %v2355
  %v2370 = vadd.f32 %v2312, %v2356
  %v2371 = vadd.f32 %v2313, %v2357
  %v2372 = vadd.f32 %v2314, %v2358
  %v2373 = vadd.f32 %v2315, %v2359
  %v2374 = vadd.f32 %v2316, %v2360
  %v2375 = vadd.f32 %v2317, %v2361
  %v2376 = vadd.f32 %v2318, %v2362
  %v2377 = vadd.f32 %v2319, %v2363
  %v2378 = vperm.slane %v277, 5
  %v2379 = vmul.f32 %v2321, %v2378
  %v2380 = vmul.f32 %v2323, %v2378
  %v2381 = vmul.f32 %v2325, %v2378
  %v2382 = vmul.f32 %v2327, %v2378
  %v2383 = vmul.f32 %v2329, %v2378
  %v2384 = vmul.f32 %v2331, %v2378
  %v2385 = vmul.f32 %v2333, %v2378
  %v2386 = vmul.f32 %v2335, %v2378
  %v2387 = vmul.f32 %v2337, %v2378
  %v2388 = vmul.f32 %v2339, %v2378
  %v2389 = vmul.f32 %v2341, %v2378
  %v2390 = vmul.f32 %v2343, %v2378
  %v2391 = vmul.f32 %v2345, %v2378
  %v2392 = vmul.f32 %v2347, %v2378
  %v2407 = vrot.slane %v2379, 1
  %v2408 = vrot.slane %v2380, 1
  %v2409 = vrot.slane %v2381, 1
  %v2410 = vrot.slane %v2382, 1
  %v2411 = vrot.slane %v2383, 1
  %v2412 = vrot.slane %v2384, 1
  %v2413 = vrot.slane %v2385, 1
  %v2414 = vrot.slane %v2386, 1
  %v2415 = vrot.slane %v2387, 1
  %v2416 = vrot.slane %v2388, 1
  %v2417 = vrot.slane %v2389, 1
  %v2418 = vrot.slane %v2390, 1
  %v2419 = vrot.slane %v2391, 1
  %v2420 = vrot.slane %v2392, 1
  %v2435 = vadd.f32 %v2364, %v2407
  %v2436 = vadd.f32 %v2365, %v2408
  %v2437 = vadd.f32 %v2366, %v2409
  %v2438 = vadd.f32 %v2367, %v2410
  %v2439 = vadd.f32 %v2368, %v2411
  %v2440 = vadd.f32 %v2369, %v2412
  %v2441 = vadd.f32 %v2370, %v2413
  %v2442 = vadd.f32 %v2371, %v2414
  %v2443 = vadd.f32 %v2372, %v2415
  %v2444 = vadd.f32 %v2373, %v2416
  %v2445 = vadd.f32 %v2374, %v2417
  %v2446 = vadd.f32 %v2375, %v2418
  %v2447 = vadd.f32 %v2376, %v2419
  %v2448 = vadd.f32 %v2377, %v2420
  %v2449 = vperm.slane %v277, 6
  %v2450 = vmul.f32 %v2321, %v2449
  %v2451 = vmul.f32 %v2322, %v2449
  %v2452 = vmul.f32 %v2323, %v2449
  %v2453 = vmul.f32 %v2324, %v2449
  %v2454 = vmul.f32 %v2325, %v2449
  %v2455 = vmul.f32 %v2326, %v2449
  %v2456 = vmul.f32 %v2327, %v2449
  %v2457 = vmul.f32 %v2328, %v2449
  %v2458 = vmul.f32 %v2329, %v2449
  %v2459 = vmul.f32 %v2330, %v2449
  %v2460 = vmul.f32 %v2331, %v2449
  %v2461 = vmul.f32 %v2332, %v2449
  %v2462 = vmul.f32 %v2333, %v2449
  %v2463 = vmul.f32 %v2334, %v2449
  %v2464 = vmul.f32 %v2335, %v2449
  %v2465 = vmul.f32 %v2336, %v2449
  %v2466 = vmul.f32 %v2337, %v2449
  %v2467 = vmul.f32 %v2338, %v2449
  %v2468 = vmul.f32 %v2339, %v2449
  %v2469 = vmul.f32 %v2340, %v2449
  %v2470 = vmul.f32 %v2341, %v2449
  %v2471 = vmul.f32 %v2342, %v2449
  %v2472 = vmul.f32 %v2343, %v2449
  %v2473 = vmul.f32 %v2344, %v2449
  %v2474 = vmul.f32 %v2345, %v2449
  %v2475 = vmul.f32 %v2346, %v2449
  %v2476 = vmul.f32 %v2347, %v2449
  %v2477 = vmul.f32 %v2348, %v2449
  %v2506 = vrot.slane %v2450, 2
  %v2507 = vrot.slane %v2451, 2
  %v2508 = vsel %vm464, %v2506, %v2507
  %v2509 = vrot.slane %v2452, 2
  %v2510 = vrot.slane %v2453, 2
  %v2511 = vsel %vm464, %v2509, %v2510
  %v2512 = vrot.slane %v2454, 2
  %v2513 = vrot.slane %v2455, 2
  %v2514 = vsel %vm464, %v2512, %v2513
  %v2515 = vrot.slane %v2456, 2
  %v2516 = vrot.slane %v2457, 2
  %v2517 = vsel %vm464, %v2515, %v2516
  %v2518 = vrot.slane %v2458, 2
  %v2519 = vrot.slane %v2459, 2
  %v2520 = vsel %vm464, %v2518, %v2519
  %v2521 = vrot.slane %v2460, 2
  %v2522 = vrot.slane %v2461, 2
  %v2523 = vsel %vm464, %v2521, %v2522
  %v2524 = vrot.slane %v2462, 2
  %v2525 = vrot.slane %v2463, 2
  %v2526 = vsel %vm464, %v2524, %v2525
  %v2527 = vrot.slane %v2464, 2
  %v2528 = vrot.slane %v2465, 2
  %v2529 = vsel %vm464, %v2527, %v2528
  %v2530 = vrot.slane %v2466, 2
  %v2531 = vrot.slane %v2467, 2
  %v2532 = vsel %vm464, %v2530, %v2531
  %v2533 = vrot.slane %v2468, 2
  %v2534 = vrot.slane %v2469, 2
  %v2535 = vsel %vm464, %v2533, %v2534
  %v2536 = vrot.slane %v2470, 2
  %v2537 = vrot.slane %v2471, 2
  %v2538 = vsel %vm464, %v2536, %v2537
  %v2539 = vrot.slane %v2472, 2
  %v2540 = vrot.slane %v2473, 2
  %v2541 = vsel %vm464, %v2539, %v2540
  %v2542 = vrot.slane %v2474, 2
  %v2543 = vrot.slane %v2475, 2
  %v2544 = vsel %vm464, %v2542, %v2543
  %v2545 = vrot.slane %v2476, 2
  %v2546 = vrot.slane %v2477, 2
  %v2547 = vsel %vm464, %v2545, %v2546
  %v2562 = vadd.f32 %v2435, %v2508
  %v2563 = vadd.f32 %v2436, %v2511
  %v2564 = vadd.f32 %v2437, %v2514
  %v2565 = vadd.f32 %v2438, %v2517
  %v2566 = vadd.f32 %v2439, %v2520
  %v2567 = vadd.f32 %v2440, %v2523
  %v2568 = vadd.f32 %v2441, %v2526
  %v2569 = vadd.f32 %v2442, %v2529
  %v2570 = vadd.f32 %v2443, %v2532
  %v2571 = vadd.f32 %v2444, %v2535
  %v2572 = vadd.f32 %v2445, %v2538
  %v2573 = vadd.f32 %v2446, %v2541
  %v2574 = vadd.f32 %v2447, %v2544
  %v2575 = vadd.f32 %v2448, %v2547
  %v2576 = vperm.slane %v277, 7
  %v2577 = vmul.f32 %v2321, %v2576
  %v2578 = vmul.f32 %v2322, %v2576
  %v2579 = vmul.f32 %v2323, %v2576
  %v2580 = vmul.f32 %v2324, %v2576
  %v2581 = vmul.f32 %v2325, %v2576
  %v2582 = vmul.f32 %v2326, %v2576
  %v2583 = vmul.f32 %v2327, %v2576
  %v2584 = vmul.f32 %v2328, %v2576
  %v2585 = vmul.f32 %v2329, %v2576
  %v2586 = vmul.f32 %v2330, %v2576
  %v2587 = vmul.f32 %v2331, %v2576
  %v2588 = vmul.f32 %v2332, %v2576
  %v2589 = vmul.f32 %v2333, %v2576
  %v2590 = vmul.f32 %v2334, %v2576
  %v2591 = vmul.f32 %v2335, %v2576
  %v2592 = vmul.f32 %v2336, %v2576
  %v2593 = vmul.f32 %v2337, %v2576
  %v2594 = vmul.f32 %v2338, %v2576
  %v2595 = vmul.f32 %v2339, %v2576
  %v2596 = vmul.f32 %v2340, %v2576
  %v2597 = vmul.f32 %v2341, %v2576
  %v2598 = vmul.f32 %v2342, %v2576
  %v2599 = vmul.f32 %v2343, %v2576
  %v2600 = vmul.f32 %v2344, %v2576
  %v2601 = vmul.f32 %v2345, %v2576
  %v2602 = vmul.f32 %v2346, %v2576
  %v2603 = vmul.f32 %v2347, %v2576
  %v2604 = vmul.f32 %v2348, %v2576
  %v2633 = vrot.slane %v2577, 3
  %v2634 = vrot.slane %v2578, 3
  %v2635 = vsel %vm592, %v2633, %v2634
  %v2636 = vrot.slane %v2579, 3
  %v2637 = vrot.slane %v2580, 3
  %v2638 = vsel %vm592, %v2636, %v2637
  %v2639 = vrot.slane %v2581, 3
  %v2640 = vrot.slane %v2582, 3
  %v2641 = vsel %vm592, %v2639, %v2640
  %v2642 = vrot.slane %v2583, 3
  %v2643 = vrot.slane %v2584, 3
  %v2644 = vsel %vm592, %v2642, %v2643
  %v2645 = vrot.slane %v2585, 3
  %v2646 = vrot.slane %v2586, 3
  %v2647 = vsel %vm592, %v2645, %v2646
  %v2648 = vrot.slane %v2587, 3
  %v2649 = vrot.slane %v2588, 3
  %v2650 = vsel %vm592, %v2648, %v2649
  %v2651 = vrot.slane %v2589, 3
  %v2652 = vrot.slane %v2590, 3
  %v2653 = vsel %vm592, %v2651, %v2652
  %v2654 = vrot.slane %v2591, 3
  %v2655 = vrot.slane %v2592, 3
  %v2656 = vsel %vm592, %v2654, %v2655
  %v2657 = vrot.slane %v2593, 3
  %v2658 = vrot.slane %v2594, 3
  %v2659 = vsel %vm592, %v2657, %v2658
  %v2660 = vrot.slane %v2595, 3
  %v2661 = vrot.slane %v2596, 3
  %v2662 = vsel %vm592, %v2660, %v2661
  %v2663 = vrot.slane %v2597, 3
  %v2664 = vrot.slane %v2598, 3
  %v2665 = vsel %vm592, %v2663, %v2664
  %v2666 = vrot.slane %v2599, 3
  %v2667 = vrot.slane %v2600, 3
  %v2668 = vsel %vm592, %v2666, %v2667
  %v2669 = vrot.slane %v2601, 3
  %v2670 = vrot.slane %v2602, 3
  %v2671 = vsel %vm592, %v2669, %v2670
  %v2672 = vrot.slane %v2603, 3
  %v2673 = vrot.slane %v2604, 3
  %v2674 = vsel %vm592, %v2672, %v2673
  %v2689 = vadd.f32 %v2562, %v2635
  %v2690 = vadd.f32 %v2563, %v2638
  %v2691 = vadd.f32 %v2564, %v2641
  %v2692 = vadd.f32 %v2565, %v2644
  %v2693 = vadd.f32 %v2566, %v2647
  %v2694 = vadd.f32 %v2567, %v2650
  %v2695 = vadd.f32 %v2568, %v2653
  %v2696 = vadd.f32 %v2569, %v2656
  %v2697 = vadd.f32 %v2570, %v2659
  %v2698 = vadd.f32 %v2571, %v2662
  %v2699 = vadd.f32 %v2572, %v2665
  %v2700 = vadd.f32 %v2573, %v2668
  %v2701 = vadd.f32 %v2574, %v2671
  %v2702 = vadd.f32 %v2575, %v2674
  %v2703 = vperm.slane %v278, 0
  %v2704 = vmul.f32 %v2321, %v2703
  %v2705 = vmul.f32 %v2322, %v2703
  %v2706 = vmul.f32 %v2323, %v2703
  %v2707 = vmul.f32 %v2324, %v2703
  %v2708 = vmul.f32 %v2325, %v2703
  %v2709 = vmul.f32 %v2326, %v2703
  %v2710 = vmul.f32 %v2327, %v2703
  %v2711 = vmul.f32 %v2328, %v2703
  %v2712 = vmul.f32 %v2329, %v2703
  %v2713 = vmul.f32 %v2330, %v2703
  %v2714 = vmul.f32 %v2331, %v2703
  %v2715 = vmul.f32 %v2332, %v2703
  %v2716 = vmul.f32 %v2333, %v2703
  %v2717 = vmul.f32 %v2334, %v2703
  %v2718 = vmul.f32 %v2335, %v2703
  %v2719 = vmul.f32 %v2336, %v2703
  %v2720 = vmul.f32 %v2337, %v2703
  %v2721 = vmul.f32 %v2338, %v2703
  %v2722 = vmul.f32 %v2339, %v2703
  %v2723 = vmul.f32 %v2340, %v2703
  %v2724 = vmul.f32 %v2341, %v2703
  %v2725 = vmul.f32 %v2342, %v2703
  %v2726 = vmul.f32 %v2343, %v2703
  %v2727 = vmul.f32 %v2344, %v2703
  %v2728 = vmul.f32 %v2345, %v2703
  %v2729 = vmul.f32 %v2346, %v2703
  %v2730 = vmul.f32 %v2347, %v2703
  %v2731 = vmul.f32 %v2348, %v2703
  %v2760 = vrot.slane %v2704, 4
  %v2761 = vrot.slane %v2705, 4
  %v2762 = vsel %vm720, %v2760, %v2761
  %v2763 = vrot.slane %v2706, 4
  %v2764 = vrot.slane %v2707, 4
  %v2765 = vsel %vm720, %v2763, %v2764
  %v2766 = vrot.slane %v2708, 4
  %v2767 = vrot.slane %v2709, 4
  %v2768 = vsel %vm720, %v2766, %v2767
  %v2769 = vrot.slane %v2710, 4
  %v2770 = vrot.slane %v2711, 4
  %v2771 = vsel %vm720, %v2769, %v2770
  %v2772 = vrot.slane %v2712, 4
  %v2773 = vrot.slane %v2713, 4
  %v2774 = vsel %vm720, %v2772, %v2773
  %v2775 = vrot.slane %v2714, 4
  %v2776 = vrot.slane %v2715, 4
  %v2777 = vsel %vm720, %v2775, %v2776
  %v2778 = vrot.slane %v2716, 4
  %v2779 = vrot.slane %v2717, 4
  %v2780 = vsel %vm720, %v2778, %v2779
  %v2781 = vrot.slane %v2718, 4
  %v2782 = vrot.slane %v2719, 4
  %v2783 = vsel %vm720, %v2781, %v2782
  %v2784 = vrot.slane %v2720, 4
  %v2785 = vrot.slane %v2721, 4
  %v2786 = vsel %vm720, %v2784, %v2785
  %v2787 = vrot.slane %v2722, 4
  %v2788 = vrot.slane %v2723, 4
  %v2789 = vsel %vm720, %v2787, %v2788
  %v2790 = vrot.slane %v2724, 4
  %v2791 = vrot.slane %v2725, 4
  %v2792 = vsel %vm720, %v2790, %v2791
  %v2793 = vrot.slane %v2726, 4
  %v2794 = vrot.slane %v2727, 4
  %v2795 = vsel %vm720, %v2793, %v2794
  %v2796 = vrot.slane %v2728, 4
  %v2797 = vrot.slane %v2729, 4
  %v2798 = vsel %vm720, %v2796, %v2797
  %v2799 = vrot.slane %v2730, 4
  %v2800 = vrot.slane %v2731, 4
  %v2801 = vsel %vm720, %v2799, %v2800
  %v2816 = vadd.f32 %v2689, %v2762
  %v2817 = vadd.f32 %v2690, %v2765
  %v2818 = vadd.f32 %v2691, %v2768
  %v2819 = vadd.f32 %v2692, %v2771
  %v2820 = vadd.f32 %v2693, %v2774
  %v2821 = vadd.f32 %v2694, %v2777
  %v2822 = vadd.f32 %v2695, %v2780
  %v2823 = vadd.f32 %v2696, %v2783
  %v2824 = vadd.f32 %v2697, %v2786
  %v2825 = vadd.f32 %v2698, %v2789
  %v2826 = vadd.f32 %v2699, %v2792
  %v2827 = vadd.f32 %v2700, %v2795
  %v2828 = vadd.f32 %v2701, %v2798
  %v2829 = vadd.f32 %v2702, %v2801
  %vm2830 = vcmask 1046528
  %v2831 = vsel %vm2830, %v2816, 0.0
  %v2832 = vsel %vm2830, %v2817, 0.0
  %v2833 = vadd.f32 %v2831, %v2832
  %v2834 = vsel %vm2830, %v2818, 0.0
  %v2835 = vadd.f32 %v2833, %v2834
  %v2836 = vsel %vm2830, %v2819, 0.0
  %v2837 = vadd.f32 %v2835, %v2836
  %v2838 = vsel %vm2830, %v2820, 0.0
  %v2839 = vadd.f32 %v2837, %v2838
  %v2840 = vsel %vm2830, %v2821, 0.0
  %v2841 = vadd.f32 %v2839, %v2840
  %v2842 = vsel %vm2830, %v2822, 0.0
  %v2843 = vadd.f32 %v2841, %v2842
  %v2844 = vsel %vm2830, %v2823, 0.0
  %v2845 = vadd.f32 %v2843, %v2844
  %v2846 = vsel %vm2830, %v2824, 0.0
  %v2847 = vadd.f32 %v2845, %v2846
  %v2848 = vsel %vm2830, %v2825, 0.0
  %v2849 = vadd.f32 %v2847, %v2848
  %v2850 = vsel %vm2830, %v2826, 0.0
  %v2851 = vadd.f32 %v2849, %v2850
  %v2852 = vsel %vm2830, %v2827, 0.0
  %v2853 = vadd.f32 %v2851, %v2852
  %v2854 = vsel %vm2830, %v2828, 0.0
  %v2855 = vadd.f32 %v2853, %v2854
  %v2856 = vsel %vm2830, %v2829, 0.0
  %v2857 = vadd.f32 %v2855, %v2856
  %v2858 = vrot.slane %v2857, 4
  %v2859 = vadd.f32 %v2857, %v2858
  %v2860 = vrot.slane %v2859, 2
  %v2861 = vadd.f32 %v2859, %v2860
  %v2862 = vrot.slane %v2861, 1
  %v2863 = vadd.f32 %v2861, %v2862
  %v2864 = vrcp.pop 98.0
  %v2865 = vmul.f32 98.0, %v2864
  %v2866 = vsub.f32 1.0, %v2865
  %v2867 = vmul.f32 %v2864, %v2866
  %v2868 = vadd.f32 %v2864, %v2867
  %vm2869 = vweird.f32 %v2864
  %v2870 = vsel %vm2869, %v2864, %v2868
  %v2871 = vmul.f32 %v2863, %v2870
  %v2872 = vsub.f32 %v2816, %v2871
  %v2873 = vsub.f32 %v2817, %v2871
  %v2874 = vsub.f32 %v2818, %v2871
  %v2875 = vsub.f32 %v2819, %v2871
  %v2876 = vsub.f32 %v2820, %v2871
  %v2877 = vsub.f32 %v2821, %v2871
  %v2878 = vsub.f32 %v2822, %v2871
  %v2879 = vsub.f32 %v2823, %v2871
  %v2880 = vsub.f32 %v2824, %v2871
  %v2881 = vsub.f32 %v2825, %v2871
  %v2882 = vsub.f32 %v2826, %v2871
  %v2883 = vsub.f32 %v2827, %v2871
  %v2884 = vsub.f32 %v2828, %v2871
  %v2885 = vsub.f32 %v2829, %v2871
  %v2886 = vmul.f32 %v2872, %v2872
  %v2887 = vmul.f32 %v2873, %v2873
  %v2888 = vmul.f32 %v2874, %v2874
  %v2889 = vmul.f32 %v2875, %v2875
  %v2890 = vmul.f32 %v2876, %v2876
  %v2891 = vmul.f32 %v2877, %v2877
  %v2892 = vmul.f32 %v2878, %v2878
  %v2893 = vmul.f32 %v2879, %v2879
  %v2894 = vmul.f32 %v2880, %v2880
  %v2895 = vmul.f32 %v2881, %v2881
  %v2896 = vmul.f32 %v2882, %v2882
  %v2897 = vmul.f32 %v2883, %v2883
  %v2898 = vmul.f32 %v2884, %v2884
  %v2899 = vmul.f32 %v2885, %v2885
  %v2900 = vsel %vm2830, %v2886, 0.0
  %v2901 = vsel %vm2830, %v2887, 0.0
  %v2902 = vadd.f32 %v2900, %v2901
  %v2903 = vsel %vm2830, %v2888, 0.0
  %v2904 = vadd.f32 %v2902, %v2903
  %v2905 = vsel %vm2830, %v2889, 0.0
  %v2906 = vadd.f32 %v2904, %v2905
  %v2907 = vsel %vm2830, %v2890, 0.0
  %v2908 = vadd.f32 %v2906, %v2907
  %v2909 = vsel %vm2830, %v2891, 0.0
  %v2910 = vadd.f32 %v2908, %v2909
  %v2911 = vsel %vm2830, %v2892, 0.0
  %v2912 = vadd.f32 %v2910, %v2911
  %v2913 = vsel %vm2830, %v2893, 0.0
  %v2914 = vadd.f32 %v2912, %v2913
  %v2915 = vsel %vm2830, %v2894, 0.0
  %v2916 = vadd.f32 %v2914, %v2915
  %v2917 = vsel %vm2830, %v2895, 0.0
  %v2918 = vadd.f32 %v2916, %v2917
  %v2919 = vsel %vm2830, %v2896, 0.0
  %v2920 = vadd.f32 %v2918, %v2919
  %v2921 = vsel %vm2830, %v2897, 0.0
  %v2922 = vadd.f32 %v2920, %v2921
  %v2923 = vsel %vm2830, %v2898, 0.0
  %v2924 = vadd.f32 %v2922, %v2923
  %v2925 = vsel %vm2830, %v2899, 0.0
  %v2926 = vadd.f32 %v2924, %v2925
  %v2927 = vrot.slane %v2926, 4
  %v2928 = vadd.f32 %v2926, %v2927
  %v2929 = vrot.slane %v2928, 2
  %v2930 = vadd.f32 %v2928, %v2929
  %v2931 = vrot.slane %v2930, 1
  %v2932 = vadd.f32 %v2930, %v2931
  %v2933 = vmul.f32 %v2932, %v2870
  %v2934 = vadd.f32 %v2933, 0.001
  %v2935 = vrsqrt.pop %v2934
  %v2936 = vmul.f32 %v2935, %v2934
  %v2937 = vmul.f32 %v2936, %v2935
  %v2938 = vmul.f32 0.5, %v2937
  %v2939 = vsub.f32 1.5, %v2938
  %v2940 = vmul.f32 %v2935, %v2939
  %vm2941 = vweird.f32 %v2934
  %vm2942 = vweird.f32 %v2935
  %vm2943 = vmor %vm2941, %vm2942
  %v2944 = vsel %vm2943, %v2935, %v2940
  %v2945 = vld [vmem:[%s2] sm:$0x1]
  %v2946 = vld [vmem:[%s3] sm:$0x1]
  %v2947 = vmul.f32 %v2944, %v2945
  %v2948 = vperm.slane %v2947, 0
  %v2949 = vmul.f32 %v2872, %v2948
  %v2950 = vmul.f32 %v2873, %v2948
  %v2951 = vmul.f32 %v2874, %v2948
  %v2952 = vmul.f32 %v2875, %v2948
  %v2953 = vmul.f32 %v2876, %v2948
  %v2954 = vmul.f32 %v2877, %v2948
  %v2955 = vmul.f32 %v2878, %v2948
  %v2956 = vmul.f32 %v2879, %v2948
  %v2957 = vmul.f32 %v2880, %v2948
  %v2958 = vmul.f32 %v2881, %v2948
  %v2959 = vmul.f32 %v2882, %v2948
  %v2960 = vmul.f32 %v2883, %v2948
  %v2961 = vmul.f32 %v2884, %v2948
  %v2962 = vmul.f32 %v2885, %v2948
  %v2964 = vperm.slane %v2946, 0
  %v2966 = vadd.f32 %v2949, %v2964
  %v2967 = vadd.f32 %v2950, %v2964
  %v2968 = vadd.f32 %v2951, %v2964
  %v2969 = vadd.f32 %v2952, %v2964
  %v2970 = vadd.f32 %v2953, %v2964
  %v2971 = vadd.f32 %v2954, %v2964
  %v2972 = vadd.f32 %v2955, %v2964
  %v2973 = vadd.f32 %v2956, %v2964
  %v2974 = vadd.f32 %v2957, %v2964
  %v2975 = vadd.f32 %v2958, %v2964
  %v2976 = vadd.f32 %v2959, %v2964
  %v2977 = vadd.f32 %v2960, %v2964
  %v2978 = vadd.f32 %v2961, %v2964
  %v2979 = vadd.f32 %v2962, %v2964
  %2980 = vst [vmem:[%s4] sm:$0x7f] %v2966
  %2981 = vst [vmem:[%s4 + $0x10] sm:$0x7f] %v2967
  %2982 = vst [vmem:[%s4 + $0x20] sm:$0x7f] %v2968
  %2983 = vst [vmem:[%s4 + $0x30] sm:$0x7f] %v2969
  %2984 = vst [vmem:[%s4 + $0x40] sm:$0x7f] %v2970
  %2985 = vst [vmem:[%s4 + $0x50] sm:$0x7f] %v2971
  %2986 = vst [vmem:[%s4 + $0x60] sm:$0x7f] %v2972
  %2987 = vst [vmem:[%s4 + $0x70] sm:$0x7f] %v2973
  %2988 = vst [vmem:[%s4 + $0x80] sm:$0x7f] %v2974
  %2989 = vst [vmem:[%s4 + $0x90] sm:$0x7f] %v2975
  %2990 = vst [vmem:[%s4 + $0xa0] sm:$0x7f] %v2976
  %2991 = vst [vmem:[%s4 + $0xb0] sm:$0x7f] %v2977
  %2992 = vst [vmem:[%s4 + $0xc0] sm:$0x7f] %v2978
  %2993 = vst [vmem:[%s4 + $0xd0] sm:$0x7f] %v2979
  %v2994 = vld [vmem:[%s1 + $0x8] sm:$0xff]
  %v2995 = vld [vmem:[%s1 + $0x18] sm:$0xff]
  %v2996 = vld [vmem:[%s1 + $0x28] sm:$0xff]
  %v2997 = vld [vmem:[%s1 + $0x38] sm:$0x1]
  %v2998 = vld [vmem:[#allocation2 + $0x8] sm:$0xff]
  %v2999 = vld [vmem:[#allocation2 + $0x18] sm:$0x7]
  %v3000 = vld [vmem:[#allocation2 + $0x28] sm:$0xff]
  %v3001 = vld [vmem:[#allocation2 + $0x38] sm:$0x7]
  %v3002 = vld [vmem:[#allocation2 + $0x48] sm:$0xff]
  %v3003 = vld [vmem:[#allocation2 + $0x58] sm:$0x7]
  %v3004 = vld [vmem:[#allocation2 + $0x68] sm:$0xff]
  %v3005 = vld [vmem:[#allocation2 + $0x78] sm:$0x7]
  %v3006 = vld [vmem:[#allocation2 + $0x88] sm:$0xff]
  %v3007 = vld [vmem:[#allocation2 + $0x98] sm:$0x7]
  %v3008 = vld [vmem:[#allocation2 + $0xa8] sm:$0xff]
  %v3009 = vld [vmem:[#allocation2 + $0xb8] sm:$0x7]
  %v3010 = vld [vmem:[#allocation2 + $0xc8] sm:$0xff]
  %v3011 = vld [vmem:[#allocation2 + $0xd8] sm:$0x7]
  %v3012 = vld [vmem:[#allocation2 + $0x168] sm:$0xff]
  %v3013 = vld [vmem:[#allocation2 + $0x178] sm:$0x7]
  %v3014 = vld [vmem:[#allocation2 + $0x188] sm:$0xff]
  %v3015 = vld [vmem:[#allocation2 + $0x198] sm:$0x7]
  %v3016 = vld [vmem:[#allocation2 + $0x1a8] sm:$0xff]
  %v3017 = vld [vmem:[#allocation2 + $0x1b8] sm:$0x7]
  %v3018 = vld [vmem:[#allocation2 + $0x1c8] sm:$0xff]
  %v3019 = vld [vmem:[#allocation2 + $0x1d8] sm:$0x7]
  %v3020 = vld [vmem:[#allocation2 + $0x1e8] sm:$0xff]
  %v3021 = vld [vmem:[#allocation2 + $0x1f8] sm:$0x7]
  %v3022 = vld [vmem:[#allocation2 + $0x208] sm:$0xff]
  %v3023 = vld [vmem:[#allocation2 + $0x218] sm:$0x7]
  %v3024 = vld [vmem:[#allocation2 + $0x228] sm:$0xff]
  %v3025 = vld [vmem:[#allocation2 + $0x238] sm:$0x7]
  %v3026 = vperm.slane %v2994, 0
  %v3027 = vmul.f32 %v2998, %v3026
  %v3028 = vmul.f32 %v3000, %v3026
  %v3029 = vmul.f32 %v3002, %v3026
  %v3030 = vmul.f32 %v3004, %v3026
  %v3031 = vmul.f32 %v3006, %v3026
  %v3032 = vmul.f32 %v3008, %v3026
  %v3033 = vmul.f32 %v3010, %v3026
  %v3034 = vmul.f32 %v3012, %v3026
  %v3035 = vmul.f32 %v3014, %v3026
  %v3036 = vmul.f32 %v3016, %v3026
  %v3037 = vmul.f32 %v3018, %v3026
  %v3038 = vmul.f32 %v3020, %v3026
  %v3039 = vmul.f32 %v3022, %v3026
  %v3040 = vmul.f32 %v3024, %v3026
  %v3041 = vadd.f32 %v3027, 0.0
  %v3042 = vadd.f32 %v3028, 0.0
  %v3043 = vadd.f32 %v3029, 0.0
  %v3044 = vadd.f32 %v3030, 0.0
  %v3045 = vadd.f32 %v3031, 0.0
  %v3046 = vadd.f32 %v3032, 0.0
  %v3047 = vadd.f32 %v3033, 0.0
  %v3048 = vadd.f32 %v3034, 0.0
  %v3049 = vadd.f32 %v3035, 0.0
  %v3050 = vadd.f32 %v3036, 0.0
  %v3051 = vadd.f32 %v3037, 0.0
  %v3052 = vadd.f32 %v3038, 0.0
  %v3053 = vadd.f32 %v3039, 0.0
  %v3054 = vadd.f32 %v3040, 0.0
  %v3055 = vperm.slane %v2994, 1
  %v3056 = vmul.f32 %v2998, %v3055
  %v3057 = vmul.f32 %v3000, %v3055
  %v3058 = vmul.f32 %v3002, %v3055
  %v3059 = vmul.f32 %v3004, %v3055
  %v3060 = vmul.f32 %v3006, %v3055
  %v3061 = vmul.f32 %v3008, %v3055
  %v3062 = vmul.f32 %v3010, %v3055
  %v3063 = vmul.f32 %v3012, %v3055
  %v3064 = vmul.f32 %v3014, %v3055
  %v3065 = vmul.f32 %v3016, %v3055
  %v3066 = vmul.f32 %v3018, %v3055
  %v3067 = vmul.f32 %v3020, %v3055
  %v3068 = vmul.f32 %v3022, %v3055
  %v3069 = vmul.f32 %v3024, %v3055
  %v3084 = vrot.slane %v3056, 1
  %v3085 = vrot.slane %v3057, 1
  %v3086 = vrot.slane %v3058, 1
  %v3087 = vrot.slane %v3059, 1
  %v3088 = vrot.slane %v3060, 1
  %v3089 = vrot.slane %v3061, 1
  %v3090 = vrot.slane %v3062, 1
  %v3091 = vrot.slane %v3063, 1
  %v3092 = vrot.slane %v3064, 1
  %v3093 = vrot.slane %v3065, 1
  %v3094 = vrot.slane %v3066, 1
  %v3095 = vrot.slane %v3067, 1
  %v3096 = vrot.slane %v3068, 1
  %v3097 = vrot.slane %v3069, 1
  %v3112 = vadd.f32 %v3041, %v3084
  %v3113 = vadd.f32 %v3042, %v3085
  %v3114 = vadd.f32 %v3043, %v3086
  %v3115 = vadd.f32 %v3044, %v3087
  %v3116 = vadd.f32 %v3045, %v3088
  %v3117 = vadd.f32 %v3046, %v3089
  %v3118 = vadd.f32 %v3047, %v3090
  %v3119 = vadd.f32 %v3048, %v3091
  %v3120 = vadd.f32 %v3049, %v3092
  %v3121 = vadd.f32 %v3050, %v3093
  %v3122 = vadd.f32 %v3051, %v3094
  %v3123 = vadd.f32 %v3052, %v3095
  %v3124 = vadd.f32 %v3053, %v3096
  %v3125 = vadd.f32 %v3054, %v3097
  %v3126 = vperm.slane %v2994, 2
  %v3127 = vmul.f32 %v2998, %v3126
  %v3128 = vmul.f32 %v2999, %v3126
  %v3129 = vmul.f32 %v3000, %v3126
  %v3130 = vmul.f32 %v3001, %v3126
  %v3131 = vmul.f32 %v3002, %v3126
  %v3132 = vmul.f32 %v3003, %v3126
  %v3133 = vmul.f32 %v3004, %v3126
  %v3134 = vmul.f32 %v3005, %v3126
  %v3135 = vmul.f32 %v3006, %v3126
  %v3136 = vmul.f32 %v3007, %v3126
  %v3137 = vmul.f32 %v3008, %v3126
  %v3138 = vmul.f32 %v3009, %v3126
  %v3139 = vmul.f32 %v3010, %v3126
  %v3140 = vmul.f32 %v3011, %v3126
  %v3141 = vmul.f32 %v3012, %v3126
  %v3142 = vmul.f32 %v3013, %v3126
  %v3143 = vmul.f32 %v3014, %v3126
  %v3144 = vmul.f32 %v3015, %v3126
  %v3145 = vmul.f32 %v3016, %v3126
  %v3146 = vmul.f32 %v3017, %v3126
  %v3147 = vmul.f32 %v3018, %v3126
  %v3148 = vmul.f32 %v3019, %v3126
  %v3149 = vmul.f32 %v3020, %v3126
  %v3150 = vmul.f32 %v3021, %v3126
  %v3151 = vmul.f32 %v3022, %v3126
  %v3152 = vmul.f32 %v3023, %v3126
  %v3153 = vmul.f32 %v3024, %v3126
  %v3154 = vmul.f32 %v3025, %v3126
  %v3183 = vrot.slane %v3127, 2
  %v3184 = vrot.slane %v3128, 2
  %v3185 = vsel %vm464, %v3183, %v3184
  %v3186 = vrot.slane %v3129, 2
  %v3187 = vrot.slane %v3130, 2
  %v3188 = vsel %vm464, %v3186, %v3187
  %v3189 = vrot.slane %v3131, 2
  %v3190 = vrot.slane %v3132, 2
  %v3191 = vsel %vm464, %v3189, %v3190
  %v3192 = vrot.slane %v3133, 2
  %v3193 = vrot.slane %v3134, 2
  %v3194 = vsel %vm464, %v3192, %v3193
  %v3195 = vrot.slane %v3135, 2
  %v3196 = vrot.slane %v3136, 2
  %v3197 = vsel %vm464, %v3195, %v3196
  %v3198 = vrot.slane %v3137, 2
  %v3199 = vrot.slane %v3138, 2
  %v3200 = vsel %vm464, %v3198, %v3199
  %v3201 = vrot.slane %v3139, 2
  %v3202 = vrot.slane %v3140, 2
  %v3203 = vsel %vm464, %v3201, %v3202
  %v3204 = vrot.slane %v3141, 2
  %v3205 = vrot.slane %v3142, 2
  %v3206 = vsel %vm464, %v3204, %v3205
  %v3207 = vrot.slane %v3143, 2
  %v3208 = vrot.slane %v3144, 2
  %v3209 = vsel %vm464, %v3207, %v3208
  %v3210 = vrot.slane %v3145, 2
  %v3211 = vrot.slane %v3146, 2
  %v3212 = vsel %vm464, %v3210, %v3211
  %v3213 = vrot.slane %v3147, 2
  %v3214 = vrot.slane %v3148, 2
  %v3215 = vsel %vm464, %v3213, %v3214
  %v3216 = vrot.slane %v3149, 2
  %v3217 = vrot.slane %v3150, 2
  %v3218 = vsel %vm464, %v3216, %v3217
  %v3219 = vrot.slane %v3151, 2
  %v3220 = vrot.slane %v3152, 2
  %v3221 = vsel %vm464, %v3219, %v3220
  %v3222 = vrot.slane %v3153, 2
  %v3223 = vrot.slane %v3154, 2
  %v3224 = vsel %vm464, %v3222, %v3223
  %v3239 = vadd.f32 %v3112, %v3185
  %v3240 = vadd.f32 %v3113, %v3188
  %v3241 = vadd.f32 %v3114, %v3191
  %v3242 = vadd.f32 %v3115, %v3194
  %v3243 = vadd.f32 %v3116, %v3197
  %v3244 = vadd.f32 %v3117, %v3200
  %v3245 = vadd.f32 %v3118, %v3203
  %v3246 = vadd.f32 %v3119, %v3206
  %v3247 = vadd.f32 %v3120, %v3209
  %v3248 = vadd.f32 %v3121, %v3212
  %v3249 = vadd.f32 %v3122, %v3215
  %v3250 = vadd.f32 %v3123, %v3218
  %v3251 = vadd.f32 %v3124, %v3221
  %v3252 = vadd.f32 %v3125, %v3224
  %v3253 = vperm.slane %v2994, 3
  %v3254 = vmul.f32 %v2998, %v3253
  %v3255 = vmul.f32 %v2999, %v3253
  %v3256 = vmul.f32 %v3000, %v3253
  %v3257 = vmul.f32 %v3001, %v3253
  %v3258 = vmul.f32 %v3002, %v3253
  %v3259 = vmul.f32 %v3003, %v3253
  %v3260 = vmul.f32 %v3004, %v3253
  %v3261 = vmul.f32 %v3005, %v3253
  %v3262 = vmul.f32 %v3006, %v3253
  %v3263 = vmul.f32 %v3007, %v3253
  %v3264 = vmul.f32 %v3008, %v3253
  %v3265 = vmul.f32 %v3009, %v3253
  %v3266 = vmul.f32 %v3010, %v3253
  %v3267 = vmul.f32 %v3011, %v3253
  %v3268 = vmul.f32 %v3012, %v3253
  %v3269 = vmul.f32 %v3013, %v3253
  %v3270 = vmul.f32 %v3014, %v3253
  %v3271 = vmul.f32 %v3015, %v3253
  %v3272 = vmul.f32 %v3016, %v3253
  %v3273 = vmul.f32 %v3017, %v3253
  %v3274 = vmul.f32 %v3018, %v3253
  %v3275 = vmul.f32 %v3019, %v3253
  %v3276 = vmul.f32 %v3020, %v3253
  %v3277 = vmul.f32 %v3021, %v3253
  %v3278 = vmul.f32 %v3022, %v3253
  %v3279 = vmul.f32 %v3023, %v3253
  %v3280 = vmul.f32 %v3024, %v3253
  %v3281 = vmul.f32 %v3025, %v3253
  %v3310 = vrot.slane %v3254, 3
  %v3311 = vrot.slane %v3255, 3
  %v3312 = vsel %vm592, %v3310, %v3311
  %v3313 = vrot.slane %v3256, 3
  %v3314 = vrot.slane %v3257, 3
  %v3315 = vsel %vm592, %v3313, %v3314
  %v3316 = vrot.slane %v3258, 3
  %v3317 = vrot.slane %v3259, 3
  %v3318 = vsel %vm592, %v3316, %v3317
  %v3319 = vrot.slane %v3260, 3
  %v3320 = vrot.slane %v3261, 3
  %v3321 = vsel %vm592, %v3319, %v3320
  %v3322 = vrot.slane %v3262, 3
  %v3323 = vrot.slane %v3263, 3
  %v3324 = vsel %vm592, %v3322, %v3323
  %v3325 = vrot.slane %v3264, 3
  %v3326 = vrot.slane %v3265, 3
  %v3327 = vsel %vm592, %v3325, %v3326
  %v3328 = vrot.slane %v3266, 3
  %v3329 = vrot.slane %v3267, 3
  %v3330 = vsel %vm592, %v3328, %v3329
  %v3331 = vrot.slane %v3268, 3
  %v3332 = vrot.slane %v3269, 3
  %v3333 = vsel %vm592, %v3331, %v3332
  %v3334 = vrot.slane %v3270, 3
  %v3335 = vrot.slane %v3271, 3
  %v3336 = vsel %vm592, %v3334, %v3335
  %v3337 = vrot.slane %v3272, 3
  %v3338 = vrot.slane %v3273, 3
  %v3339 = vsel %vm592, %v3337, %v3338
  %v3340 = vrot.slane %v3274, 3
  %v3341 = vrot.slane %v3275, 3
  %v3342 = vsel %vm592, %v3340, %v3341
  %v3343 = vrot.slane %v3276, 3
  %v3344 = vrot.slane %v3277, 3
  %v3345 = vsel %vm592, %v3343, %v3344
  %v3346 = vrot.slane %v3278, 3
  %v3347 = vrot.slane %v3279, 3
  %v3348 = vsel %vm592, %v3346, %v3347
  %v3349 = vrot.slane %v3280, 3
  %v3350 = vrot.slane %v3281, 3
  %v3351 = vsel %vm592, %v3349, %v3350
  %v3366 = vadd.f32 %v3239, %v3312
  %v3367 = vadd.f32 %v3240, %v3315
  %v3368 = vadd.f32 %v3241, %v3318
  %v3369 = vadd.f32 %v3242, %v3321
  %v3370 = vadd.f32 %v3243, %v3324
  %v3371 = vadd.f32 %v3244, %v3327
  %v3372 = vadd.f32 %v3245, %v3330
  %v3373 = vadd.f32 %v3246, %v3333
  %v3374 = vadd.f32 %v3247, %v3336
  %v3375 = vadd.f32 %v3248, %v3339
  %v3376 = vadd.f32 %v3249, %v3342
  %v3377 = vadd.f32 %v3250, %v3345
  %v3378 = vadd.f32 %v3251, %v3348
  %v3379 = vadd.f32 %v3252, %v3351
  %v3380 = vperm.slane %v2994, 4
  %v3381 = vmul.f32 %v2998, %v3380
  %v3382 = vmul.f32 %v2999, %v3380
  %v3383 = vmul.f32 %v3000, %v3380
  %v3384 = vmul.f32 %v3001, %v3380
  %v3385 = vmul.f32 %v3002, %v3380
  %v3386 = vmul.f32 %v3003, %v3380
  %v3387 = vmul.f32 %v3004, %v3380
  %v3388 = vmul.f32 %v3005, %v3380
  %v3389 = vmul.f32 %v3006, %v3380
  %v3390 = vmul.f32 %v3007, %v3380
  %v3391 = vmul.f32 %v3008, %v3380
  %v3392 = vmul.f32 %v3009, %v3380
  %v3393 = vmul.f32 %v3010, %v3380
  %v3394 = vmul.f32 %v3011, %v3380
  %v3395 = vmul.f32 %v3012, %v3380
  %v3396 = vmul.f32 %v3013, %v3380
  %v3397 = vmul.f32 %v3014, %v3380
  %v3398 = vmul.f32 %v3015, %v3380
  %v3399 = vmul.f32 %v3016, %v3380
  %v3400 = vmul.f32 %v3017, %v3380
  %v3401 = vmul.f32 %v3018, %v3380
  %v3402 = vmul.f32 %v3019, %v3380
  %v3403 = vmul.f32 %v3020, %v3380
  %v3404 = vmul.f32 %v3021, %v3380
  %v3405 = vmul.f32 %v3022, %v3380
  %v3406 = vmul.f32 %v3023, %v3380
  %v3407 = vmul.f32 %v3024, %v3380
  %v3408 = vmul.f32 %v3025, %v3380
  %v3437 = vrot.slane %v3381, 4
  %v3438 = vrot.slane %v3382, 4
  %v3439 = vsel %vm720, %v3437, %v3438
  %v3440 = vrot.slane %v3383, 4
  %v3441 = vrot.slane %v3384, 4
  %v3442 = vsel %vm720, %v3440, %v3441
  %v3443 = vrot.slane %v3385, 4
  %v3444 = vrot.slane %v3386, 4
  %v3445 = vsel %vm720, %v3443, %v3444
  %v3446 = vrot.slane %v3387, 4
  %v3447 = vrot.slane %v3388, 4
  %v3448 = vsel %vm720, %v3446, %v3447
  %v3449 = vrot.slane %v3389, 4
  %v3450 = vrot.slane %v3390, 4
  %v3451 = vsel %vm720, %v3449, %v3450
  %v3452 = vrot.slane %v3391, 4
  %v3453 = vrot.slane %v3392, 4
  %v3454 = vsel %vm720, %v3452, %v3453
  %v3455 = vrot.slane %v3393, 4
  %v3456 = vrot.slane %v3394, 4
  %v3457 = vsel %vm720, %v3455, %v3456
  %v3458 = vrot.slane %v3395, 4
  %v3459 = vrot.slane %v3396, 4
  %v3460 = vsel %vm720, %v3458, %v3459
  %v3461 = vrot.slane %v3397, 4
  %v3462 = vrot.slane %v3398, 4
  %v3463 = vsel %vm720, %v3461, %v3462
  %v3464 = vrot.slane %v3399, 4
  %v3465 = vrot.slane %v3400, 4
  %v3466 = vsel %vm720, %v3464, %v3465
  %v3467 = vrot.slane %v3401, 4
  %v3468 = vrot.slane %v3402, 4
  %v3469 = vsel %vm720, %v3467, %v3468
  %v3470 = vrot.slane %v3403, 4
  %v3471 = vrot.slane %v3404, 4
  %v3472 = vsel %vm720, %v3470, %v3471
  %v3473 = vrot.slane %v3405, 4
  %v3474 = vrot.slane %v3406, 4
  %v3475 = vsel %vm720, %v3473, %v3474
  %v3476 = vrot.slane %v3407, 4
  %v3477 = vrot.slane %v3408, 4
  %v3478 = vsel %vm720, %v3476, %v3477
  %v3493 = vadd.f32 %v3366, %v3439
  %v3494 = vadd.f32 %v3367, %v3442
  %v3495 = vadd.f32 %v3368, %v3445
  %v3496 = vadd.f32 %v3369, %v3448
  %v3497 = vadd.f32 %v3370, %v3451
  %v3498 = vadd.f32 %v3371, %v3454
  %v3499 = vadd.f32 %v3372, %v3457
  %v3500 = vadd.f32 %v3373, %v3460
  %v3501 = vadd.f32 %v3374, %v3463
  %v3502 = vadd.f32 %v3375, %v3466
  %v3503 = vadd.f32 %v3376, %v3469
  %v3504 = vadd.f32 %v3377, %v3472
  %v3505 = vadd.f32 %v3378, %v3475
  %v3506 = vadd.f32 %v3379, %v3478
  %v3507 = vld [vmem:[%s791 + $0x8] sm:$0xff]
  %v3508 = vld [vmem:[%s791 + $0x18] sm:$0x7]
  %v3509 = vld [vmem:[%s791 + $0x28] sm:$0xff]
  %v3510 = vld [vmem:[%s791 + $0x38] sm:$0x7]
  %v3511 = vld [vmem:[%s791 + $0x48] sm:$0xff]
  %v3512 = vld [vmem:[%s791 + $0x58] sm:$0x7]
  %v3513 = vld [vmem:[%s791 + $0x68] sm:$0xff]
  %v3514 = vld [vmem:[%s791 + $0x78] sm:$0x7]
  %v3515 = vld [vmem:[%s791 + $0x88] sm:$0xff]
  %v3516 = vld [vmem:[%s791 + $0x98] sm:$0x7]
  %v3517 = vld [vmem:[%s791 + $0xa8] sm:$0xff]
  %v3518 = vld [vmem:[%s791 + $0xb8] sm:$0x7]
  %v3519 = vld [vmem:[%s791 + $0xc8] sm:$0xff]
  %v3520 = vld [vmem:[%s791 + $0xd8] sm:$0x7]
  %v3521 = vld [vmem:[%s791 + $0x168] sm:$0xff]
  %v3522 = vld [vmem:[%s791 + $0x178] sm:$0x7]
  %v3523 = vld [vmem:[%s791 + $0x188] sm:$0xff]
  %v3524 = vld [vmem:[%s791 + $0x198] sm:$0x7]
  %v3525 = vld [vmem:[%s791 + $0x1a8] sm:$0xff]
  %v3526 = vld [vmem:[%s791 + $0x1b8] sm:$0x7]
  %v3527 = vld [vmem:[%s791 + $0x1c8] sm:$0xff]
  %v3528 = vld [vmem:[%s791 + $0x1d8] sm:$0x7]
  %v3529 = vld [vmem:[%s791 + $0x1e8] sm:$0xff]
  %v3530 = vld [vmem:[%s791 + $0x1f8] sm:$0x7]
  %v3531 = vld [vmem:[%s791 + $0x208] sm:$0xff]
  %v3532 = vld [vmem:[%s791 + $0x218] sm:$0x7]
  %v3533 = vld [vmem:[%s791 + $0x228] sm:$0xff]
  %v3534 = vld [vmem:[%s791 + $0x238] sm:$0x7]
  %v3535 = vperm.slane %v2994, 5
  %v3536 = vmul.f32 %v3507, %v3535
  %v3537 = vmul.f32 %v3509, %v3535
  %v3538 = vmul.f32 %v3511, %v3535
  %v3539 = vmul.f32 %v3513, %v3535
  %v3540 = vmul.f32 %v3515, %v3535
  %v3541 = vmul.f32 %v3517, %v3535
  %v3542 = vmul.f32 %v3519, %v3535
  %v3543 = vmul.f32 %v3521, %v3535
  %v3544 = vmul.f32 %v3523, %v3535
  %v3545 = vmul.f32 %v3525, %v3535
  %v3546 = vmul.f32 %v3527, %v3535
  %v3547 = vmul.f32 %v3529, %v3535
  %v3548 = vmul.f32 %v3531, %v3535
  %v3549 = vmul.f32 %v3533, %v3535
  %v3550 = vadd.f32 %v3493, %v3536
  %v3551 = vadd.f32 %v3494, %v3537
  %v3552 = vadd.f32 %v3495, %v3538
  %v3553 = vadd.f32 %v3496, %v3539
  %v3554 = vadd.f32 %v3497, %v3540
  %v3555 = vadd.f32 %v3498, %v3541
  %v3556 = vadd.f32 %v3499, %v3542
  %v3557 = vadd.f32 %v3500, %v3543
  %v3558 = vadd.f32 %v3501, %v3544
  %v3559 = vadd.f32 %v3502, %v3545
  %v3560 = vadd.f32 %v3503, %v3546
  %v3561 = vadd.f32 %v3504, %v3547
  %v3562 = vadd.f32 %v3505, %v3548
  %v3563 = vadd.f32 %v3506, %v3549
  %v3564 = vperm.slane %v2994, 6
  %v3565 = vmul.f32 %v3507, %v3564
  %v3566 = vmul.f32 %v3509, %v3564
  %v3567 = vmul.f32 %v3511, %v3564
  %v3568 = vmul.f32 %v3513, %v3564
  %v3569 = vmul.f32 %v3515, %v3564
  %v3570 = vmul.f32 %v3517, %v3564
  %v3571 = vmul.f32 %v3519, %v3564
  %v3572 = vmul.f32 %v3521, %v3564
  %v3573 = vmul.f32 %v3523, %v3564
  %v3574 = vmul.f32 %v3525, %v3564
  %v3575 = vmul.f32 %v3527, %v3564
  %v3576 = vmul.f32 %v3529, %v3564
  %v3577 = vmul.f32 %v3531, %v3564
  %v3578 = vmul.f32 %v3533, %v3564
  %v3593 = vrot.slane %v3565, 1
  %v3594 = vrot.slane %v3566, 1
  %v3595 = vrot.slane %v3567, 1
  %v3596 = vrot.slane %v3568, 1
  %v3597 = vrot.slane %v3569, 1
  %v3598 = vrot.slane %v3570, 1
  %v3599 = vrot.slane %v3571, 1
  %v3600 = vrot.slane %v3572, 1
  %v3601 = vrot.slane %v3573, 1
  %v3602 = vrot.slane %v3574, 1
  %v3603 = vrot.slane %v3575, 1
  %v3604 = vrot.slane %v3576, 1
  %v3605 = vrot.slane %v3577, 1
  %v3606 = vrot.slane %v3578, 1
  %v3621 = vadd.f32 %v3550, %v3593
  %v3622 = vadd.f32 %v3551, %v3594
  %v3623 = vadd.f32 %v3552, %v3595
  %v3624 = vadd.f32 %v3553, %v3596
  %v3625 = vadd.f32 %v3554, %v3597
  %v3626 = vadd.f32 %v3555, %v3598
  %v3627 = vadd.f32 %v3556, %v3599
  %v3628 = vadd.f32 %v3557, %v3600
  %v3629 = vadd.f32 %v3558, %v3601
  %v3630 = vadd.f32 %v3559, %v3602
  %v3631 = vadd.f32 %v3560, %v3603
  %v3632 = vadd.f32 %v3561, %v3604
  %v3633 = vadd.f32 %v3562, %v3605
  %v3634 = vadd.f32 %v3563, %v3606
  %v3635 = vperm.slane %v2994, 7
  %v3636 = vmul.f32 %v3507, %v3635
  %v3637 = vmul.f32 %v3508, %v3635
  %v3638 = vmul.f32 %v3509, %v3635
  %v3639 = vmul.f32 %v3510, %v3635
  %v3640 = vmul.f32 %v3511, %v3635
  %v3641 = vmul.f32 %v3512, %v3635
  %v3642 = vmul.f32 %v3513, %v3635
  %v3643 = vmul.f32 %v3514, %v3635
  %v3644 = vmul.f32 %v3515, %v3635
  %v3645 = vmul.f32 %v3516, %v3635
  %v3646 = vmul.f32 %v3517, %v3635
  %v3647 = vmul.f32 %v3518, %v3635
  %v3648 = vmul.f32 %v3519, %v3635
  %v3649 = vmul.f32 %v3520, %v3635
  %v3650 = vmul.f32 %v3521, %v3635
  %v3651 = vmul.f32 %v3522, %v3635
  %v3652 = vmul.f32 %v3523, %v3635
  %v3653 = vmul.f32 %v3524, %v3635
  %v3654 = vmul.f32 %v3525, %v3635
  %v3655 = vmul.f32 %v3526, %v3635
  %v3656 = vmul.f32 %v3527, %v3635
  %v3657 = vmul.f32 %v3528, %v3635
  %v3658 = vmul.f32 %v3529, %v3635
  %v3659 = vmul.f32 %v3530, %v3635
  %v3660 = vmul.f32 %v3531, %v3635
  %v3661 = vmul.f32 %v3532, %v3635
  %v3662 = vmul.f32 %v3533, %v3635
  %v3663 = vmul.f32 %v3534, %v3635
  %v3692 = vrot.slane %v3636, 2
  %v3693 = vrot.slane %v3637, 2
  %v3694 = vsel %vm464, %v3692, %v3693
  %v3695 = vrot.slane %v3638, 2
  %v3696 = vrot.slane %v3639, 2
  %v3697 = vsel %vm464, %v3695, %v3696
  %v3698 = vrot.slane %v3640, 2
  %v3699 = vrot.slane %v3641, 2
  %v3700 = vsel %vm464, %v3698, %v3699
  %v3701 = vrot.slane %v3642, 2
  %v3702 = vrot.slane %v3643, 2
  %v3703 = vsel %vm464, %v3701, %v3702
  %v3704 = vrot.slane %v3644, 2
  %v3705 = vrot.slane %v3645, 2
  %v3706 = vsel %vm464, %v3704, %v3705
  %v3707 = vrot.slane %v3646, 2
  %v3708 = vrot.slane %v3647, 2
  %v3709 = vsel %vm464, %v3707, %v3708
  %v3710 = vrot.slane %v3648, 2
  %v3711 = vrot.slane %v3649, 2
  %v3712 = vsel %vm464, %v3710, %v3711
  %v3713 = vrot.slane %v3650, 2
  %v3714 = vrot.slane %v3651, 2
  %v3715 = vsel %vm464, %v3713, %v3714
  %v3716 = vrot.slane %v3652, 2
  %v3717 = vrot.slane %v3653, 2
  %v3718 = vsel %vm464, %v3716, %v3717
  %v3719 = vrot.slane %v3654, 2
  %v3720 = vrot.slane %v3655, 2
  %v3721 = vsel %vm464, %v3719, %v3720
  %v3722 = vrot.slane %v3656, 2
  %v3723 = vrot.slane %v3657, 2
  %v3724 = vsel %vm464, %v3722, %v3723
  %v3725 = vrot.slane %v3658, 2
  %v3726 = vrot.slane %v3659, 2
  %v3727 = vsel %vm464, %v3725, %v3726
  %v3728 = vrot.slane %v3660, 2
  %v3729 = vrot.slane %v3661, 2
  %v3730 = vsel %vm464, %v3728, %v3729
  %v3731 = vrot.slane %v3662, 2
  %v3732 = vrot.slane %v3663, 2
  %v3733 = vsel %vm464, %v3731, %v3732
  %v3748 = vadd.f32 %v3621, %v3694
  %v3749 = vadd.f32 %v3622, %v3697
  %v3750 = vadd.f32 %v3623, %v3700
  %v3751 = vadd.f32 %v3624, %v3703
  %v3752 = vadd.f32 %v3625, %v3706
  %v3753 = vadd.f32 %v3626, %v3709
  %v3754 = vadd.f32 %v3627, %v3712
  %v3755 = vadd.f32 %v3628, %v3715
  %v3756 = vadd.f32 %v3629, %v3718
  %v3757 = vadd.f32 %v3630, %v3721
  %v3758 = vadd.f32 %v3631, %v3724
  %v3759 = vadd.f32 %v3632, %v3727
  %v3760 = vadd.f32 %v3633, %v3730
  %v3761 = vadd.f32 %v3634, %v3733
  %v3762 = vperm.slane %v2995, 0
  %v3763 = vmul.f32 %v3507, %v3762
  %v3764 = vmul.f32 %v3508, %v3762
  %v3765 = vmul.f32 %v3509, %v3762
  %v3766 = vmul.f32 %v3510, %v3762
  %v3767 = vmul.f32 %v3511, %v3762
  %v3768 = vmul.f32 %v3512, %v3762
  %v3769 = vmul.f32 %v3513, %v3762
  %v3770 = vmul.f32 %v3514, %v3762
  %v3771 = vmul.f32 %v3515, %v3762
  %v3772 = vmul.f32 %v3516, %v3762
  %v3773 = vmul.f32 %v3517, %v3762
  %v3774 = vmul.f32 %v3518, %v3762
  %v3775 = vmul.f32 %v3519, %v3762
  %v3776 = vmul.f32 %v3520, %v3762
  %v3777 = vmul.f32 %v3521, %v3762
  %v3778 = vmul.f32 %v3522, %v3762
  %v3779 = vmul.f32 %v3523, %v3762
  %v3780 = vmul.f32 %v3524, %v3762
  %v3781 = vmul.f32 %v3525, %v3762
  %v3782 = vmul.f32 %v3526, %v3762
  %v3783 = vmul.f32 %v3527, %v3762
  %v3784 = vmul.f32 %v3528, %v3762
  %v3785 = vmul.f32 %v3529, %v3762
  %v3786 = vmul.f32 %v3530, %v3762
  %v3787 = vmul.f32 %v3531, %v3762
  %v3788 = vmul.f32 %v3532, %v3762
  %v3789 = vmul.f32 %v3533, %v3762
  %v3790 = vmul.f32 %v3534, %v3762
  %v3819 = vrot.slane %v3763, 3
  %v3820 = vrot.slane %v3764, 3
  %v3821 = vsel %vm592, %v3819, %v3820
  %v3822 = vrot.slane %v3765, 3
  %v3823 = vrot.slane %v3766, 3
  %v3824 = vsel %vm592, %v3822, %v3823
  %v3825 = vrot.slane %v3767, 3
  %v3826 = vrot.slane %v3768, 3
  %v3827 = vsel %vm592, %v3825, %v3826
  %v3828 = vrot.slane %v3769, 3
  %v3829 = vrot.slane %v3770, 3
  %v3830 = vsel %vm592, %v3828, %v3829
  %v3831 = vrot.slane %v3771, 3
  %v3832 = vrot.slane %v3772, 3
  %v3833 = vsel %vm592, %v3831, %v3832
  %v3834 = vrot.slane %v3773, 3
  %v3835 = vrot.slane %v3774, 3
  %v3836 = vsel %vm592, %v3834, %v3835
  %v3837 = vrot.slane %v3775, 3
  %v3838 = vrot.slane %v3776, 3
  %v3839 = vsel %vm592, %v3837, %v3838
  %v3840 = vrot.slane %v3777, 3
  %v3841 = vrot.slane %v3778, 3
  %v3842 = vsel %vm592, %v3840, %v3841
  %v3843 = vrot.slane %v3779, 3
  %v3844 = vrot.slane %v3780, 3
  %v3845 = vsel %vm592, %v3843, %v3844
  %v3846 = vrot.slane %v3781, 3
  %v3847 = vrot.slane %v3782, 3
  %v3848 = vsel %vm592, %v3846, %v3847
  %v3849 = vrot.slane %v3783, 3
  %v3850 = vrot.slane %v3784, 3
  %v3851 = vsel %vm592, %v3849, %v3850
  %v3852 = vrot.slane %v3785, 3
  %v3853 = vrot.slane %v3786, 3
  %v3854 = vsel %vm592, %v3852, %v3853
  %v3855 = vrot.slane %v3787, 3
  %v3856 = vrot.slane %v3788, 3
  %v3857 = vsel %vm592, %v3855, %v3856
  %v3858 = vrot.slane %v3789, 3
  %v3859 = vrot.slane %v3790, 3
  %v3860 = vsel %vm592, %v3858, %v3859
  %v3875 = vadd.f32 %v3748, %v3821
  %v3876 = vadd.f32 %v3749, %v3824
  %v3877 = vadd.f32 %v3750, %v3827
  %v3878 = vadd.f32 %v3751, %v3830
  %v3879 = vadd.f32 %v3752, %v3833
  %v3880 = vadd.f32 %v3753, %v3836
  %v3881 = vadd.f32 %v3754, %v3839
  %v3882 = vadd.f32 %v3755, %v3842
  %v3883 = vadd.f32 %v3756, %v3845
  %v3884 = vadd.f32 %v3757, %v3848
  %v3885 = vadd.f32 %v3758, %v3851
  %v3886 = vadd.f32 %v3759, %v3854
  %v3887 = vadd.f32 %v3760, %v3857
  %v3888 = vadd.f32 %v3761, %v3860
  %v3889 = vperm.slane %v2995, 1
  %v3890 = vmul.f32 %v3507, %v3889
  %v3891 = vmul.f32 %v3508, %v3889
  %v3892 = vmul.f32 %v3509, %v3889
  %v3893 = vmul.f32 %v3510, %v3889
  %v3894 = vmul.f32 %v3511, %v3889
  %v3895 = vmul.f32 %v3512, %v3889
  %v3896 = vmul.f32 %v3513, %v3889
  %v3897 = vmul.f32 %v3514, %v3889
  %v3898 = vmul.f32 %v3515, %v3889
  %v3899 = vmul.f32 %v3516, %v3889
  %v3900 = vmul.f32 %v3517, %v3889
  %v3901 = vmul.f32 %v3518, %v3889
  %v3902 = vmul.f32 %v3519, %v3889
  %v3903 = vmul.f32 %v3520, %v3889
  %v3904 = vmul.f32 %v3521, %v3889
  %v3905 = vmul.f32 %v3522, %v3889
  %v3906 = vmul.f32 %v3523, %v3889
  %v3907 = vmul.f32 %v3524, %v3889
  %v3908 = vmul.f32 %v3525, %v3889
  %v3909 = vmul.f32 %v3526, %v3889
  %v3910 = vmul.f32 %v3527, %v3889
  %v3911 = vmul.f32 %v3528, %v3889
  %v3912 = vmul.f32 %v3529, %v3889
  %v3913 = vmul.f32 %v3530, %v3889
  %v3914 = vmul.f32 %v3531, %v3889
  %v3915 = vmul.f32 %v3532, %v3889
  %v3916 = vmul.f32 %v3533, %v3889
  %v3917 = vmul.f32 %v3534, %v3889
  %v3946 = vrot.slane %v3890, 4
  %v3947 = vrot.slane %v3891, 4
  %v3948 = vsel %vm720, %v3946, %v3947
  %v3949 = vrot.slane %v3892, 4
  %v3950 = vrot.slane %v3893, 4
  %v3951 = vsel %vm720, %v3949, %v3950
  %v3952 = vrot.slane %v3894, 4
  %v3953 = vrot.slane %v3895, 4
  %v3954 = vsel %vm720, %v3952, %v3953
  %v3955 = vrot.slane %v3896, 4
  %v3956 = vrot.slane %v3897, 4
  %v3957 = vsel %vm720, %v3955, %v3956
  %v3958 = vrot.slane %v3898, 4
  %v3959 = vrot.slane %v3899, 4
  %v3960 = vsel %vm720, %v3958, %v3959
  %v3961 = vrot.slane %v3900, 4
  %v3962 = vrot.slane %v3901, 4
  %v3963 = vsel %vm720, %v3961, %v3962
  %v3964 = vrot.slane %v3902, 4
  %v3965 = vrot.slane %v3903, 4
  %v3966 = vsel %vm720, %v3964, %v3965
  %v3967 = vrot.slane %v3904, 4
  %v3968 = vrot.slane %v3905, 4
  %v3969 = vsel %vm720, %v3967, %v3968
  %v3970 = vrot.slane %v3906, 4
  %v3971 = vrot.slane %v3907, 4
  %v3972 = vsel %vm720, %v3970, %v3971
  %v3973 = vrot.slane %v3908, 4
  %v3974 = vrot.slane %v3909, 4
  %v3975 = vsel %vm720, %v3973, %v3974
  %v3976 = vrot.slane %v3910, 4
  %v3977 = vrot.slane %v3911, 4
  %v3978 = vsel %vm720, %v3976, %v3977
  %v3979 = vrot.slane %v3912, 4
  %v3980 = vrot.slane %v3913, 4
  %v3981 = vsel %vm720, %v3979, %v3980
  %v3982 = vrot.slane %v3914, 4
  %v3983 = vrot.slane %v3915, 4
  %v3984 = vsel %vm720, %v3982, %v3983
  %v3985 = vrot.slane %v3916, 4
  %v3986 = vrot.slane %v3917, 4
  %v3987 = vsel %vm720, %v3985, %v3986
  %v4002 = vadd.f32 %v3875, %v3948
  %v4003 = vadd.f32 %v3876, %v3951
  %v4004 = vadd.f32 %v3877, %v3954
  %v4005 = vadd.f32 %v3878, %v3957
  %v4006 = vadd.f32 %v3879, %v3960
  %v4007 = vadd.f32 %v3880, %v3963
  %v4008 = vadd.f32 %v3881, %v3966
  %v4009 = vadd.f32 %v3882, %v3969
  %v4010 = vadd.f32 %v3883, %v3972
  %v4011 = vadd.f32 %v3884, %v3975
  %v4012 = vadd.f32 %v3885, %v3978
  %v4013 = vadd.f32 %v3886, %v3981
  %v4014 = vadd.f32 %v3887, %v3984
  %v4015 = vadd.f32 %v3888, %v3987
  %v4016 = vld [vmem:[%s50 + $0x8] sm:$0xff]
  %v4017 = vld [vmem:[%s50 + $0x18] sm:$0x7]
  %v4018 = vld [vmem:[%s50 + $0x28] sm:$0xff]
  %v4019 = vld [vmem:[%s50 + $0x38] sm:$0x7]
  %v4020 = vld [vmem:[%s50 + $0x48] sm:$0xff]
  %v4021 = vld [vmem:[%s50 + $0x58] sm:$0x7]
  %v4022 = vld [vmem:[%s50 + $0x68] sm:$0xff]
  %v4023 = vld [vmem:[%s50 + $0x78] sm:$0x7]
  %v4024 = vld [vmem:[%s50 + $0x88] sm:$0xff]
  %v4025 = vld [vmem:[%s50 + $0x98] sm:$0x7]
  %v4026 = vld [vmem:[%s50 + $0xa8] sm:$0xff]
  %v4027 = vld [vmem:[%s50 + $0xb8] sm:$0x7]
  %v4028 = vld [vmem:[%s50 + $0xc8] sm:$0xff]
  %v4029 = vld [vmem:[%s50 + $0xd8] sm:$0x7]
  %v4030 = vld [vmem:[%s50 + $0x168] sm:$0xff]
  %v4031 = vld [vmem:[%s50 + $0x178] sm:$0x7]
  %v4032 = vld [vmem:[%s50 + $0x188] sm:$0xff]
  %v4033 = vld [vmem:[%s50 + $0x198] sm:$0x7]
  %v4034 = vld [vmem:[%s50 + $0x1a8] sm:$0xff]
  %v4035 = vld [vmem:[%s50 + $0x1b8] sm:$0x7]
  %v4036 = vld [vmem:[%s50 + $0x1c8] sm:$0xff]
  %v4037 = vld [vmem:[%s50 + $0x1d8] sm:$0x7]
  %v4038 = vld [vmem:[%s50 + $0x1e8] sm:$0xff]
  %v4039 = vld [vmem:[%s50 + $0x1f8] sm:$0x7]
  %v4040 = vld [vmem:[%s50 + $0x208] sm:$0xff]
  %v4041 = vld [vmem:[%s50 + $0x218] sm:$0x7]
  %v4042 = vld [vmem:[%s50 + $0x228] sm:$0xff]
  %v4043 = vld [vmem:[%s50 + $0x238] sm:$0x7]
  %v4044 = vperm.slane %v2995, 2
  %v4045 = vmul.f32 %v4016, %v4044
  %v4046 = vmul.f32 %v4018, %v4044
  %v4047 = vmul.f32 %v4020, %v4044
  %v4048 = vmul.f32 %v4022, %v4044
  %v4049 = vmul.f32 %v4024, %v4044
  %v4050 = vmul.f32 %v4026, %v4044
  %v4051 = vmul.f32 %v4028, %v4044
  %v4052 = vmul.f32 %v4030, %v4044
  %v4053 = vmul.f32 %v4032, %v4044
  %v4054 = vmul.f32 %v4034, %v4044
  %v4055 = vmul.f32 %v4036, %v4044
  %v4056 = vmul.f32 %v4038, %v4044
  %v4057 = vmul.f32 %v4040, %v4044
  %v4058 = vmul.f32 %v4042, %v4044
  %v4059 = vadd.f32 %v4002, %v4045
  %v4060 = vadd.f32 %v4003, %v4046
  %v4061 = vadd.f32 %v4004, %v4047
  %v4062 = vadd.f32 %v4005, %v4048
  %v4063 = vadd.f32 %v4006, %v4049
  %v4064 = vadd.f32 %v4007, %v4050
  %v4065 = vadd.f32 %v4008, %v4051
  %v4066 = vadd.f32 %v4009, %v4052
  %v4067 = vadd.f32 %v4010, %v4053
  %v4068 = vadd.f32 %v4011, %v4054
  %v4069 = vadd.f32 %v4012, %v4055
  %v4070 = vadd.f32 %v4013, %v4056
  %v4071 = vadd.f32 %v4014, %v4057
  %v4072 = vadd.f32 %v4015, %v4058
  %v4073 = vperm.slane %v2995, 3
  %v4074 = vmul.f32 %v4016, %v4073
  %v4075 = vmul.f32 %v4018, %v4073
  %v4076 = vmul.f32 %v4020, %v4073
  %v4077 = vmul.f32 %v4022, %v4073
  %v4078 = vmul.f32 %v4024, %v4073
  %v4079 = vmul.f32 %v4026, %v4073
  %v4080 = vmul.f32 %v4028, %v4073
  %v4081 = vmul.f32 %v4030, %v4073
  %v4082 = vmul.f32 %v4032, %v4073
  %v4083 = vmul.f32 %v4034, %v4073
  %v4084 = vmul.f32 %v4036, %v4073
  %v4085 = vmul.f32 %v4038, %v4073
  %v4086 = vmul.f32 %v4040, %v4073
  %v4087 = vmul.f32 %v4042, %v4073
  %v4102 = vrot.slane %v4074, 1
  %v4103 = vrot.slane %v4075, 1
  %v4104 = vrot.slane %v4076, 1
  %v4105 = vrot.slane %v4077, 1
  %v4106 = vrot.slane %v4078, 1
  %v4107 = vrot.slane %v4079, 1
  %v4108 = vrot.slane %v4080, 1
  %v4109 = vrot.slane %v4081, 1
  %v4110 = vrot.slane %v4082, 1
  %v4111 = vrot.slane %v4083, 1
  %v4112 = vrot.slane %v4084, 1
  %v4113 = vrot.slane %v4085, 1
  %v4114 = vrot.slane %v4086, 1
  %v4115 = vrot.slane %v4087, 1
  %v4130 = vadd.f32 %v4059, %v4102
  %v4131 = vadd.f32 %v4060, %v4103
  %v4132 = vadd.f32 %v4061, %v4104
  %v4133 = vadd.f32 %v4062, %v4105
  %v4134 = vadd.f32 %v4063, %v4106
  %v4135 = vadd.f32 %v4064, %v4107
  %v4136 = vadd.f32 %v4065, %v4108
  %v4137 = vadd.f32 %v4066, %v4109
  %v4138 = vadd.f32 %v4067, %v4110
  %v4139 = vadd.f32 %v4068, %v4111
  %v4140 = vadd.f32 %v4069, %v4112
  %v4141 = vadd.f32 %v4070, %v4113
  %v4142 = vadd.f32 %v4071, %v4114
  %v4143 = vadd.f32 %v4072, %v4115
  %v4144 = vperm.slane %v2995, 4
  %v4145 = vmul.f32 %v4016, %v4144
  %v4146 = vmul.f32 %v4017, %v4144
  %v4147 = vmul.f32 %v4018, %v4144
  %v4148 = vmul.f32 %v4019, %v4144
  %v4149 = vmul.f32 %v4020, %v4144
  %v4150 = vmul.f32 %v4021, %v4144
  %v4151 = vmul.f32 %v4022, %v4144
  %v4152 = vmul.f32 %v4023, %v4144
  %v4153 = vmul.f32 %v4024, %v4144
  %v4154 = vmul.f32 %v4025, %v4144
  %v4155 = vmul.f32 %v4026, %v4144
  %v4156 = vmul.f32 %v4027, %v4144
  %v4157 = vmul.f32 %v4028, %v4144
  %v4158 = vmul.f32 %v4029, %v4144
  %v4159 = vmul.f32 %v4030, %v4144
  %v4160 = vmul.f32 %v4031, %v4144
  %v4161 = vmul.f32 %v4032, %v4144
  %v4162 = vmul.f32 %v4033, %v4144
  %v4163 = vmul.f32 %v4034, %v4144
  %v4164 = vmul.f32 %v4035, %v4144
  %v4165 = vmul.f32 %v4036, %v4144
  %v4166 = vmul.f32 %v4037, %v4144
  %v4167 = vmul.f32 %v4038, %v4144
  %v4168 = vmul.f32 %v4039, %v4144
  %v4169 = vmul.f32 %v4040, %v4144
  %v4170 = vmul.f32 %v4041, %v4144
  %v4171 = vmul.f32 %v4042, %v4144
  %v4172 = vmul.f32 %v4043, %v4144
  %v4201 = vrot.slane %v4145, 2
  %v4202 = vrot.slane %v4146, 2
  %v4203 = vsel %vm464, %v4201, %v4202
  %v4204 = vrot.slane %v4147, 2
  %v4205 = vrot.slane %v4148, 2
  %v4206 = vsel %vm464, %v4204, %v4205
  %v4207 = vrot.slane %v4149, 2
  %v4208 = vrot.slane %v4150, 2
  %v4209 = vsel %vm464, %v4207, %v4208
  %v4210 = vrot.slane %v4151, 2
  %v4211 = vrot.slane %v4152, 2
  %v4212 = vsel %vm464, %v4210, %v4211
  %v4213 = vrot.slane %v4153, 2
  %v4214 = vrot.slane %v4154, 2
  %v4215 = vsel %vm464, %v4213, %v4214
  %v4216 = vrot.slane %v4155, 2
  %v4217 = vrot.slane %v4156, 2
  %v4218 = vsel %vm464, %v4216, %v4217
  %v4219 = vrot.slane %v4157, 2
  %v4220 = vrot.slane %v4158, 2
  %v4221 = vsel %vm464, %v4219, %v4220
  %v4222 = vrot.slane %v4159, 2
  %v4223 = vrot.slane %v4160, 2
  %v4224 = vsel %vm464, %v4222, %v4223
  %v4225 = vrot.slane %v4161, 2
  %v4226 = vrot.slane %v4162, 2
  %v4227 = vsel %vm464, %v4225, %v4226
  %v4228 = vrot.slane %v4163, 2
  %v4229 = vrot.slane %v4164, 2
  %v4230 = vsel %vm464, %v4228, %v4229
  %v4231 = vrot.slane %v4165, 2
  %v4232 = vrot.slane %v4166, 2
  %v4233 = vsel %vm464, %v4231, %v4232
  %v4234 = vrot.slane %v4167, 2
  %v4235 = vrot.slane %v4168, 2
  %v4236 = vsel %vm464, %v4234, %v4235
  %v4237 = vrot.slane %v4169, 2
  %v4238 = vrot.slane %v4170, 2
  %v4239 = vsel %vm464, %v4237, %v4238
  %v4240 = vrot.slane %v4171, 2
  %v4241 = vrot.slane %v4172, 2
  %v4242 = vsel %vm464, %v4240, %v4241
  %v4257 = vadd.f32 %v4130, %v4203
  %v4258 = vadd.f32 %v4131, %v4206
  %v4259 = vadd.f32 %v4132, %v4209
  %v4260 = vadd.f32 %v4133, %v4212
  %v4261 = vadd.f32 %v4134, %v4215
  %v4262 = vadd.f32 %v4135, %v4218
  %v4263 = vadd.f32 %v4136, %v4221
  %v4264 = vadd.f32 %v4137, %v4224
  %v4265 = vadd.f32 %v4138, %v4227
  %v4266 = vadd.f32 %v4139, %v4230
  %v4267 = vadd.f32 %v4140, %v4233
  %v4268 = vadd.f32 %v4141, %v4236
  %v4269 = vadd.f32 %v4142, %v4239
  %v4270 = vadd.f32 %v4143, %v4242
  %v4271 = vperm.slane %v2995, 5
  %v4272 = vmul.f32 %v4016, %v4271
  %v4273 = vmul.f32 %v4017, %v4271
  %v4274 = vmul.f32 %v4018, %v4271
  %v4275 = vmul.f32 %v4019, %v4271
  %v4276 = vmul.f32 %v4020, %v4271
  %v4277 = vmul.f32 %v4021, %v4271
  %v4278 = vmul.f32 %v4022, %v4271
  %v4279 = vmul.f32 %v4023, %v4271
  %v4280 = vmul.f32 %v4024, %v4271
  %v4281 = vmul.f32 %v4025, %v4271
  %v4282 = vmul.f32 %v4026, %v4271
  %v4283 = vmul.f32 %v4027, %v4271
  %v4284 = vmul.f32 %v4028, %v4271
  %v4285 = vmul.f32 %v4029, %v4271
  %v4286 = vmul.f32 %v4030, %v4271
  %v4287 = vmul.f32 %v4031, %v4271
  %v4288 = vmul.f32 %v4032, %v4271
  %v4289 = vmul.f32 %v4033, %v4271
  %v4290 = vmul.f32 %v4034, %v4271
  %v4291 = vmul.f32 %v4035, %v4271
  %v4292 = vmul.f32 %v4036, %v4271
  %v4293 = vmul.f32 %v4037, %v4271
  %v4294 = vmul.f32 %v4038, %v4271
  %v4295 = vmul.f32 %v4039, %v4271
  %v4296 = vmul.f32 %v4040, %v4271
  %v4297 = vmul.f32 %v4041, %v4271
  %v4298 = vmul.f32 %v4042, %v4271
  %v4299 = vmul.f32 %v4043, %v4271
  %v4328 = vrot.slane %v4272, 3
  %v4329 = vrot.slane %v4273, 3
  %v4330 = vsel %vm592, %v4328, %v4329
  %v4331 = vrot.slane %v4274, 3
  %v4332 = vrot.slane %v4275, 3
  %v4333 = vsel %vm592, %v4331, %v4332
  %v4334 = vrot.slane %v4276, 3
  %v4335 = vrot.slane %v4277, 3
  %v4336 = vsel %vm592, %v4334, %v4335
  %v4337 = vrot.slane %v4278, 3
  %v4338 = vrot.slane %v4279, 3
  %v4339 = vsel %vm592, %v4337, %v4338
  %v4340 = vrot.slane %v4280, 3
  %v4341 = vrot.slane %v4281, 3
  %v4342 = vsel %vm592, %v4340, %v4341
  %v4343 = vrot.slane %v4282, 3
  %v4344 = vrot.slane %v4283, 3
  %v4345 = vsel %vm592, %v4343, %v4344
  %v4346 = vrot.slane %v4284, 3
  %v4347 = vrot.slane %v4285, 3
  %v4348 = vsel %vm592, %v4346, %v4347
  %v4349 = vrot.slane %v4286, 3
  %v4350 = vrot.slane %v4287, 3
  %v4351 = vsel %vm592, %v4349, %v4350
  %v4352 = vrot.slane %v4288, 3
  %v4353 = vrot.slane %v4289, 3
  %v4354 = vsel %vm592, %v4352, %v4353
  %v4355 = vrot.slane %v4290, 3
  %v4356 = vrot.slane %v4291, 3
  %v4357 = vsel %vm592, %v4355, %v4356
  %v4358 = vrot.slane %v4292, 3
  %v4359 = vrot.slane %v4293, 3
  %v4360 = vsel %vm592, %v4358, %v4359
  %v4361 = vrot.slane %v4294, 3
  %v4362 = vrot.slane %v4295, 3
  %v4363 = vsel %vm592, %v4361, %v4362
  %v4364 = vrot.slane %v4296, 3
  %v4365 = vrot.slane %v4297, 3
  %v4366 = vsel %vm592, %v4364, %v4365
  %v4367 = vrot.slane %v4298, 3
  %v4368 = vrot.slane %v4299, 3
  %v4369 = vsel %vm592, %v4367, %v4368
  %v4384 = vadd.f32 %v4257, %v4330
  %v4385 = vadd.f32 %v4258, %v4333
  %v4386 = vadd.f32 %v4259, %v4336
  %v4387 = vadd.f32 %v4260, %v4339
  %v4388 = vadd.f32 %v4261, %v4342
  %v4389 = vadd.f32 %v4262, %v4345
  %v4390 = vadd.f32 %v4263, %v4348
  %v4391 = vadd.f32 %v4264, %v4351
  %v4392 = vadd.f32 %v4265, %v4354
  %v4393 = vadd.f32 %v4266, %v4357
  %v4394 = vadd.f32 %v4267, %v4360
  %v4395 = vadd.f32 %v4268, %v4363
  %v4396 = vadd.f32 %v4269, %v4366
  %v4397 = vadd.f32 %v4270, %v4369
  %v4398 = vperm.slane %v2995, 6
  %v4399 = vmul.f32 %v4016, %v4398
  %v4400 = vmul.f32 %v4017, %v4398
  %v4401 = vmul.f32 %v4018, %v4398
  %v4402 = vmul.f32 %v4019, %v4398
  %v4403 = vmul.f32 %v4020, %v4398
  %v4404 = vmul.f32 %v4021, %v4398
  %v4405 = vmul.f32 %v4022, %v4398
  %v4406 = vmul.f32 %v4023, %v4398
  %v4407 = vmul.f32 %v4024, %v4398
  %v4408 = vmul.f32 %v4025, %v4398
  %v4409 = vmul.f32 %v4026, %v4398
  %v4410 = vmul.f32 %v4027, %v4398
  %v4411 = vmul.f32 %v4028, %v4398
  %v4412 = vmul.f32 %v4029, %v4398
  %v4413 = vmul.f32 %v4030, %v4398
  %v4414 = vmul.f32 %v4031, %v4398
  %v4415 = vmul.f32 %v4032, %v4398
  %v4416 = vmul.f32 %v4033, %v4398
  %v4417 = vmul.f32 %v4034, %v4398
  %v4418 = vmul.f32 %v4035, %v4398
  %v4419 = vmul.f32 %v4036, %v4398
  %v4420 = vmul.f32 %v4037, %v4398
  %v4421 = vmul.f32 %v4038, %v4398
  %v4422 = vmul.f32 %v4039, %v4398
  %v4423 = vmul.f32 %v4040, %v4398
  %v4424 = vmul.f32 %v4041, %v4398
  %v4425 = vmul.f32 %v4042, %v4398
  %v4426 = vmul.f32 %v4043, %v4398
  %v4455 = vrot.slane %v4399, 4
  %v4456 = vrot.slane %v4400, 4
  %v4457 = vsel %vm720, %v4455, %v4456
  %v4458 = vrot.slane %v4401, 4
  %v4459 = vrot.slane %v4402, 4
  %v4460 = vsel %vm720, %v4458, %v4459
  %v4461 = vrot.slane %v4403, 4
  %v4462 = vrot.slane %v4404, 4
  %v4463 = vsel %vm720, %v4461, %v4462
  %v4464 = vrot.slane %v4405, 4
  %v4465 = vrot.slane %v4406, 4
  %v4466 = vsel %vm720, %v4464, %v4465
  %v4467 = vrot.slane %v4407, 4
  %v4468 = vrot.slane %v4408, 4
  %v4469 = vsel %vm720, %v4467, %v4468
  %v4470 = vrot.slane %v4409, 4
  %v4471 = vrot.slane %v4410, 4
  %v4472 = vsel %vm720, %v4470, %v4471
  %v4473 = vrot.slane %v4411, 4
  %v4474 = vrot.slane %v4412, 4
  %v4475 = vsel %vm720, %v4473, %v4474
  %v4476 = vrot.slane %v4413, 4
  %v4477 = vrot.slane %v4414, 4
  %v4478 = vsel %vm720, %v4476, %v4477
  %v4479 = vrot.slane %v4415, 4
  %v4480 = vrot.slane %v4416, 4
  %v4481 = vsel %vm720, %v4479, %v4480
  %v4482 = vrot.slane %v4417, 4
  %v4483 = vrot.slane %v4418, 4
  %v4484 = vsel %vm720, %v4482, %v4483
  %v4485 = vrot.slane %v4419, 4
  %v4486 = vrot.slane %v4420, 4
  %v4487 = vsel %vm720, %v4485, %v4486
  %v4488 = vrot.slane %v4421, 4
  %v4489 = vrot.slane %v4422, 4
  %v4490 = vsel %vm720, %v4488, %v4489
  %v4491 = vrot.slane %v4423, 4
  %v4492 = vrot.slane %v4424, 4
  %v4493 = vsel %vm720, %v4491, %v4492
  %v4494 = vrot.slane %v4425, 4
  %v4495 = vrot.slane %v4426, 4
  %v4496 = vsel %vm720, %v4494, %v4495
  %v4511 = vadd.f32 %v4384, %v4457
  %v4512 = vadd.f32 %v4385, %v4460
  %v4513 = vadd.f32 %v4386, %v4463
  %v4514 = vadd.f32 %v4387, %v4466
  %v4515 = vadd.f32 %v4388, %v4469
  %v4516 = vadd.f32 %v4389, %v4472
  %v4517 = vadd.f32 %v4390, %v4475
  %v4518 = vadd.f32 %v4391, %v4478
  %v4519 = vadd.f32 %v4392, %v4481
  %v4520 = vadd.f32 %v4393, %v4484
  %v4521 = vadd.f32 %v4394, %v4487
  %v4522 = vadd.f32 %v4395, %v4490
  %v4523 = vadd.f32 %v4396, %v4493
  %v4524 = vadd.f32 %v4397, %v4496
  %v4525 = vld [vmem:[%s1810 + $0x8] sm:$0xff]
  %v4526 = vld [vmem:[%s1810 + $0x18] sm:$0x7]
  %v4527 = vld [vmem:[%s1810 + $0x28] sm:$0xff]
  %v4528 = vld [vmem:[%s1810 + $0x38] sm:$0x7]
  %v4529 = vld [vmem:[%s1810 + $0x48] sm:$0xff]
  %v4530 = vld [vmem:[%s1810 + $0x58] sm:$0x7]
  %v4531 = vld [vmem:[%s1810 + $0x68] sm:$0xff]
  %v4532 = vld [vmem:[%s1810 + $0x78] sm:$0x7]
  %v4533 = vld [vmem:[%s1810 + $0x88] sm:$0xff]
  %v4534 = vld [vmem:[%s1810 + $0x98] sm:$0x7]
  %v4535 = vld [vmem:[%s1810 + $0xa8] sm:$0xff]
  %v4536 = vld [vmem:[%s1810 + $0xb8] sm:$0x7]
  %v4537 = vld [vmem:[%s1810 + $0xc8] sm:$0xff]
  %v4538 = vld [vmem:[%s1810 + $0xd8] sm:$0x7]
  %v4539 = vld [vmem:[%s1810 + $0x168] sm:$0xff]
  %v4540 = vld [vmem:[%s1810 + $0x178] sm:$0x7]
  %v4541 = vld [vmem:[%s1810 + $0x188] sm:$0xff]
  %v4542 = vld [vmem:[%s1810 + $0x198] sm:$0x7]
  %v4543 = vld [vmem:[%s1810 + $0x1a8] sm:$0xff]
  %v4544 = vld [vmem:[%s1810 + $0x1b8] sm:$0x7]
  %v4545 = vld [vmem:[%s1810 + $0x1c8] sm:$0xff]
  %v4546 = vld [vmem:[%s1810 + $0x1d8] sm:$0x7]
  %v4547 = vld [vmem:[%s1810 + $0x1e8] sm:$0xff]
  %v4548 = vld [vmem:[%s1810 + $0x1f8] sm:$0x7]
  %v4549 = vld [vmem:[%s1810 + $0x208] sm:$0xff]
  %v4550 = vld [vmem:[%s1810 + $0x218] sm:$0x7]
  %v4551 = vld [vmem:[%s1810 + $0x228] sm:$0xff]
  %v4552 = vld [vmem:[%s1810 + $0x238] sm:$0x7]
  %v4553 = vperm.slane %v2995, 7
  %v4554 = vmul.f32 %v4525, %v4553
  %v4555 = vmul.f32 %v4527, %v4553
  %v4556 = vmul.f32 %v4529, %v4553
  %v4557 = vmul.f32 %v4531, %v4553
  %v4558 = vmul.f32 %v4533, %v4553
  %v4559 = vmul.f32 %v4535, %v4553
  %v4560 = vmul.f32 %v4537, %v4553
  %v4561 = vmul.f32 %v4539, %v4553
  %v4562 = vmul.f32 %v4541, %v4553
  %v4563 = vmul.f32 %v4543, %v4553
  %v4564 = vmul.f32 %v4545, %v4553
  %v4565 = vmul.f32 %v4547, %v4553
  %v4566 = vmul.f32 %v4549, %v4553
  %v4567 = vmul.f32 %v4551, %v4553
  %v4568 = vadd.f32 %v4511, %v4554
  %v4569 = vadd.f32 %v4512, %v4555
  %v4570 = vadd.f32 %v4513, %v4556
  %v4571 = vadd.f32 %v4514, %v4557
  %v4572 = vadd.f32 %v4515, %v4558
  %v4573 = vadd.f32 %v4516, %v4559
  %v4574 = vadd.f32 %v4517, %v4560
  %v4575 = vadd.f32 %v4518, %v4561
  %v4576 = vadd.f32 %v4519, %v4562
  %v4577 = vadd.f32 %v4520, %v4563
  %v4578 = vadd.f32 %v4521, %v4564
  %v4579 = vadd.f32 %v4522, %v4565
  %v4580 = vadd.f32 %v4523, %v4566
  %v4581 = vadd.f32 %v4524, %v4567
  %v4582 = vperm.slane %v2996, 0
  %v4583 = vmul.f32 %v4525, %v4582
  %v4584 = vmul.f32 %v4527, %v4582
  %v4585 = vmul.f32 %v4529, %v4582
  %v4586 = vmul.f32 %v4531, %v4582
  %v4587 = vmul.f32 %v4533, %v4582
  %v4588 = vmul.f32 %v4535, %v4582
  %v4589 = vmul.f32 %v4537, %v4582
  %v4590 = vmul.f32 %v4539, %v4582
  %v4591 = vmul.f32 %v4541, %v4582
  %v4592 = vmul.f32 %v4543, %v4582
  %v4593 = vmul.f32 %v4545, %v4582
  %v4594 = vmul.f32 %v4547, %v4582
  %v4595 = vmul.f32 %v4549, %v4582
  %v4596 = vmul.f32 %v4551, %v4582
  %v4611 = vrot.slane %v4583, 1
  %v4612 = vrot.slane %v4584, 1
  %v4613 = vrot.slane %v4585, 1
  %v4614 = vrot.slane %v4586, 1
  %v4615 = vrot.slane %v4587, 1
  %v4616 = vrot.slane %v4588, 1
  %v4617 = vrot.slane %v4589, 1
  %v4618 = vrot.slane %v4590, 1
  %v4619 = vrot.slane %v4591, 1
  %v4620 = vrot.slane %v4592, 1
  %v4621 = vrot.slane %v4593, 1
  %v4622 = vrot.slane %v4594, 1
  %v4623 = vrot.slane %v4595, 1
  %v4624 = vrot.slane %v4596, 1
  %v4639 = vadd.f32 %v4568, %v4611
  %v4640 = vadd.f32 %v4569, %v4612
  %v4641 = vadd.f32 %v4570, %v4613
  %v4642 = vadd.f32 %v4571, %v4614
  %v4643 = vadd.f32 %v4572, %v4615
  %v4644 = vadd.f32 %v4573, %v4616
  %v4645 = vadd.f32 %v4574, %v4617
  %v4646 = vadd.f32 %v4575, %v4618
  %v4647 = vadd.f32 %v4576, %v4619
  %v4648 = vadd.f32 %v4577, %v4620
  %v4649 = vadd.f32 %v4578, %v4621
  %v4650 = vadd.f32 %v4579, %v4622
  %v4651 = vadd.f32 %v4580, %v4623
  %v4652 = vadd.f32 %v4581, %v4624
  %v4653 = vperm.slane %v2996, 1
  %v4654 = vmul.f32 %v4525, %v4653
  %v4655 = vmul.f32 %v4526, %v4653
  %v4656 = vmul.f32 %v4527, %v4653
  %v4657 = vmul.f32 %v4528, %v4653
  %v4658 = vmul.f32 %v4529, %v4653
  %v4659 = vmul.f32 %v4530, %v4653
  %v4660 = vmul.f32 %v4531, %v4653
  %v4661 = vmul.f32 %v4532, %v4653
  %v4662 = vmul.f32 %v4533, %v4653
  %v4663 = vmul.f32 %v4534, %v4653
  %v4664 = vmul.f32 %v4535, %v4653
  %v4665 = vmul.f32 %v4536, %v4653
  %v4666 = vmul.f32 %v4537, %v4653
  %v4667 = vmul.f32 %v4538, %v4653
  %v4668 = vmul.f32 %v4539, %v4653
  %v4669 = vmul.f32 %v4540, %v4653
  %v4670 = vmul.f32 %v4541, %v4653
  %v4671 = vmul.f32 %v4542, %v4653
  %v4672 = vmul.f32 %v4543, %v4653
  %v4673 = vmul.f32 %v4544, %v4653
  %v4674 = vmul.f32 %v4545, %v4653
  %v4675 = vmul.f32 %v4546, %v4653
  %v4676 = vmul.f32 %v4547, %v4653
  %v4677 = vmul.f32 %v4548, %v4653
  %v4678 = vmul.f32 %v4549, %v4653
  %v4679 = vmul.f32 %v4550, %v4653
  %v4680 = vmul.f32 %v4551, %v4653
  %v4681 = vmul.f32 %v4552, %v4653
  %v4710 = vrot.slane %v4654, 2
  %v4711 = vrot.slane %v4655, 2
  %v4712 = vsel %vm464, %v4710, %v4711
  %v4713 = vrot.slane %v4656, 2
  %v4714 = vrot.slane %v4657, 2
  %v4715 = vsel %vm464, %v4713, %v4714
  %v4716 = vrot.slane %v4658, 2
  %v4717 = vrot.slane %v4659, 2
  %v4718 = vsel %vm464, %v4716, %v4717
  %v4719 = vrot.slane %v4660, 2
  %v4720 = vrot.slane %v4661, 2
  %v4721 = vsel %vm464, %v4719, %v4720
  %v4722 = vrot.slane %v4662, 2
  %v4723 = vrot.slane %v4663, 2
  %v4724 = vsel %vm464, %v4722, %v4723
  %v4725 = vrot.slane %v4664, 2
  %v4726 = vrot.slane %v4665, 2
  %v4727 = vsel %vm464, %v4725, %v4726
  %v4728 = vrot.slane %v4666, 2
  %v4729 = vrot.slane %v4667, 2
  %v4730 = vsel %vm464, %v4728, %v4729
  %v4731 = vrot.slane %v4668, 2
  %v4732 = vrot.slane %v4669, 2
  %v4733 = vsel %vm464, %v4731, %v4732
  %v4734 = vrot.slane %v4670, 2
  %v4735 = vrot.slane %v4671, 2
  %v4736 = vsel %vm464, %v4734, %v4735
  %v4737 = vrot.slane %v4672, 2
  %v4738 = vrot.slane %v4673, 2
  %v4739 = vsel %vm464, %v4737, %v4738
  %v4740 = vrot.slane %v4674, 2
  %v4741 = vrot.slane %v4675, 2
  %v4742 = vsel %vm464, %v4740, %v4741
  %v4743 = vrot.slane %v4676, 2
  %v4744 = vrot.slane %v4677, 2
  %v4745 = vsel %vm464, %v4743, %v4744
  %v4746 = vrot.slane %v4678, 2
  %v4747 = vrot.slane %v4679, 2
  %v4748 = vsel %vm464, %v4746, %v4747
  %v4749 = vrot.slane %v4680, 2
  %v4750 = vrot.slane %v4681, 2
  %v4751 = vsel %vm464, %v4749, %v4750
  %v4766 = vadd.f32 %v4639, %v4712
  %v4767 = vadd.f32 %v4640, %v4715
  %v4768 = vadd.f32 %v4641, %v4718
  %v4769 = vadd.f32 %v4642, %v4721
  %v4770 = vadd.f32 %v4643, %v4724
  %v4771 = vadd.f32 %v4644, %v4727
  %v4772 = vadd.f32 %v4645, %v4730
  %v4773 = vadd.f32 %v4646, %v4733
  %v4774 = vadd.f32 %v4647, %v4736
  %v4775 = vadd.f32 %v4648, %v4739
  %v4776 = vadd.f32 %v4649, %v4742
  %v4777 = vadd.f32 %v4650, %v4745
  %v4778 = vadd.f32 %v4651, %v4748
  %v4779 = vadd.f32 %v4652, %v4751
  %v4780 = vperm.slane %v2996, 2
  %v4781 = vmul.f32 %v4525, %v4780
  %v4782 = vmul.f32 %v4526, %v4780
  %v4783 = vmul.f32 %v4527, %v4780
  %v4784 = vmul.f32 %v4528, %v4780
  %v4785 = vmul.f32 %v4529, %v4780
  %v4786 = vmul.f32 %v4530, %v4780
  %v4787 = vmul.f32 %v4531, %v4780
  %v4788 = vmul.f32 %v4532, %v4780
  %v4789 = vmul.f32 %v4533, %v4780
  %v4790 = vmul.f32 %v4534, %v4780
  %v4791 = vmul.f32 %v4535, %v4780
  %v4792 = vmul.f32 %v4536, %v4780
  %v4793 = vmul.f32 %v4537, %v4780
  %v4794 = vmul.f32 %v4538, %v4780
  %v4795 = vmul.f32 %v4539, %v4780
  %v4796 = vmul.f32 %v4540, %v4780
  %v4797 = vmul.f32 %v4541, %v4780
  %v4798 = vmul.f32 %v4542, %v4780
  %v4799 = vmul.f32 %v4543, %v4780
  %v4800 = vmul.f32 %v4544, %v4780
  %v4801 = vmul.f32 %v4545, %v4780
  %v4802 = vmul.f32 %v4546, %v4780
  %v4803 = vmul.f32 %v4547, %v4780
  %v4804 = vmul.f32 %v4548, %v4780
  %v4805 = vmul.f32 %v4549, %v4780
  %v4806 = vmul.f32 %v4550, %v4780
  %v4807 = vmul.f32 %v4551, %v4780
  %v4808 = vmul.f32 %v4552, %v4780
  %v4837 = vrot.slane %v4781, 3
  %v4838 = vrot.slane %v4782, 3
  %v4839 = vsel %vm592, %v4837, %v4838
  %v4840 = vrot.slane %v4783, 3
  %v4841 = vrot.slane %v4784, 3
  %v4842 = vsel %vm592, %v4840, %v4841
  %v4843 = vrot.slane %v4785, 3
  %v4844 = vrot.slane %v4786, 3
  %v4845 = vsel %vm592, %v4843, %v4844
  %v4846 = vrot.slane %v4787, 3
  %v4847 = vrot.slane %v4788, 3
  %v4848 = vsel %vm592, %v4846, %v4847
  %v4849 = vrot.slane %v4789, 3
  %v4850 = vrot.slane %v4790, 3
  %v4851 = vsel %vm592, %v4849, %v4850
  %v4852 = vrot.slane %v4791, 3
  %v4853 = vrot.slane %v4792, 3
  %v4854 = vsel %vm592, %v4852, %v4853
  %v4855 = vrot.slane %v4793, 3
  %v4856 = vrot.slane %v4794, 3
  %v4857 = vsel %vm592, %v4855, %v4856
  %v4858 = vrot.slane %v4795, 3
  %v4859 = vrot.slane %v4796, 3
  %v4860 = vsel %vm592, %v4858, %v4859
  %v4861 = vrot.slane %v4797, 3
  %v4862 = vrot.slane %v4798, 3
  %v4863 = vsel %vm592, %v4861, %v4862
  %v4864 = vrot.slane %v4799, 3
  %v4865 = vrot.slane %v4800, 3
  %v4866 = vsel %vm592, %v4864, %v4865
  %v4867 = vrot.slane %v4801, 3
  %v4868 = vrot.slane %v4802, 3
  %v4869 = vsel %vm592, %v4867, %v4868
  %v4870 = vrot.slane %v4803, 3
  %v4871 = vrot.slane %v4804, 3
  %v4872 = vsel %vm592, %v4870, %v4871
  %v4873 = vrot.slane %v4805, 3
  %v4874 = vrot.slane %v4806, 3
  %v4875 = vsel %vm592, %v4873, %v4874
  %v4876 = vrot.slane %v4807, 3
  %v4877 = vrot.slane %v4808, 3
  %v4878 = vsel %vm592, %v4876, %v4877
  %v4893 = vadd.f32 %v4766, %v4839
  %v4894 = vadd.f32 %v4767, %v4842
  %v4895 = vadd.f32 %v4768, %v4845
  %v4896 = vadd.f32 %v4769, %v4848
  %v4897 = vadd.f32 %v4770, %v4851
  %v4898 = vadd.f32 %v4771, %v4854
  %v4899 = vadd.f32 %v4772, %v4857
  %v4900 = vadd.f32 %v4773, %v4860
  %v4901 = vadd.f32 %v4774, %v4863
  %v4902 = vadd.f32 %v4775, %v4866
  %v4903 = vadd.f32 %v4776, %v4869
  %v4904 = vadd.f32 %v4777, %v4872
  %v4905 = vadd.f32 %v4778, %v4875
  %v4906 = vadd.f32 %v4779, %v4878
  %v4907 = vperm.slane %v2996, 3
  %v4908 = vmul.f32 %v4525, %v4907
  %v4909 = vmul.f32 %v4526, %v4907
  %v4910 = vmul.f32 %v4527, %v4907
  %v4911 = vmul.f32 %v4528, %v4907
  %v4912 = vmul.f32 %v4529, %v4907
  %v4913 = vmul.f32 %v4530, %v4907
  %v4914 = vmul.f32 %v4531, %v4907
  %v4915 = vmul.f32 %v4532, %v4907
  %v4916 = vmul.f32 %v4533, %v4907
  %v4917 = vmul.f32 %v4534, %v4907
  %v4918 = vmul.f32 %v4535, %v4907
  %v4919 = vmul.f32 %v4536, %v4907
  %v4920 = vmul.f32 %v4537, %v4907
  %v4921 = vmul.f32 %v4538, %v4907
  %v4922 = vmul.f32 %v4539, %v4907
  %v4923 = vmul.f32 %v4540, %v4907
  %v4924 = vmul.f32 %v4541, %v4907
  %v4925 = vmul.f32 %v4542, %v4907
  %v4926 = vmul.f32 %v4543, %v4907
  %v4927 = vmul.f32 %v4544, %v4907
  %v4928 = vmul.f32 %v4545, %v4907
  %v4929 = vmul.f32 %v4546, %v4907
  %v4930 = vmul.f32 %v4547, %v4907
  %v4931 = vmul.f32 %v4548, %v4907
  %v4932 = vmul.f32 %v4549, %v4907
  %v4933 = vmul.f32 %v4550, %v4907
  %v4934 = vmul.f32 %v4551, %v4907
  %v4935 = vmul.f32 %v4552, %v4907
  %v4964 = vrot.slane %v4908, 4
  %v4965 = vrot.slane %v4909, 4
  %v4966 = vsel %vm720, %v4964, %v4965
  %v4967 = vrot.slane %v4910, 4
  %v4968 = vrot.slane %v4911, 4
  %v4969 = vsel %vm720, %v4967, %v4968
  %v4970 = vrot.slane %v4912, 4
  %v4971 = vrot.slane %v4913, 4
  %v4972 = vsel %vm720, %v4970, %v4971
  %v4973 = vrot.slane %v4914, 4
  %v4974 = vrot.slane %v4915, 4
  %v4975 = vsel %vm720, %v4973, %v4974
  %v4976 = vrot.slane %v4916, 4
  %v4977 = vrot.slane %v4917, 4
  %v4978 = vsel %vm720, %v4976, %v4977
  %v4979 = vrot.slane %v4918, 4
  %v4980 = vrot.slane %v4919, 4
  %v4981 = vsel %vm720, %v4979, %v4980
  %v4982 = vrot.slane %v4920, 4
  %v4983 = vrot.slane %v4921, 4
  %v4984 = vsel %vm720, %v4982, %v4983
  %v4985 = vrot.slane %v4922, 4
  %v4986 = vrot.slane %v4923, 4
  %v4987 = vsel %vm720, %v4985, %v4986
  %v4988 = vrot.slane %v4924, 4
  %v4989 = vrot.slane %v4925, 4
  %v4990 = vsel %vm720, %v4988, %v4989
  %v4991 = vrot.slane %v4926, 4
  %v4992 = vrot.slane %v4927, 4
  %v4993 = vsel %vm720, %v4991, %v4992
  %v4994 = vrot.slane %v4928, 4
  %v4995 = vrot.slane %v4929, 4
  %v4996 = vsel %vm720, %v4994, %v4995
  %v4997 = vrot.slane %v4930, 4
  %v4998 = vrot.slane %v4931, 4
  %v4999 = vsel %vm720, %v4997, %v4998
  %v5000 = vrot.slane %v4932, 4
  %v5001 = vrot.slane %v4933, 4
  %v5002 = vsel %vm720, %v5000, %v5001
  %v5003 = vrot.slane %v4934, 4
  %v5004 = vrot.slane %v4935, 4
  %v5005 = vsel %vm720, %v5003, %v5004
  %v5020 = vadd.f32 %v4893, %v4966
  %v5021 = vadd.f32 %v4894, %v4969
  %v5022 = vadd.f32 %v4895, %v4972
  %v5023 = vadd.f32 %v4896, %v4975
  %v5024 = vadd.f32 %v4897, %v4978
  %v5025 = vadd.f32 %v4898, %v4981
  %v5026 = vadd.f32 %v4899, %v4984
  %v5027 = vadd.f32 %v4900, %v4987
  %v5028 = vadd.f32 %v4901, %v4990
  %v5029 = vadd.f32 %v4902, %v4993
  %v5030 = vadd.f32 %v4903, %v4996
  %v5031 = vadd.f32 %v4904, %v4999
  %v5032 = vadd.f32 %v4905, %v5002
  %v5033 = vadd.f32 %v4906, %v5005
  %v5034 = vld [vmem:[%s2320 + $0x8] sm:$0xff]
  %v5035 = vld [vmem:[%s2320 + $0x18] sm:$0x7]
  %v5036 = vld [vmem:[%s2320 + $0x28] sm:$0xff]
  %v5037 = vld [vmem:[%s2320 + $0x38] sm:$0x7]
  %v5038 = vld [vmem:[%s2320 + $0x48] sm:$0xff]
  %v5039 = vld [vmem:[%s2320 + $0x58] sm:$0x7]
  %v5040 = vld [vmem:[%s2320 + $0x68] sm:$0xff]
  %v5041 = vld [vmem:[%s2320 + $0x78] sm:$0x7]
  %v5042 = vld [vmem:[%s2320 + $0x88] sm:$0xff]
  %v5043 = vld [vmem:[%s2320 + $0x98] sm:$0x7]
  %v5044 = vld [vmem:[%s2320 + $0xa8] sm:$0xff]
  %v5045 = vld [vmem:[%s2320 + $0xb8] sm:$0x7]
  %v5046 = vld [vmem:[%s2320 + $0xc8] sm:$0xff]
  %v5047 = vld [vmem:[%s2320 + $0xd8] sm:$0x7]
  %v5048 = vld [vmem:[%s2320 + $0x168] sm:$0xff]
  %v5049 = vld [vmem:[%s2320 + $0x178] sm:$0x7]
  %v5050 = vld [vmem:[%s2320 + $0x188] sm:$0xff]
  %v5051 = vld [vmem:[%s2320 + $0x198] sm:$0x7]
  %v5052 = vld [vmem:[%s2320 + $0x1a8] sm:$0xff]
  %v5053 = vld [vmem:[%s2320 + $0x1b8] sm:$0x7]
  %v5054 = vld [vmem:[%s2320 + $0x1c8] sm:$0xff]
  %v5055 = vld [vmem:[%s2320 + $0x1d8] sm:$0x7]
  %v5056 = vld [vmem:[%s2320 + $0x1e8] sm:$0xff]
  %v5057 = vld [vmem:[%s2320 + $0x1f8] sm:$0x7]
  %v5058 = vld [vmem:[%s2320 + $0x208] sm:$0xff]
  %v5059 = vld [vmem:[%s2320 + $0x218] sm:$0x7]
  %v5060 = vld [vmem:[%s2320 + $0x228] sm:$0xff]
  %v5061 = vld [vmem:[%s2320 + $0x238] sm:$0x7]
  %v5062 = vperm.slane %v2996, 4
  %v5063 = vmul.f32 %v5034, %v5062
  %v5064 = vmul.f32 %v5036, %v5062
  %v5065 = vmul.f32 %v5038, %v5062
  %v5066 = vmul.f32 %v5040, %v5062
  %v5067 = vmul.f32 %v5042, %v5062
  %v5068 = vmul.f32 %v5044, %v5062
  %v5069 = vmul.f32 %v5046, %v5062
  %v5070 = vmul.f32 %v5048, %v5062
  %v5071 = vmul.f32 %v5050, %v5062
  %v5072 = vmul.f32 %v5052, %v5062
  %v5073 = vmul.f32 %v5054, %v5062
  %v5074 = vmul.f32 %v5056, %v5062
  %v5075 = vmul.f32 %v5058, %v5062
  %v5076 = vmul.f32 %v5060, %v5062
  %v5077 = vadd.f32 %v5020, %v5063
  %v5078 = vadd.f32 %v5021, %v5064
  %v5079 = vadd.f32 %v5022, %v5065
  %v5080 = vadd.f32 %v5023, %v5066
  %v5081 = vadd.f32 %v5024, %v5067
  %v5082 = vadd.f32 %v5025, %v5068
  %v5083 = vadd.f32 %v5026, %v5069
  %v5084 = vadd.f32 %v5027, %v5070
  %v5085 = vadd.f32 %v5028, %v5071
  %v5086 = vadd.f32 %v5029, %v5072
  %v5087 = vadd.f32 %v5030, %v5073
  %v5088 = vadd.f32 %v5031, %v5074
  %v5089 = vadd.f32 %v5032, %v5075
  %v5090 = vadd.f32 %v5033, %v5076
  %v5091 = vperm.slane %v2996, 5
  %v5092 = vmul.f32 %v5034, %v5091
  %v5093 = vmul.f32 %v5036, %v5091
  %v5094 = vmul.f32 %v5038, %v5091
  %v5095 = vmul.f32 %v5040, %v5091
  %v5096 = vmul.f32 %v5042, %v5091
  %v5097 = vmul.f32 %v5044, %v5091
  %v5098 = vmul.f32 %v5046, %v5091
  %v5099 = vmul.f32 %v5048, %v5091
  %v5100 = vmul.f32 %v5050, %v5091
  %v5101 = vmul.f32 %v5052, %v5091
  %v5102 = vmul.f32 %v5054, %v5091
  %v5103 = vmul.f32 %v5056, %v5091
  %v5104 = vmul.f32 %v5058, %v5091
  %v5105 = vmul.f32 %v5060, %v5091
  %v5120 = vrot.slane %v5092, 1
  %v5121 = vrot.slane %v5093, 1
  %v5122 = vrot.slane %v5094, 1
  %v5123 = vrot.slane %v5095, 1
  %v5124 = vrot.slane %v5096, 1
  %v5125 = vrot.slane %v5097, 1
  %v5126 = vrot.slane %v5098, 1
  %v5127 = vrot.slane %v5099, 1
  %v5128 = vrot.slane %v5100, 1
  %v5129 = vrot.slane %v5101, 1
  %v5130 = vrot.slane %v5102, 1
  %v5131 = vrot.slane %v5103, 1
  %v5132 = vrot.slane %v5104, 1
  %v5133 = vrot.slane %v5105, 1
  %v5148 = vadd.f32 %v5077, %v5120
  %v5149 = vadd.f32 %v5078, %v5121
  %v5150 = vadd.f32 %v5079, %v5122
  %v5151 = vadd.f32 %v5080, %v5123
  %v5152 = vadd.f32 %v5081, %v5124
  %v5153 = vadd.f32 %v5082, %v5125
  %v5154 = vadd.f32 %v5083, %v5126
  %v5155 = vadd.f32 %v5084, %v5127
  %v5156 = vadd.f32 %v5085, %v5128
  %v5157 = vadd.f32 %v5086, %v5129
  %v5158 = vadd.f32 %v5087, %v5130
  %v5159 = vadd.f32 %v5088, %v5131
  %v5160 = vadd.f32 %v5089, %v5132
  %v5161 = vadd.f32 %v5090, %v5133
  %v5162 = vperm.slane %v2996, 6
  %v5163 = vmul.f32 %v5034, %v5162
  %v5164 = vmul.f32 %v5035, %v5162
  %v5165 = vmul.f32 %v5036, %v5162
  %v5166 = vmul.f32 %v5037, %v5162
  %v5167 = vmul.f32 %v5038, %v5162
  %v5168 = vmul.f32 %v5039, %v5162
  %v5169 = vmul.f32 %v5040, %v5162
  %v5170 = vmul.f32 %v5041, %v5162
  %v5171 = vmul.f32 %v5042, %v5162
  %v5172 = vmul.f32 %v5043, %v5162
  %v5173 = vmul.f32 %v5044, %v5162
  %v5174 = vmul.f32 %v5045, %v5162
  %v5175 = vmul.f32 %v5046, %v5162
  %v5176 = vmul.f32 %v5047, %v5162
  %v5177 = vmul.f32 %v5048, %v5162
  %v5178 = vmul.f32 %v5049, %v5162
  %v5179 = vmul.f32 %v5050, %v5162
  %v5180 = vmul.f32 %v5051, %v5162
  %v5181 = vmul.f32 %v5052, %v5162
  %v5182 = vmul.f32 %v5053, %v5162
  %v5183 = vmul.f32 %v5054, %v5162
  %v5184 = vmul.f32 %v5055, %v5162
  %v5185 = vmul.f32 %v5056, %v5162
  %v5186 = vmul.f32 %v5057, %v5162
  %v5187 = vmul.f32 %v5058, %v5162
  %v5188 = vmul.f32 %v5059, %v5162
  %v5189 = vmul.f32 %v5060, %v5162
  %v5190 = vmul.f32 %v5061, %v5162
  %v5219 = vrot.slane %v5163, 2
  %v5220 = vrot.slane %v5164, 2
  %v5221 = vsel %vm464, %v5219, %v5220
  %v5222 = vrot.slane %v5165, 2
  %v5223 = vrot.slane %v5166, 2
  %v5224 = vsel %vm464, %v5222, %v5223
  %v5225 = vrot.slane %v5167, 2
  %v5226 = vrot.slane %v5168, 2
  %v5227 = vsel %vm464, %v5225, %v5226
  %v5228 = vrot.slane %v5169, 2
  %v5229 = vrot.slane %v5170, 2
  %v5230 = vsel %vm464, %v5228, %v5229
  %v5231 = vrot.slane %v5171, 2
  %v5232 = vrot.slane %v5172, 2
  %v5233 = vsel %vm464, %v5231, %v5232
  %v5234 = vrot.slane %v5173, 2
  %v5235 = vrot.slane %v5174, 2
  %v5236 = vsel %vm464, %v5234, %v5235
  %v5237 = vrot.slane %v5175, 2
  %v5238 = vrot.slane %v5176, 2
  %v5239 = vsel %vm464, %v5237, %v5238
  %v5240 = vrot.slane %v5177, 2
  %v5241 = vrot.slane %v5178, 2
  %v5242 = vsel %vm464, %v5240, %v5241
  %v5243 = vrot.slane %v5179, 2
  %v5244 = vrot.slane %v5180, 2
  %v5245 = vsel %vm464, %v5243, %v5244
  %v5246 = vrot.slane %v5181, 2
  %v5247 = vrot.slane %v5182, 2
  %v5248 = vsel %vm464, %v5246, %v5247
  %v5249 = vrot.slane %v5183, 2
  %v5250 = vrot.slane %v5184, 2
  %v5251 = vsel %vm464, %v5249, %v5250
  %v5252 = vrot.slane %v5185, 2
  %v5253 = vrot.slane %v5186, 2
  %v5254 = vsel %vm464, %v5252, %v5253
  %v5255 = vrot.slane %v5187, 2
  %v5256 = vrot.slane %v5188, 2
  %v5257 = vsel %vm464, %v5255, %v5256
  %v5258 = vrot.slane %v5189, 2
  %v5259 = vrot.slane %v5190, 2
  %v5260 = vsel %vm464, %v5258, %v5259
  %v5275 = vadd.f32 %v5148, %v5221
  %v5276 = vadd.f32 %v5149, %v5224
  %v5277 = vadd.f32 %v5150, %v5227
  %v5278 = vadd.f32 %v5151, %v5230
  %v5279 = vadd.f32 %v5152, %v5233
  %v5280 = vadd.f32 %v5153, %v5236
  %v5281 = vadd.f32 %v5154, %v5239
  %v5282 = vadd.f32 %v5155, %v5242
  %v5283 = vadd.f32 %v5156, %v5245
  %v5284 = vadd.f32 %v5157, %v5248
  %v5285 = vadd.f32 %v5158, %v5251
  %v5286 = vadd.f32 %v5159, %v5254
  %v5287 = vadd.f32 %v5160, %v5257
  %v5288 = vadd.f32 %v5161, %v5260
  %v5289 = vperm.slane %v2996, 7
  %v5290 = vmul.f32 %v5034, %v5289
  %v5291 = vmul.f32 %v5035, %v5289
  %v5292 = vmul.f32 %v5036, %v5289
  %v5293 = vmul.f32 %v5037, %v5289
  %v5294 = vmul.f32 %v5038, %v5289
  %v5295 = vmul.f32 %v5039, %v5289
  %v5296 = vmul.f32 %v5040, %v5289
  %v5297 = vmul.f32 %v5041, %v5289
  %v5298 = vmul.f32 %v5042, %v5289
  %v5299 = vmul.f32 %v5043, %v5289
  %v5300 = vmul.f32 %v5044, %v5289
  %v5301 = vmul.f32 %v5045, %v5289
  %v5302 = vmul.f32 %v5046, %v5289
  %v5303 = vmul.f32 %v5047, %v5289
  %v5304 = vmul.f32 %v5048, %v5289
  %v5305 = vmul.f32 %v5049, %v5289
  %v5306 = vmul.f32 %v5050, %v5289
  %v5307 = vmul.f32 %v5051, %v5289
  %v5308 = vmul.f32 %v5052, %v5289
  %v5309 = vmul.f32 %v5053, %v5289
  %v5310 = vmul.f32 %v5054, %v5289
  %v5311 = vmul.f32 %v5055, %v5289
  %v5312 = vmul.f32 %v5056, %v5289
  %v5313 = vmul.f32 %v5057, %v5289
  %v5314 = vmul.f32 %v5058, %v5289
  %v5315 = vmul.f32 %v5059, %v5289
  %v5316 = vmul.f32 %v5060, %v5289
  %v5317 = vmul.f32 %v5061, %v5289
  %v5346 = vrot.slane %v5290, 3
  %v5347 = vrot.slane %v5291, 3
  %v5348 = vsel %vm592, %v5346, %v5347
  %v5349 = vrot.slane %v5292, 3
  %v5350 = vrot.slane %v5293, 3
  %v5351 = vsel %vm592, %v5349, %v5350
  %v5352 = vrot.slane %v5294, 3
  %v5353 = vrot.slane %v5295, 3
  %v5354 = vsel %vm592, %v5352, %v5353
  %v5355 = vrot.slane %v5296, 3
  %v5356 = vrot.slane %v5297, 3
  %v5357 = vsel %vm592, %v5355, %v5356
  %v5358 = vrot.slane %v5298, 3
  %v5359 = vrot.slane %v5299, 3
  %v5360 = vsel %vm592, %v5358, %v5359
  %v5361 = vrot.slane %v5300, 3
  %v5362 = vrot.slane %v5301, 3
  %v5363 = vsel %vm592, %v5361, %v5362
  %v5364 = vrot.slane %v5302, 3
  %v5365 = vrot.slane %v5303, 3
  %v5366 = vsel %vm592, %v5364, %v5365
  %v5367 = vrot.slane %v5304, 3
  %v5368 = vrot.slane %v5305, 3
  %v5369 = vsel %vm592, %v5367, %v5368
  %v5370 = vrot.slane %v5306, 3
  %v5371 = vrot.slane %v5307, 3
  %v5372 = vsel %vm592, %v5370, %v5371
  %v5373 = vrot.slane %v5308, 3
  %v5374 = vrot.slane %v5309, 3
  %v5375 = vsel %vm592, %v5373, %v5374
  %v5376 = vrot.slane %v5310, 3
  %v5377 = vrot.slane %v5311, 3
  %v5378 = vsel %vm592, %v5376, %v5377
  %v5379 = vrot.slane %v5312, 3
  %v5380 = vrot.slane %v5313, 3
  %v5381 = vsel %vm592, %v5379, %v5380
  %v5382 = vrot.slane %v5314, 3
  %v5383 = vrot.slane %v5315, 3
  %v5384 = vsel %vm592, %v5382, %v5383
  %v5385 = vrot.slane %v5316, 3
  %v5386 = vrot.slane %v5317, 3
  %v5387 = vsel %vm592, %v5385, %v5386
  %v5402 = vadd.f32 %v5275, %v5348
  %v5403 = vadd.f32 %v5276, %v5351
  %v5404 = vadd.f32 %v5277, %v5354
  %v5405 = vadd.f32 %v5278, %v5357
  %v5406 = vadd.f32 %v5279, %v5360
  %v5407 = vadd.f32 %v5280, %v5363
  %v5408 = vadd.f32 %v5281, %v5366
  %v5409 = vadd.f32 %v5282, %v5369
  %v5410 = vadd.f32 %v5283, %v5372
  %v5411 = vadd.f32 %v5284, %v5375
  %v5412 = vadd.f32 %v5285, %v5378
  %v5413 = vadd.f32 %v5286, %v5381
  %v5414 = vadd.f32 %v5287, %v5384
  %v5415 = vadd.f32 %v5288, %v5387
  %v5416 = vperm.slane %v2997, 0
  %v5417 = vmul.f32 %v5034, %v5416
  %v5418 = vmul.f32 %v5035, %v5416
  %v5419 = vmul.f32 %v5036, %v5416
  %v5420 = vmul.f32 %v5037, %v5416
  %v5421 = vmul.f32 %v5038, %v5416
  %v5422 = vmul.f32 %v5039, %v5416
  %v5423 = vmul.f32 %v5040, %v5416
  %v5424 = vmul.f32 %v5041, %v5416
  %v5425 = vmul.f32 %v5042, %v5416
  %v5426 = vmul.f32 %v5043, %v5416
  %v5427 = vmul.f32 %v5044, %v5416
  %v5428 = vmul.f32 %v5045, %v5416
  %v5429 = vmul.f32 %v5046, %v5416
  %v5430 = vmul.f32 %v5047, %v5416
  %v5431 = vmul.f32 %v5048, %v5416
  %v5432 = vmul.f32 %v5049, %v5416
  %v5433 = vmul.f32 %v5050, %v5416
  %v5434 = vmul.f32 %v5051, %v5416
  %v5435 = vmul.f32 %v5052, %v5416
  %v5436 = vmul.f32 %v5053, %v5416
  %v5437 = vmul.f32 %v5054, %v5416
  %v5438 = vmul.f32 %v5055, %v5416
  %v5439 = vmul.f32 %v5056, %v5416
  %v5440 = vmul.f32 %v5057, %v5416
  %v5441 = vmul.f32 %v5058, %v5416
  %v5442 = vmul.f32 %v5059, %v5416
  %v5443 = vmul.f32 %v5060, %v5416
  %v5444 = vmul.f32 %v5061, %v5416
  %v5473 = vrot.slane %v5417, 4
  %v5474 = vrot.slane %v5418, 4
  %v5475 = vsel %vm720, %v5473, %v5474
  %v5476 = vrot.slane %v5419, 4
  %v5477 = vrot.slane %v5420, 4
  %v5478 = vsel %vm720, %v5476, %v5477
  %v5479 = vrot.slane %v5421, 4
  %v5480 = vrot.slane %v5422, 4
  %v5481 = vsel %vm720, %v5479, %v5480
  %v5482 = vrot.slane %v5423, 4
  %v5483 = vrot.slane %v5424, 4
  %v5484 = vsel %vm720, %v5482, %v5483
  %v5485 = vrot.slane %v5425, 4
  %v5486 = vrot.slane %v5426, 4
  %v5487 = vsel %vm720, %v5485, %v5486
  %v5488 = vrot.slane %v5427, 4
  %v5489 = vrot.slane %v5428, 4
  %v5490 = vsel %vm720, %v5488, %v5489
  %v5491 = vrot.slane %v5429, 4
  %v5492 = vrot.slane %v5430, 4
  %v5493 = vsel %vm720, %v5491, %v5492
  %v5494 = vrot.slane %v5431, 4
  %v5495 = vrot.slane %v5432, 4
  %v5496 = vsel %vm720, %v5494, %v5495
  %v5497 = vrot.slane %v5433, 4
  %v5498 = vrot.slane %v5434, 4
  %v5499 = vsel %vm720, %v5497, %v5498
  %v5500 = vrot.slane %v5435, 4
  %v5501 = vrot.slane %v5436, 4
  %v5502 = vsel %vm720, %v5500, %v5501
  %v5503 = vrot.slane %v5437, 4
  %v5504 = vrot.slane %v5438, 4
  %v5505 = vsel %vm720, %v5503, %v5504
  %v5506 = vrot.slane %v5439, 4
  %v5507 = vrot.slane %v5440, 4
  %v5508 = vsel %vm720, %v5506, %v5507
  %v5509 = vrot.slane %v5441, 4
  %v5510 = vrot.slane %v5442, 4
  %v5511 = vsel %vm720, %v5509, %v5510
  %v5512 = vrot.slane %v5443, 4
  %v5513 = vrot.slane %v5444, 4
  %v5514 = vsel %vm720, %v5512, %v5513
  %v5529 = vadd.f32 %v5402, %v5475
  %v5530 = vadd.f32 %v5403, %v5478
  %v5531 = vadd.f32 %v5404, %v5481
  %v5532 = vadd.f32 %v5405, %v5484
  %v5533 = vadd.f32 %v5406, %v5487
  %v5534 = vadd.f32 %v5407, %v5490
  %v5535 = vadd.f32 %v5408, %v5493
  %v5536 = vadd.f32 %v5409, %v5496
  %v5537 = vadd.f32 %v5410, %v5499
  %v5538 = vadd.f32 %v5411, %v5502
  %v5539 = vadd.f32 %v5412, %v5505
  %v5540 = vadd.f32 %v5413, %v5508
  %v5541 = vadd.f32 %v5414, %v5511
  %v5542 = vadd.f32 %v5415, %v5514
  %v5543 = vsel %vm2830, %v5529, 0.0
  %v5544 = vsel %vm2830, %v5530, 0.0
  %v5545 = vadd.f32 %v5543, %v5544
  %v5546 = vsel %vm2830, %v5531, 0.0
  %v5547 = vadd.f32 %v5545, %v5546
  %v5548 = vsel %vm2830, %v5532, 0.0
  %v5549 = vadd.f32 %v5547, %v5548
  %v5550 = vsel %vm2830, %v5533, 0.0
  %v5551 = vadd.f32 %v5549, %v5550
  %v5552 = vsel %vm2830, %v5534, 0.0
  %v5553 = vadd.f32 %v5551, %v5552
  %v5554 = vsel %vm2830, %v5535, 0.0
  %v5555 = vadd.f32 %v5553, %v5554
  %v5556 = vsel %vm2830, %v5536, 0.0
  %v5557 = vadd.f32 %v5555, %v5556
  %v5558 = vsel %vm2830, %v5537, 0.0
  %v5559 = vadd.f32 %v5557, %v5558
  %v5560 = vsel %vm2830, %v5538, 0.0
  %v5561 = vadd.f32 %v5559, %v5560
  %v5562 = vsel %vm2830, %v5539, 0.0
  %v5563 = vadd.f32 %v5561, %v5562
  %v5564 = vsel %vm2830, %v5540, 0.0
  %v5565 = vadd.f32 %v5563, %v5564
  %v5566 = vsel %vm2830, %v5541, 0.0
  %v5567 = vadd.f32 %v5565, %v5566
  %v5568 = vsel %vm2830, %v5542, 0.0
  %v5569 = vadd.f32 %v5567, %v5568
  %v5570 = vrot.slane %v5569, 4
  %v5571 = vadd.f32 %v5569, %v5570
  %v5572 = vrot.slane %v5571, 2
  %v5573 = vadd.f32 %v5571, %v5572
  %v5574 = vrot.slane %v5573, 1
  %v5575 = vadd.f32 %v5573, %v5574
  %v5576 = vmul.f32 %v5575, %v2870
  %v5577 = vsub.f32 %v5529, %v5576
  %v5578 = vsub.f32 %v5530, %v5576
  %v5579 = vsub.f32 %v5531, %v5576
  %v5580 = vsub.f32 %v5532, %v5576
  %v5581 = vsub.f32 %v5533, %v5576
  %v5582 = vsub.f32 %v5534, %v5576
  %v5583 = vsub.f32 %v5535, %v5576
  %v5584 = vsub.f32 %v5536, %v5576
  %v5585 = vsub.f32 %v5537, %v5576
  %v5586 = vsub.f32 %v5538, %v5576
  %v5587 = vsub.f32 %v5539, %v5576
  %v5588 = vsub.f32 %v5540, %v5576
  %v5589 = vsub.f32 %v5541, %v5576
  %v5590 = vsub.f32 %v5542, %v5576
  %v5591 = vmul.f32 %v5577, %v5577
  %v5592 = vmul.f32 %v5578, %v5578
  %v5593 = vmul.f32 %v5579, %v5579
  %v5594 = vmul.f32 %v5580, %v5580
  %v5595 = vmul.f32 %v5581, %v5581
  %v5596 = vmul.f32 %v5582, %v5582
  %v5597 = vmul.f32 %v5583, %v5583
  %v5598 = vmul.f32 %v5584, %v5584
  %v5599 = vmul.f32 %v5585, %v5585
  %v5600 = vmul.f32 %v5586, %v5586
  %v5601 = vmul.f32 %v5587, %v5587
  %v5602 = vmul.f32 %v5588, %v5588
  %v5603 = vmul.f32 %v5589, %v5589
  %v5604 = vmul.f32 %v5590, %v5590
  %v5605 = vsel %vm2830, %v5591, 0.0
  %v5606 = vsel %vm2830, %v5592, 0.0
  %v5607 = vadd.f32 %v5605, %v5606
  %v5608 = vsel %vm2830, %v5593, 0.0
  %v5609 = vadd.f32 %v5607, %v5608
  %v5610 = vsel %vm2830, %v5594, 0.0
  %v5611 = vadd.f32 %v5609, %v5610
  %v5612 = vsel %vm2830, %v5595, 0.0
  %v5613 = vadd.f32 %v5611, %v5612
  %v5614 = vsel %vm2830, %v5596, 0.0
  %v5615 = vadd.f32 %v5613, %v5614
  %v5616 = vsel %vm2830, %v5597, 0.0
  %v5617 = vadd.f32 %v5615, %v5616
  %v5618 = vsel %vm2830, %v5598, 0.0
  %v5619 = vadd.f32 %v5617, %v5618
  %v5620 = vsel %vm2830, %v5599, 0.0
  %v5621 = vadd.f32 %v5619, %v5620
  %v5622 = vsel %vm2830, %v5600, 0.0
  %v5623 = vadd.f32 %v5621, %v5622
  %v5624 = vsel %vm2830, %v5601, 0.0
  %v5625 = vadd.f32 %v5623, %v5624
  %v5626 = vsel %vm2830, %v5602, 0.0
  %v5627 = vadd.f32 %v5625, %v5626
  %v5628 = vsel %vm2830, %v5603, 0.0
  %v5629 = vadd.f32 %v5627, %v5628
  %v5630 = vsel %vm2830, %v5604, 0.0
  %v5631 = vadd.f32 %v5629, %v5630
  %v5632 = vrot.slane %v5631, 4
  %v5633 = vadd.f32 %v5631, %v5632
  %v5634 = vrot.slane %v5633, 2
  %v5635 = vadd.f32 %v5633, %v5634
  %v5636 = vrot.slane %v5635, 1
  %v5637 = vadd.f32 %v5635, %v5636
  %v5638 = vmul.f32 %v5637, %v2870
  %v5639 = vadd.f32 %v5638, 0.001
  %v5640 = vrsqrt.pop %v5639
  %v5641 = vmul.f32 %v5640, %v5639
  %v5642 = vmul.f32 %v5641, %v5640
  %v5643 = vmul.f32 0.5, %v5642
  %v5644 = vsub.f32 1.5, %v5643
  %v5645 = vmul.f32 %v5640, %v5644
  %vm5646 = vweird.f32 %v5639
  %vm5647 = vweird.f32 %v5640
  %vm5648 = vmor %vm5646, %vm5647
  %v5649 = vsel %vm5648, %v5640, %v5645
  %v5650 = vld [vmem:[%s2 + $0x1] sm:$0x1]
  %v5651 = vld [vmem:[%s3 + $0x1] sm:$0x1]
  %v5652 = vmul.f32 %v5649, %v5650
  %v5653 = vperm.slane %v5652, 0
  %v5654 = vmul.f32 %v5577, %v5653
  %v5655 = vmul.f32 %v5578, %v5653
  %v5656 = vmul.f32 %v5579, %v5653
  %v5657 = vmul.f32 %v5580, %v5653
  %v5658 = vmul.f32 %v5581, %v5653
  %v5659 = vmul.f32 %v5582, %v5653
  %v5660 = vmul.f32 %v5583, %v5653
  %v5661 = vmul.f32 %v5584, %v5653
  %v5662 = vmul.f32 %v5585, %v5653
  %v5663 = vmul.f32 %v5586, %v5653
  %v5664 = vmul.f32 %v5587, %v5653
  %v5665 = vmul.f32 %v5588, %v5653
  %v5666 = vmul.f32 %v5589, %v5653
  %v5667 = vmul.f32 %v5590, %v5653
  %v5669 = vperm.slane %v5651, 0
  %v5671 = vadd.f32 %v5654, %v5669
  %v5672 = vadd.f32 %v5655, %v5669
  %v5673 = vadd.f32 %v5656, %v5669
  %v5674 = vadd.f32 %v5657, %v5669
  %v5675 = vadd.f32 %v5658, %v5669
  %v5676 = vadd.f32 %v5659, %v5669
  %v5677 = vadd.f32 %v5660, %v5669
  %v5678 = vadd.f32 %v5661, %v5669
  %v5679 = vadd.f32 %v5662, %v5669
  %v5680 = vadd.f32 %v5663, %v5669
  %v5681 = vadd.f32 %v5664, %v5669
  %v5682 = vadd.f32 %v5665, %v5669
  %v5683 = vadd.f32 %v5666, %v5669
  %v5684 = vadd.f32 %v5667, %v5669
  %5685 = vst [vmem:[%s4 + $0x8] sm:$0x7f] %v5671
  %5686 = vst [vmem:[%s4 + $0x18] sm:$0x7f] %v5672
  %5687 = vst [vmem:[%s4 + $0x28] sm:$0x7f] %v5673
  %5688 = vst [vmem:[%s4 + $0x38] sm:$0x7f] %v5674
  %5689 = vst [vmem:[%s4 + $0x48] sm:$0x7f] %v5675
  %5690 = vst [vmem:[%s4 + $0x58] sm:$0x7f] %v5676
  %5691 = vst [vmem:[%s4 + $0x68] sm:$0x7f] %v5677
  %5692 = vst [vmem:[%s4 + $0x78] sm:$0x7f] %v5678
  %5693 = vst [vmem:[%s4 + $0x88] sm:$0x7f] %v5679
  %5694 = vst [vmem:[%s4 + $0x98] sm:$0x7f] %v5680
  %5695 = vst [vmem:[%s4 + $0xa8] sm:$0x7f] %v5681
  %5696 = vst [vmem:[%s4 + $0xb8] sm:$0x7f] %v5682
  %5697 = vst [vmem:[%s4 + $0xc8] sm:$0x7f] %v5683
  %5698 = vst [vmem:[%s4 + $0xd8] sm:$0x7f] %v5684
  // Predicated region
  $region18: #{tpu_custom_call.1} parent=0 // pred_check
    _
  $region19: #{tpu_custom_call.1} parent=0 // pred_check_branch
    %5700 = sbr.rel (0) target = $region21
  $region20: #{tpu_custom_call.1} parent=0 // pred_region
    _
  $region21: #{tpu_custom_call.1} parent=0 // pred_fallthru
    _
  // Predicated region
  $region22: #{tpu_custom_call.1} parent=0 // pred_check
    _
  $region23: #{tpu_custom_call.1} parent=0 // pred_check_branch
    %5702 = sbr.rel (0) target = $region25
  $region24: #{tpu_custom_call.1} parent=0 // pred_region
    _
  $region25: #{tpu_custom_call.1} parent=0 // pred_fallthru
    _

</llo_original>
